<compile_context>
chip_gen: v7x
topology: tpu7x:2x2x1
jax: 0.10.0
libtpu: 0.0.40
codegen_flags: <defaults>
</compile_context>

<pallas_src>
import functools

import jax
import jax.numpy as jnp
from jax.experimental import pallas as pl
from jax.experimental.pallas import tpu as pltpu

NEG_SLOPE = 0.2        # GATConv default negative_slope
MASK_VALUE = -1e30     # finite -inf stand-in (keeps online softmax NaN-free)
LANE = 128


def _round_up(x, m):
    return ((x + m - 1) // m) * m


# --------------------------------------------------------------------------
# Kernel 1: per-layer projection  XW = x @ W, a_src = XW.att_src, a_dst = ...
# --------------------------------------------------------------------------
def proj_kernel(x_ref, w_ref, att_src_ref, att_dst_ref,
                xw_ref, a_src_ref, a_dst_ref):
    xw = jnp.dot(x_ref[...], w_ref[...], preferred_element_type=jnp.float32)
    xw_ref[...] = xw.astype(xw_ref.dtype)            # bf16 out: halves HBM/VMEM
    # attention coefficients computed from the f32 matmul result (full accuracy)
    a_src_ref[...] = jnp.sum(xw * att_src_ref[...], axis=-1, keepdims=True)
    a_dst_ref[...] = jnp.sum(xw * att_dst_ref[...], axis=-1, keepdims=True)


def gat_project(x, w, att_src_row, att_dst_row, *, tm):
    n, f = x.shape
    h = w.shape[1]
    return pl.pallas_call(
        proj_kernel,
        out_shape=(
            jax.ShapeDtypeStruct((n, h), jnp.bfloat16),
            jax.ShapeDtypeStruct((n, 1), jnp.float32),
            jax.ShapeDtypeStruct((n, 1), jnp.float32),
        ),
        grid_spec=pltpu.PrefetchScalarGridSpec(
            num_scalar_prefetch=0,
            grid=(n // tm,),
            in_specs=[
                pl.BlockSpec((tm, f), lambda i: (i, 0)),   # x row tile
                pl.BlockSpec((f, h), lambda i: (0, 0)),    # W (resident)
                pl.BlockSpec((1, h), lambda i: (0, 0)),    # att_src
                pl.BlockSpec((1, h), lambda i: (0, 0)),    # att_dst
            ],
            out_specs=[
                pl.BlockSpec((tm, h), lambda i: (i, 0)),
                pl.BlockSpec((tm, 1), lambda i: (i, 0)),
                pl.BlockSpec((tm, 1), lambda i: (i, 0)),
            ],
        ),
        compiler_params=pltpu.CompilerParams(
            dimension_semantics=("parallel",),
            vmem_limit_bytes=32 * 1024 * 1024,
        ),
    )(x, w, att_src_row, att_dst_row)


# --------------------------------------------------------------------------
# Kernel 2: masked attention aggregation with online softmax (the N x N part)
# --------------------------------------------------------------------------
def gat_attn_kernel(tmask_ref, adj_ref, a_dst_ref, a_src_ref, xw_ref, bias_ref,
                    out_ref, m_scr, l_scr, acc_scr, *, tk, resident_xw):
    i = pl.program_id(0)
    k = pl.program_id(1)

    @pl.when(k == 0)
    def _():
        # NOTE: m starts at MASK_VALUE (not -inf). A row whose processed tiles
        # are fully masked accumulates p=1 garbage that is exactly zeroed
        # (corr = exp(MASK_VALUE - real_score) == 0) once a real edge appears;
        # self loops guarantee >=1 edge per real row.  Rows whose tiles are ALL
        # skipped (padded rows) end with l == 0 and are handled in finalize.
        m_scr[...] = jnp.full_like(m_scr, MASK_VALUE)
        l_scr[...] = jnp.zeros_like(l_scr)
        acc_scr[...] = jnp.zeros_like(acc_scr)

    # Block-sparse skip: all-zero adjacency tiles do no exp / MXU work.
    @pl.when(tmask_ref[i, k] > 0)
    def _():
        if resident_xw:
            off = pl.multiple_of(k * tk, tk)
            xw = xw_ref[pl.ds(off, tk), :]           # VMEM-resident neighbor slab
        else:
            xw = xw_ref[...]                         # streamed (tk, h) slab

        # scores for this (row-tile, neighbor-tile): (TM,1) + (1,TK) -> (TM,TK)
        s = a_dst_ref[...] + a_src_ref[...]
        s = jnp.where(s >= 0, s, NEG_SLOPE * s)                    # LeakyReLU(0.2)
        edge = adj_ref[...].astype(jnp.float32) > 0.0              # int8 0/1 mask
        s = jnp.where(edge, s, MASK_VALUE)

        m_prev = m_scr[...]
        m_new = jnp.maximum(m_prev, jnp.max(s, axis=-1, keepdims=True))
        corr = jnp.exp(m_prev - m_new)
        p = jnp.exp(s - m_new)
        l_scr[...] = corr * l_scr[...] + jnp.sum(p, axis=-1, keepdims=True)
        # bf16 x bf16 on the MXU, f32 accumulation
        acc_scr[...] = corr * acc_scr[...] + jnp.dot(
            p.astype(jnp.bfloat16), xw, preferred_element_type=jnp.float32)
        m_scr[...] = m_new

    @pl.when(k == pl.num_programs(1) - 1)
    def _():
        l = l_scr[...]
        inv_l = pl.reciprocal(l, approx=True)                      # EUP slot
        # l == 0 only for rows whose every tile was skipped (padded rows /
        # zero-degree rows): emit 0 instead of NaN so later layers stay finite.
        h_out = jnp.where(l > 0.0, acc_scr[...] * inv_l, 0.0) + bias_ref[...]
        out_ref[...] = jnp.maximum(h_out, 0.0).astype(out_ref.dtype)  # fused ReLU


def gat_aggregate(tmask, adj_i8, a_dst, a_src_row, xw_bf16, bias_row,
                  *, tm, tk, resident_xw, vmem_limit):
    n = adj_i8.shape[0]
    h = xw_bf16.shape[1]
    if resident_xw:
        xw_spec = pl.BlockSpec((n, h), lambda i, k, t: (0, 0))     # DMA'd once
    else:
        xw_spec = pl.BlockSpec((tk, h), lambda i, k, t: (k, 0))    # streamed

    kernel = functools.partial(gat_attn_kernel, tk=tk, resident_xw=resident_xw)
    return pl.pallas_call(
        kernel,
        out_shape=jax.ShapeDtypeStruct((n, h), jnp.float32),
        grid_spec=pltpu.PrefetchScalarGridSpec(
            num_scalar_prefetch=1,                    # tile-nonzero mask -> SMEM
            grid=(n // tm, n // tk),                  # neighbor reduction last
            in_specs=[
                pl.BlockSpec((tm, tk), lambda i, k, t: (i, k)),   # adj tile (int8)
                pl.BlockSpec((tm, 1), lambda i, k, t: (i, 0)),    # a_dst rows
                pl.BlockSpec((1, tk), lambda i, k, t: (0, k)),    # a_src cols
                xw_spec,                                          # XW (bf16)
                pl.BlockSpec((1, h), lambda i, k, t: (0, 0)),     # bias (resident)
            ],
            out_specs=pl.BlockSpec((tm, h), lambda i, k, t: (i, 0)),
            scratch_shapes=[
                pltpu.VMEM((tm, 1), jnp.float32),   # running max m
                pltpu.VMEM((tm, 1), jnp.float32),   # running denom l
                pltpu.VMEM((tm, h), jnp.float32),   # f32 accumulator
            ],
        ),
        compiler_params=pltpu.CompilerParams(
            dimension_semantics=("parallel", "arbitrary"),
            vmem_limit_bytes=vmem_limit,
        ),
    )(tmask, adj_i8, a_dst, a_src_row, xw_bf16, bias_row)


# --------------------------------------------------------------------------
# Kernel 3: classifier head  log_softmax(x2 @ W_lin + b_lin)
# --------------------------------------------------------------------------
def head_kernel(x_ref, w_ref, b_ref, out_ref):
    logits = jnp.dot(x_ref[...], w_ref[...], preferred_element_type=jnp.float32)
    logits = logits + b_ref[...]     # padded class lanes carry MASK_VALUE bias
    m = jnp.max(logits, axis=-1, keepdims=True)
    shifted = logits - m
    lse = jnp.log(jnp.sum(jnp.exp(shifted), axis=-1, keepdims=True))
    out_ref[...] = (shifted - lse).astype(out_ref.dtype)


def linear_log_softmax(x, w, b_row, *, tm):
    n, h = x.shape
    c = w.shape[1]
    return pl.pallas_call(
        head_kernel,
        out_shape=jax.ShapeDtypeStruct((n, c), jnp.float32),
        grid_spec=pltpu.PrefetchScalarGridSpec(
            num_scalar_prefetch=0,
            grid=(n // tm,),
            in_specs=[
                pl.BlockSpec((tm, h), lambda i: (i, 0)),
                pl.BlockSpec((h, c), lambda i: (0, 0)),
                pl.BlockSpec((1, c), lambda i: (0, 0)),
            ],
            out_specs=pl.BlockSpec((tm, c), lambda i: (i, 0)),
        ),
        compiler_params=pltpu.CompilerParams(
            dimension_semantics=("parallel",),
            vmem_limit_bytes=32 * 1024 * 1024,
        ),
    )(x, w, b_row)


# --------------------------------------------------------------------------
# Adjacency construction (dense 0/1 int8 mask, padded)
# --------------------------------------------------------------------------
def build_padded_adjacency(edge_index, n, n_pad):
    """int8 mask: A[i, j] = 1 iff edge j->i exists (src=row0, dst=row1) or i==j."""
    src, dst = edge_index[0], edge_index[1]
    a = jnp.zeros((n, n), jnp.float32).at[dst, src].set(1.0)
    a = jnp.maximum(a, jnp.eye(n, dtype=jnp.float32))   # self loops (PyG default)
    a8 = (a > 0).astype(jnp.int8)
    # TODO(synk): for very large graphs build the int8 mask directly (no f32
    # intermediate); duplicate edges collapse to one entry, unlike PyG's
    # per-edge softmax on multigraph inputs.
    return jnp.zeros((n_pad, n_pad), jnp.int8).at[:n, :n].set(a8)


# --------------------------------------------------------------------------
# Full forward wrapper (padding / layout glue in plain JAX)
# --------------------------------------------------------------------------
def gat2layer_forward(x, edge_index, params, *, tm=256, tk=256):
    n, f = x.shape
    h = params["w1"].shape[1]
    c = params["w_lin"].shape[1]

    assert tm % LANE == 0 and tk % LANE == 0
    n_pad = _round_up(n, max(tm, tk))
    # v7x has 2 TensorCores sharding the "parallel" row axis: keep >= 2 row tiles.
    if n_pad // tm < 2 and n_pad >= 2 * LANE:
        tm = n_pad // 2
    f_pad = _round_up(f, LANE)
    h_pad = _round_up(h, LANE)
    c_pad = _round_up(c, LANE)

    # adjacency (int8, padded) + per-tile nonzero mask for block-sparse skipping
    adj_p = build_padded_adjacency(edge_index, n, n_pad)
    nr, nc = n_pad // tm, n_pad // tk
    tmask = (adj_p.reshape(nr, tm, nc, tk) != 0).any(axis=(1, 3)).astype(jnp.int32)

    # XW is VMEM-resident in the attention kernel when it fits a budget that is
    # safe even on v7x (64 MiB VMEM/TC); otherwise stream (tk, h) slabs.
    xw_bytes = n_pad * h_pad * 2                     # bf16
    resident_xw = xw_bytes <= 16 * 1024 * 1024
    agg_vmem = 48 * 1024 * 1024 if resident_xw else 32 * 1024 * 1024

    def pad_mat(w, rows, cols):
        return jnp.zeros((rows, cols), jnp.float32).at[:w.shape[0], :w.shape[1]].set(w)

    def pad_row(v, cols, fill=0.0):
        return jnp.full((1, cols), fill, jnp.float32).at[0, :v.shape[0]].set(v)

    x_p = jnp.zeros((n_pad, f_pad), jnp.float32).at[:n, :f].set(x)

    w1_p = pad_mat(params["w1"], f_pad, h_pad)
    w2_p = pad_mat(params["w2"], h_pad, h_pad)
    wl_p = pad_mat(params["w_lin"], h_pad, c_pad)
    att1_src = pad_row(params["att1_src"], h_pad)
    att1_dst = pad_row(params["att1_dst"], h_pad)
    att2_src = pad_row(params["att2_src"], h_pad)
    att2_dst = pad_row(params["att2_dst"], h_pad)
    b1_p = pad_row(params["b1"], h_pad)
    b2_p = pad_row(params["b2"], h_pad)
    bl_p = pad_row(params["b_lin"], c_pad, fill=MASK_VALUE)  # mask padded classes

    # layer 1
    xw1, a_src1, a_dst1 = gat_project(x_p, w1_p, att1_src, att1_dst, tm=tm)
    x1 = gat_aggregate(tmask, adj_p, a_dst1, a_src1.T, xw1, b1_p,
                       tm=tm, tk=tk, resident_xw=resident_xw, vmem_limit=agg_vmem)
    # layer 2
    xw2, a_src2, a_dst2 = gat_project(x1, w2_p, att2_src, att2_dst, tm=tm)
    x2 = gat_aggregate(tmask, adj_p, a_dst2, a_src2.T, xw2, b2_p,
                       tm=tm, tk=tk, resident_xw=resident_xw, vmem_limit=agg_vmem)
    # classifier head
    out_p = linear_log_softmax(x2, wl_p, bl_p, tm=tm)
    return out_p[:n, :c]


# --------------------------------------------------------------------------
# Pure-JAX reference
# --------------------------------------------------------------------------
def _gat_layer_ref(x, adj_mask, w, att_src, att_dst, bias):
    xw = x @ w
    a_src = xw @ att_src
    a_dst = xw @ att_dst
    e = a_dst[:, None] + a_src[None, :]
    e = jnp.where(e >= 0, e, NEG_SLOPE * e)
    e = jnp.where(adj_mask > 0, e, -jnp.inf)
    attn = jax.nn.softmax(e, axis=1)
    return attn @ xw + bias


def reference_forward(x, edge_index, params):
    n = x.shape[0]
    src, dst = edge_index[0], edge_index[1]
    adj = jnp.zeros((n, n), jnp.float32).at[dst, src].set(1.0)
    adj = jnp.maximum(adj, jnp.eye(n, dtype=jnp.float32))
    x1 = jnp.maximum(_gat_layer_ref(x, adj, params["w1"], params["att1_src"],
                                    params["att1_dst"], params["b1"]), 0.0)
    x2 = jnp.maximum(_gat_layer_ref(x1, adj, params["w2"], params["att2_src"],
                                    params["att2_dst"], params["b2"]), 0.0)
    logits = x2 @ params["w_lin"] + params["b_lin"]
    return jax.nn.log_softmax(logits, axis=1)


if __name__ == "__main__":
    # N=300 pads to 512 with TM=TK=256, so the attention kernel runs a 2x2 grid:
    # multiple row tiles AND a multi-tile online-softmax reduction.  Edges are
    # restricted to nodes 0..149 (plus self loops for everyone) so two of the
    # four 256x256 adjacency tiles are empty and the block-sparse skip path is
    # exercised at runtime.
    N, NFEAT, NHID, NCLASS, E = 300, 32, 16, 8, 800

    key = jax.random.PRNGKey(0)
    ks = jax.random.split(key, 12)

    x = jax.random.normal(ks[0], (N, NFEAT), dtype=jnp.float32)
    edge_index = jnp.stack(
        [jax.random.randint(ks[1], (E,), 0, 150),
         jax.random.randint(ks[2], (E,), 0, 150)], axis=0).astype(jnp.int32)

    def glorot(k, shape):
        return jax.random.normal(k, shape, jnp.float32) / jnp.sqrt(shape[0])

    params = {
        "w1": glorot(ks[3], (NFEAT, NHID)),
        "att1_src": jax.random.normal(ks[4], (NHID,), jnp.float32) * 0.3,
        "att1_dst": jax.random.normal(ks[5], (NHID,), jnp.float32) * 0.3,
        "b1": jax.random.normal(ks[6], (NHID,), jnp.float32) * 0.1,
        "w2": glorot(ks[7], (NHID, NHID)),
        "att2_src": jax.random.normal(ks[8], (NHID,), jnp.float32) * 0.3,
        "att2_dst": jax.random.normal(ks[9], (NHID,), jnp.float32) * 0.3,
        "b2": jnp.zeros((NHID,), jnp.float32),
        "w_lin": glorot(ks[10], (NHID, NCLASS)),
        "b_lin": jax.random.normal(ks[11], (NCLASS,), jnp.float32) * 0.1,
    }

    fwd = jax.jit(functools.partial(gat2layer_forward, tm=256, tk=256))
    out = jax.block_until_ready(fwd(x, edge_index, params))

    ref = reference_forward(x, edge_index, params)
    assert out.shape == (N, NCLASS)
    assert bool(jnp.all(jnp.isfinite(out)))
    max_err = float(jnp.max(jnp.abs(out - ref)))
    # bf16 XW / bf16 p on the MXU + approx reciprocal -> ~1e-3..1e-2 error.
    assert jnp.allclose(out, ref, atol=5e-2, rtol=5e-2), f"mismatch: {max_err}"

    print("KERNEL_OK")
</pallas_src>

<mosaic_0001>
module attributes {stable_mosaic.version = 11 : i64} {
  func.func @proj_kernel(%arg0: i32, %arg1: memref<256x128xf32, #tpu.memory_space<vmem>>, %arg2: memref<128x128xf32, #tpu.memory_space<vmem>>, %arg3: memref<1x128xf32, #tpu.memory_space<vmem>>, %arg4: memref<1x128xf32, #tpu.memory_space<vmem>>, %arg5: memref<256x128xbf16, #tpu.memory_space<vmem>>, %arg6: memref<256x1xf32, #tpu.memory_space<vmem>>, %arg7: memref<256x1xf32, #tpu.memory_space<vmem>>) attributes {dimension_semantics = [#tpu.dimension_semantics<parallel>], iteration_bounds = array<i64: 2>, scalar_prefetch = 0 : i64, scratch_operands = 0 : i64, tpu.core_type = #tpu.core_type<tc>, window_params = [{transform_indices = @transform_0, window_bounds = array<i64: 256, 128>}, {pipeline_mode = #tpu.pipeline_mode<synchronous>, transform_indices = @transform_1, window_bounds = array<i64: 128, 128>}, {pipeline_mode = #tpu.pipeline_mode<synchronous>, transform_indices = @transform_2, window_bounds = array<i64: 1, 128>}, {pipeline_mode = #tpu.pipeline_mode<synchronous>, transform_indices = @transform_3, window_bounds = array<i64: 1, 128>}, {transform_indices = @transform_4, window_bounds = array<i64: 256, 128>}, {transform_indices = @transform_5, window_bounds = array<i64: 256, 1>}, {transform_indices = @transform_6, window_bounds = array<i64: 256, 1>}]} {
    %c0 = arith.constant 0 : index
    %c0_0 = arith.constant 0 : index
    %0 = vector.load %arg1[%c0, %c0_0] : memref<256x128xf32, #tpu.memory_space<vmem>>, vector<256x128xf32>
    %c0_1 = arith.constant 0 : index
    %c0_2 = arith.constant 0 : index
    %1 = vector.load %arg2[%c0_1, %c0_2] : memref<128x128xf32, #tpu.memory_space<vmem>>, vector<128x128xf32>
    %cst = arith.constant dense<0.000000e+00> : vector<256x128xf32>
    %2 = tpu.matmul %0, %1, %cst {dimension_numbers = #tpu.dot_dimension_numbers<[1], [0], [0], [1], [0, 0, 1, 1], [], []>} : vector<256x128xf32>, vector<128x128xf32>, vector<256x128xf32> -> vector<256x128xf32>
    %3 = arith.truncf %2 : vector<256x128xf32> to vector<256x128xbf16>
    %c0_3 = arith.constant 0 : index
    %c0_4 = arith.constant 0 : index
    %4 = vector.load %arg5[%c0_3, %c0_4] : memref<256x128xbf16, #tpu.memory_space<vmem>>, vector<256x128xbf16>
    tpu.vector_store %arg5[%c0_3, %c0_4], %3 {strides = array<i32>} : memref<256x128xbf16, #tpu.memory_space<vmem>>, vector<256x128xbf16>,
    %c0_5 = arith.constant 0 : index
    %c0_6 = arith.constant 0 : index
    %5 = vector.load %arg3[%c0_5, %c0_6] : memref<1x128xf32, #tpu.memory_space<vmem>>, vector<1x128xf32>
    %6 = vector.broadcast %5 : vector<1x128xf32> to vector<256x128xf32>
    %7 = arith.mulf %2, %6 : vector<256x128xf32>
    %cst_7 = arith.constant dense<0.000000e+00> : vector<256xf32>
    %8 = vector.multi_reduction <add>, %7, %cst_7 [1] : vector<256x128xf32> to vector<256xf32>
    %9 = vector.shape_cast %8 : vector<256xf32> to vector<256x1xf32>
    %c0_8 = arith.constant 0 : index
    %c0_9 = arith.constant 0 : index
    %10 = vector.load %arg6[%c0_8, %c0_9] : memref<256x1xf32, #tpu.memory_space<vmem>>, vector<256x1xf32>
    tpu.vector_store %arg6[%c0_8, %c0_9], %9 {strides = array<i32>} : memref<256x1xf32, #tpu.memory_space<vmem>>, vector<256x1xf32>,
    %c0_10 = arith.constant 0 : index
    %c0_11 = arith.constant 0 : index
    %11 = vector.load %arg4[%c0_10, %c0_11] : memref<1x128xf32, #tpu.memory_space<vmem>>, vector<1x128xf32>
    %12 = vector.broadcast %11 : vector<1x128xf32> to vector<256x128xf32>
    %13 = arith.mulf %2, %12 : vector<256x128xf32>
    %cst_12 = arith.constant dense<0.000000e+00> : vector<256xf32>
    %14 = vector.multi_reduction <add>, %13, %cst_12 [1] : vector<256x128xf32> to vector<256xf32>
    %15 = vector.shape_cast %14 : vector<256xf32> to vector<256x1xf32>
    %c0_13 = arith.constant 0 : index
    %c0_14 = arith.constant 0 : index
    %16 = vector.load %arg7[%c0_13, %c0_14] : memref<256x1xf32, #tpu.memory_space<vmem>>, vector<256x1xf32>
    tpu.vector_store %arg7[%c0_13, %c0_14], %15 {strides = array<i32>} : memref<256x1xf32, #tpu.memory_space<vmem>>, vector<256x1xf32>,
    return
  }
  func.func @transform_0(%arg0: i32) -> (i32, i32) {
    %c0_i32 = arith.constant 0 : i32
    %c0_i32_0 = arith.constant 0 : i32
    return %arg0, %c0_i32 : i32, i32
  }
  func.func @transform_1(%arg0: i32) -> (i32, i32) {
    %c0_i32 = arith.constant 0 : i32
    %c0_i32_0 = arith.constant 0 : i32
    %c0_i32_1 = arith.constant 0 : i32
    return %c0_i32, %c0_i32_0 : i32, i32
  }
  func.func @transform_2(%arg0: i32) -> (i32, i32) {
    %c0_i32 = arith.constant 0 : i32
    %c0_i32_0 = arith.constant 0 : i32
    %c0_i32_1 = arith.constant 0 : i32
    return %c0_i32, %c0_i32_0 : i32, i32
  }
  func.func @transform_3(%arg0: i32) -> (i32, i32) {
    %c0_i32 = arith.constant 0 : i32
    %c0_i32_0 = arith.constant 0 : i32
    %c0_i32_1 = arith.constant 0 : i32
    return %c0_i32, %c0_i32_0 : i32, i32
  }
  func.func @transform_4(%arg0: i32) -> (i32, i32) {
    %c0_i32 = arith.constant 0 : i32
    %c0_i32_0 = arith.constant 0 : i32
    return %arg0, %c0_i32 : i32, i32
  }
  func.func @transform_5(%arg0: i32) -> (i32, i32) {
    %c0_i32 = arith.constant 0 : i32
    %c0_i32_0 = arith.constant 0 : i32
    return %arg0, %c0_i32 : i32, i32
  }
  func.func @transform_6(%arg0: i32) -> (i32, i32) {
    %c0_i32 = arith.constant 0 : i32
    %c0_i32_0 = arith.constant 0 : i32
    return %arg0, %c0_i32 : i32, i32
  }
}

module attributes {stable_mosaic.version = 11 : i64} {
  func.func @gat_attn_kernel(%arg0: i32, %arg1: i32, %arg2: memref<2x2xi32, #tpu.memory_space<smem>>, %arg3: memref<256x256xi8, #tpu.memory_space<vmem>>, %arg4: memref<256x1xf32, #tpu.memory_space<vmem>>, %arg5: memref<1x256xf32, #tpu.memory_space<vmem>>, %arg6: memref<512x128xbf16, #tpu.memory_space<vmem>>, %arg7: memref<1x128xf32, #tpu.memory_space<vmem>>, %arg8: memref<256x128xf32, #tpu.memory_space<vmem>>, %arg9: memref<256x1xf32, #tpu.memory_space<vmem>>, %arg10: memref<256x1xf32, #tpu.memory_space<vmem>>, %arg11: memref<256x128xf32, #tpu.memory_space<vmem>>) attributes {dimension_semantics = [#tpu.dimension_semantics<parallel>, #tpu.dimension_semantics<arbitrary>], iteration_bounds = array<i64: 2, 2>, scalar_prefetch = 1 : i64, scratch_operands = 3 : i64, tpu.core_type = #tpu.core_type<tc>, window_params = [{transform_indices = @transform_0, window_bounds = array<i64: 256, 256>}, {transform_indices = @transform_1, window_bounds = array<i64: 256, 1>}, {transform_indices = @transform_2, window_bounds = array<i64: 1, 256>}, {pipeline_mode = #tpu.pipeline_mode<synchronous>, transform_indices = @transform_3, window_bounds = array<i64: 512, 128>}, {pipeline_mode = #tpu.pipeline_mode<synchronous>, transform_indices = @transform_4, window_bounds = array<i64: 1, 128>}, {transform_indices = @transform_5, window_bounds = array<i64: 256, 128>}]} {
    %c0_i32 = arith.constant 0 : i32
    %0 = arith.cmpi eq, %arg1, %c0_i32 : i32
    %1 = arith.extui %0 : i1 to i32
    %c0_i32_0 = arith.constant 0 : i32
    %2 = arith.cmpi ne, %1, %c0_i32_0 : i32
    scf.if %2 {
      %cst = arith.constant -1.000000e+30 : f32
      %12 = vector.broadcast %cst : f32 to vector<256x1xf32>
      %c0 = arith.constant 0 : index
      %c0_4 = arith.constant 0 : index
      %13 = vector.load %arg9[%c0, %c0_4] : memref<256x1xf32, #tpu.memory_space<vmem>>, vector<256x1xf32>
      tpu.vector_store %arg9[%c0, %c0_4], %12 {strides = array<i32>} : memref<256x1xf32, #tpu.memory_space<vmem>>, vector<256x1xf32>,
      %cst_5 = arith.constant 0.000000e+00 : f32
      %14 = vector.broadcast %cst_5 : f32 to vector<256x1xf32>
      %c0_6 = arith.constant 0 : index
      %c0_7 = arith.constant 0 : index
      %15 = vector.load %arg10[%c0_6, %c0_7] : memref<256x1xf32, #tpu.memory_space<vmem>>, vector<256x1xf32>
      tpu.vector_store %arg10[%c0_6, %c0_7], %14 {strides = array<i32>} : memref<256x1xf32, #tpu.memory_space<vmem>>, vector<256x1xf32>,
      %cst_8 = arith.constant 0.000000e+00 : f32
      %16 = vector.broadcast %cst_8 : f32 to vector<256x128xf32>
      %c0_9 = arith.constant 0 : index
      %c0_10 = arith.constant 0 : index
      %17 = vector.load %arg11[%c0_9, %c0_10] : memref<256x128xf32, #tpu.memory_space<vmem>>, vector<256x128xf32>
      tpu.vector_store %arg11[%c0_9, %c0_10], %16 {strides = array<i32>} : memref<256x128xf32, #tpu.memory_space<vmem>>, vector<256x128xf32>,
    } else {
    }
    %3 = arith.index_cast %arg0 : i32 to index
    %4 = arith.index_cast %arg1 : i32 to index
    %5 = memref.load %arg2[%3, %4] : memref<2x2xi32, #tpu.memory_space<smem>>
    %c0_i32_1 = arith.constant 0 : i32
    %6 = arith.cmpi sgt, %5, %c0_i32_1 : i32
    %7 = arith.extui %6 : i1 to i32
    %c0_i32_2 = arith.constant 0 : i32
    %8 = arith.cmpi ne, %7, %c0_i32_2 : i32
    scf.if %8 {
      %c256_i32 = arith.constant 256 : i32
      %12 = arith.muli %arg1, %c256_i32 : i32
      %13 = tpu.assume_multiple %12, 256 : i32
      %14 = arith.index_cast %13 : i32 to index
      %c0 = arith.constant 0 : index
      %15 = vector.load %arg6[%14, %c0] : memref<512x128xbf16, #tpu.memory_space<vmem>>, vector<256x128xbf16>
      %c0_4 = arith.constant 0 : index
      %c0_5 = arith.constant 0 : index
      %16 = vector.load %arg4[%c0_4, %c0_5] : memref<256x1xf32, #tpu.memory_space<vmem>>, vector<256x1xf32>
      %c0_6 = arith.constant 0 : index
      %c0_7 = arith.constant 0 : index
      %17 = vector.load %arg5[%c0_6, %c0_7] : memref<1x256xf32, #tpu.memory_space<vmem>>, vector<1x256xf32>
      %18 = vector.broadcast %16 : vector<256x1xf32> to vector<256x256xf32>
      %19 = vector.broadcast %17 : vector<1x256xf32> to vector<256x256xf32>
      %20 = arith.addf %18, %19 : vector<256x256xf32>
      %cst = arith.constant 0.000000e+00 : f32
      %21 = vector.broadcast %cst : f32 to vector<256x256xf32>
      %22 = arith.cmpf oge, %20, %21 : vector<256x256xf32>
      %cst_8 = arith.constant 2.000000e-01 : f32
      %23 = vector.broadcast %cst_8 : f32 to vector<256x256xf32>
      %24 = arith.mulf %23, %20 : vector<256x256xf32>
      %25 = arith.select %22, %20, %24 : vector<256x256xi1>, vector<256x256xf32>
      %c0_9 = arith.constant 0 : index
      %c0_10 = arith.constant 0 : index
      %26 = vector.load %arg3[%c0_9, %c0_10] : memref<256x256xi8, #tpu.memory_space<vmem>>, vector<256x256xi8>
      %27 = arith.sitofp %26 : vector<256x256xi8> to vector<256x256xf32>
      %cst_11 = arith.constant 0.000000e+00 : f32
      %28 = vector.broadcast %cst_11 : f32 to vector<256x256xf32>
      %29 = arith.cmpf ogt, %27, %28 : vector<256x256xf32>
      %cst_12 = arith.constant -1.000000e+30 : f32
      %30 = vector.broadcast %cst_12 : f32 to vector<256x256xf32>
      %31 = arith.select %29, %25, %30 : vector<256x256xi1>, vector<256x256xf32>
      %c0_13 = arith.constant 0 : index
      %c0_14 = arith.constant 0 : index
      %32 = vector.load %arg9[%c0_13, %c0_14] : memref<256x1xf32, #tpu.memory_space<vmem>>, vector<256x1xf32>
      %cst_15 = arith.constant dense<0xFF800000> : vector<256xf32>
      %33 = vector.multi_reduction <maximumf>, %31, %cst_15 [1] : vector<256x256xf32> to vector<256xf32>
      %34 = vector.shape_cast %33 : vector<256xf32> to vector<256x1xf32>
      %35 = arith.maximumf %32, %34 : vector<256x1xf32>
      %36 = arith.subf %32, %35 : vector<256x1xf32>
      %37 = math.exp %36 : vector<256x1xf32>
      %38 = vector.broadcast %35 : vector<256x1xf32> to vector<256x256xf32>
      %39 = arith.subf %31, %38 : vector<256x256xf32>
      %40 = math.exp %39 : vector<256x256xf32>
      %c0_16 = arith.constant 0 : index
      %c0_17 = arith.constant 0 : index
      %41 = vector.load %arg10[%c0_16, %c0_17] : memref<256x1xf32, #tpu.memory_space<vmem>>, vector<256x1xf32>
      %42 = arith.mulf %37, %41 : vector<256x1xf32>
      %cst_18 = arith.constant dense<0.000000e+00> : vector<256xf32>
      %43 = vector.multi_reduction <add>, %40, %cst_18 [1] : vector<256x256xf32> to vector<256xf32>
      %44 = vector.shape_cast %43 : vector<256xf32> to vector<256x1xf32>
      %45 = arith.addf %42, %44 : vector<256x1xf32>
      %c0_19 = arith.constant 0 : index
      %c0_20 = arith.constant 0 : index
      %46 = vector.load %arg10[%c0_19, %c0_20] : memref<256x1xf32, #tpu.memory_space<vmem>>, vector<256x1xf32>
      tpu.vector_store %arg10[%c0_19, %c0_20], %45 {strides = array<i32>} : memref<256x1xf32, #tpu.memory_space<vmem>>, vector<256x1xf32>,
      %c0_21 = arith.constant 0 : index
      %c0_22 = arith.constant 0 : index
      %47 = vector.load %arg11[%c0_21, %c0_22] : memref<256x128xf32, #tpu.memory_space<vmem>>, vector<256x128xf32>
      %48 = vector.broadcast %37 : vector<256x1xf32> to vector<256x128xf32>
      %49 = arith.mulf %48, %47 : vector<256x128xf32>
      %50 = arith.truncf %40 : vector<256x256xf32> to vector<256x256xbf16>
      %cst_23 = arith.constant dense<0.000000e+00> : vector<256x128xf32>
      %51 = tpu.matmul %50, %15, %cst_23 {dimension_numbers = #tpu.dot_dimension_numbers<[1], [0], [0], [1], [0, 0, 1, 1], [], []>} : vector<256x256xbf16>, vector<256x128xbf16>, vector<256x128xf32> -> vector<256x128xf32>
      %52 = arith.addf %49, %51 : vector<256x128xf32>
      %c0_24 = arith.constant 0 : index
      %c0_25 = arith.constant 0 : index
      %53 = vector.load %arg11[%c0_24, %c0_25] : memref<256x128xf32, #tpu.memory_space<vmem>>, vector<256x128xf32>
      tpu.vector_store %arg11[%c0_24, %c0_25], %52 {strides = array<i32>} : memref<256x128xf32, #tpu.memory_space<vmem>>, vector<256x128xf32>,
      %c0_26 = arith.constant 0 : index
      %c0_27 = arith.constant 0 : index
      %54 = vector.load %arg9[%c0_26, %c0_27] : memref<256x1xf32, #tpu.memory_space<vmem>>, vector<256x1xf32>
      tpu.vector_store %arg9[%c0_26, %c0_27], %35 {strides = array<i32>} : memref<256x1xf32, #tpu.memory_space<vmem>>, vector<256x1xf32>,
    } else {
    }
    %c1_i32 = arith.constant 1 : i32
    %9 = arith.cmpi eq, %arg1, %c1_i32 : i32
    %10 = arith.extui %9 : i1 to i32
    %c0_i32_3 = arith.constant 0 : i32
    %11 = arith.cmpi ne, %10, %c0_i32_3 : i32
    scf.if %11 {
      %c0 = arith.constant 0 : index
      %c0_4 = arith.constant 0 : index
      %12 = vector.load %arg10[%c0, %c0_4] : memref<256x1xf32, #tpu.memory_space<vmem>>, vector<256x1xf32>
      %13 = tpu.reciprocal %12 {approx = true} : vector<256x1xf32> -> vector<256x1xf32>
      %cst = arith.constant 0.000000e+00 : f32
      %14 = vector.broadcast %cst : f32 to vector<256x1xf32>
      %15 = arith.cmpf ogt, %12, %14 : vector<256x1xf32>
      %c0_5 = arith.constant 0 : index
      %c0_6 = arith.constant 0 : index
      %16 = vector.load %arg11[%c0_5, %c0_6] : memref<256x128xf32, #tpu.memory_space<vmem>>, vector<256x128xf32>
      %17 = vector.broadcast %13 : vector<256x1xf32> to vector<256x128xf32>
      %18 = arith.mulf %16, %17 : vector<256x128xf32>
      %cst_7 = arith.constant 0.000000e+00 : f32
      %19 = vector.shape_cast %15 : vector<256x1xi1> to vector<256x1xi1>
      %20 = vector.broadcast %19 : vector<256x1xi1> to vector<256x128xi1>
      %21 = vector.broadcast %cst_7 : f32 to vector<256x128xf32>
      %22 = arith.select %20, %18, %21 : vector<256x128xi1>, vector<256x128xf32>
      %c0_8 = arith.constant 0 : index
      %c0_9 = arith.constant 0 : index
      %23 = vector.load %arg7[%c0_8, %c0_9] : memref<1x128xf32, #tpu.memory_space<vmem>>, vector<1x128xf32>
      %24 = vector.broadcast %23 : vector<1x128xf32> to vector<256x128xf32>
      %25 = arith.addf %22, %24 : vector<256x128xf32>
      %cst_10 = arith.constant 0.000000e+00 : f32
      %26 = vector.broadcast %cst_10 : f32 to vector<256x128xf32>
      %27 = arith.maximumf %25, %26 : vector<256x128xf32>
      %c0_11 = arith.constant 0 : index
      %c0_12 = arith.constant 0 : index
      %28 = vector.load %arg8[%c0_11, %c0_12] : memref<256x128xf32, #tpu.memory_space<vmem>>, vector<256x128xf32>
      tpu.vector_store %arg8[%c0_11, %c0_12], %27 {strides = array<i32>} : memref<256x128xf32, #tpu.memory_space<vmem>>, vector<256x128xf32>,
    } else {
    }
    return
  }
  func.func @transform_0(%arg0: i32, %arg1: i32, %arg2: memref<2x2xi32, #tpu.memory_space<smem>>) -> (i32, i32) {
    %c0_i32 = arith.constant 0 : i32
    return %arg0, %arg1 : i32, i32
  }
  func.func @transform_1(%arg0: i32, %arg1: i32, %arg2: memref<2x2xi32, #tpu.memory_space<smem>>) -> (i32, i32) {
    %c0_i32 = arith.constant 0 : i32
    %c0_i32_0 = arith.constant 0 : i32
    return %arg0, %c0_i32 : i32, i32
  }
  func.func @transform_2(%arg0: i32, %arg1: i32, %arg2: memref<2x2xi32, #tpu.memory_space<smem>>) -> (i32, i32) {
    %c0_i32 = arith.constant 0 : i32
    %c0_i32_0 = arith.constant 0 : i32
    return %c0_i32, %arg1 : i32, i32
  }
  func.func @transform_3(%arg0: i32, %arg1: i32, %arg2: memref<2x2xi32, #tpu.memory_space<smem>>) -> (i32, i32) {
    %c0_i32 = arith.constant 0 : i32
    %c0_i32_0 = arith.constant 0 : i32
    %c0_i32_1 = arith.constant 0 : i32
    return %c0_i32, %c0_i32_0 : i32, i32
  }
  func.func @transform_4(%arg0: i32, %arg1: i32, %arg2: memref<2x2xi32, #tpu.memory_space<smem>>) -> (i32, i32) {
    %c0_i32 = arith.constant 0 : i32
    %c0_i32_0 = arith.constant 0 : i32
    %c0_i32_1 = arith.constant 0 : i32
    return %c0_i32, %c0_i32_0 : i32, i32
  }
  func.func @transform_5(%arg0: i32, %arg1: i32, %arg2: memref<2x2xi32, #tpu.memory_space<smem>>) -> (i32, i32) {
    %c0_i32 = arith.constant 0 : i32
    %c0_i32_0 = arith.constant 0 : i32
    return %arg0, %c0_i32 : i32, i32
  }
}

module attributes {stable_mosaic.version = 11 : i64} {
  func.func @head_kernel(%arg0: i32, %arg1: memref<256x128xf32, #tpu.memory_space<vmem>>, %arg2: memref<128x128xf32, #tpu.memory_space<vmem>>, %arg3: memref<1x128xf32, #tpu.memory_space<vmem>>, %arg4: memref<256x128xf32, #tpu.memory_space<vmem>>) attributes {dimension_semantics = [#tpu.dimension_semantics<parallel>], iteration_bounds = array<i64: 2>, scalar_prefetch = 0 : i64, scratch_operands = 0 : i64, tpu.core_type = #tpu.core_type<tc>, window_params = [{transform_indices = @transform_0, window_bounds = array<i64: 256, 128>}, {pipeline_mode = #tpu.pipeline_mode<synchronous>, transform_indices = @transform_1, window_bounds = array<i64: 128, 128>}, {pipeline_mode = #tpu.pipeline_mode<synchronous>, transform_indices = @transform_2, window_bounds = array<i64: 1, 128>}, {transform_indices = @transform_3, window_bounds = array<i64: 256, 128>}]} {
    %c0 = arith.constant 0 : index
    %c0_0 = arith.constant 0 : index
    %0 = vector.load %arg1[%c0, %c0_0] : memref<256x128xf32, #tpu.memory_space<vmem>>, vector<256x128xf32>
    %c0_1 = arith.constant 0 : index
    %c0_2 = arith.constant 0 : index
    %1 = vector.load %arg2[%c0_1, %c0_2] : memref<128x128xf32, #tpu.memory_space<vmem>>, vector<128x128xf32>
    %cst = arith.constant dense<0.000000e+00> : vector<256x128xf32>
    %2 = tpu.matmul %0, %1, %cst {dimension_numbers = #tpu.dot_dimension_numbers<[1], [0], [0], [1], [0, 0, 1, 1], [], []>} : vector<256x128xf32>, vector<128x128xf32>, vector<256x128xf32> -> vector<256x128xf32>
    %c0_3 = arith.constant 0 : index
    %c0_4 = arith.constant 0 : index
    %3 = vector.load %arg3[%c0_3, %c0_4] : memref<1x128xf32, #tpu.memory_space<vmem>>, vector<1x128xf32>
    %4 = vector.broadcast %3 : vector<1x128xf32> to vector<256x128xf32>
    %5 = arith.addf %2, %4 : vector<256x128xf32>
    %cst_5 = arith.constant dense<0xFF800000> : vector<256xf32>
    %6 = vector.multi_reduction <maximumf>, %5, %cst_5 [1] : vector<256x128xf32> to vector<256xf32>
    %7 = vector.shape_cast %6 : vector<256xf32> to vector<256x1xf32>
    %8 = vector.broadcast %7 : vector<256x1xf32> to vector<256x128xf32>
    %9 = arith.subf %5, %8 : vector<256x128xf32>
    %10 = math.exp %9 : vector<256x128xf32>
    %cst_6 = arith.constant dense<0.000000e+00> : vector<256xf32>
    %11 = vector.multi_reduction <add>, %10, %cst_6 [1] : vector<256x128xf32> to vector<256xf32>
    %12 = vector.shape_cast %11 : vector<256xf32> to vector<256x1xf32>
    %13 = math.log %12 : vector<256x1xf32>
    %14 = vector.broadcast %13 : vector<256x1xf32> to vector<256x128xf32>
    %15 = arith.subf %9, %14 : vector<256x128xf32>
    %c0_7 = arith.constant 0 : index
    %c0_8 = arith.constant 0 : index
    %16 = vector.load %arg4[%c0_7, %c0_8] : memref<256x128xf32, #tpu.memory_space<vmem>>, vector<256x128xf32>
    tpu.vector_store %arg4[%c0_7, %c0_8], %15 {strides = array<i32>} : memref<256x128xf32, #tpu.memory_space<vmem>>, vector<256x128xf32>,
    return
  }
  func.func @transform_0(%arg0: i32) -> (i32, i32) {
    %c0_i32 = arith.constant 0 : i32
    %c0_i32_0 = arith.constant 0 : i32
    return %arg0, %c0_i32 : i32, i32
  }
  func.func @transform_1(%arg0: i32) -> (i32, i32) {
    %c0_i32 = arith.constant 0 : i32
    %c0_i32_0 = arith.constant 0 : i32
    %c0_i32_1 = arith.constant 0 : i32
    return %c0_i32, %c0_i32_0 : i32, i32
  }
  func.func @transform_2(%arg0: i32) -> (i32, i32) {
    %c0_i32 = arith.constant 0 : i32
    %c0_i32_0 = arith.constant 0 : i32
    %c0_i32_1 = arith.constant 0 : i32
    return %c0_i32, %c0_i32_0 : i32, i32
  }
  func.func @transform_3(%arg0: i32) -> (i32, i32) {
    %c0_i32 = arith.constant 0 : i32
    %c0_i32_0 = arith.constant 0 : i32
    return %arg0, %c0_i32 : i32, i32
  }
}

</mosaic_0001>

<llo_original>
// kernel: gat2layer_forward.5
$region0: #{gat2layer_forward.5}
  #allocation0 [shape = 'u32[]', space=smem, size = 0x4, offset = 0x4, fixed_abs, tag = 'smem constant byte address 0x4 - core index']
  #allocation1 [shape = 'u32[144,128]{1,0:T(1,128)}', space=vmem, size = 0x12000, scoped, tag = 'internal scratch']
  %s0 = inlined_call_operand.vmem [shape: f32[512,128], index: 0, kind: input, shape index: {}]
  %s1 = inlined_call_operand.vmem [shape: f32[128,128], index: 1, kind: input, shape index: {}]
  %s2 = inlined_call_operand.vmem [shape: f32[1,128], index: 2, kind: input, shape index: {}]
  %s3 = inlined_call_operand.vmem [shape: f32[1,128], index: 3, kind: input, shape index: {}]
  %s4 = inlined_call_operand.vmem [shape: bf16[512,128], index: 4, kind: output, shape index: {0}]
  %s5 = inlined_call_operand.vmem [shape: f32[512,1], index: 5, kind: output, shape index: {1}]
  %s6 = inlined_call_operand.vmem [shape: f32[512,1], index: 6, kind: output, shape index: {2}]
  %7 = xla_tuple %s4, %s5, %s6
  %s8 = sld [smem:[#allocation0]]
  $region65: #{gat2layer_forward.5} parent=0
    _
  %s10 = ssub.s32 1, %s8
  %s11 = scalar_select 0, %s10, %s8
  loop: start=0, step=1, limit=4
  $region2: #{gat2layer_forward.5} parent=0 // loop_pre_header
    _
  $region3: #{gat2layer_forward.5} parent=0 // loop_header
    %s13 = sphi 0, %s17
    %p14 = scmp.ge.s32.totalorder %s13, 4
    %s23 = sphi 0, %s25
    %s26 = sphi 0, %s23
    %s27 = sphi 0, %s26
    %s43 = sphi 0, %s27
    %s47 = sphi 0, %s47
    %s49 = sphi 0, %s47
    %s50 = sphi 0, %s49
    %s64 = sphi 0, %s50
    %s68 = sphi 0, %s68
    %s70 = sphi 0, %s68
    %s71 = sphi 0, %s70
    %s85 = sphi 0, %s71
    %s89 = sphi 0, %s89
    %s91 = sphi 0, %s89
    %s92 = sphi 0, %s91
    %s106 = sphi 0, %s92
    %s112 = sphi 0, %s114
    %s115 = sphi 0, %s112
    %s116 = sphi 0, %s115
    %s132 = sphi 0, %s116
    %s138 = sphi 0, %s140
    %s141 = sphi 0, %s138
    %s142 = sphi 0, %s141
    %s158 = sphi 0, %s142
    %s164 = sphi 0, %s166
    %s167 = sphi 0, %s164
    %s168 = sphi 0, %s167
    %s184 = sphi 0, %s168
  $region4: #{gat2layer_forward.5} parent=0 // loop_header_branch
    %16 = sbr.rel (%p14) target = $region8
  $region5: #{gat2layer_forward.5} parent=0 // loop_body
    %s18 = ssub.s32 %s13, 1
    %s19 = ssub.s32 %s13, 2
    %s20 = sadd.s32 %s13, 1
    %s21 = ssub.s32 %s13, %s20
    %p22 = scmp.eq.s32.totalorder %s21, 0
    %s24 = sadd.s32 %s23, 1
    %s25 = scalar_select %p22, %s23, %s24
    %p28 = pneg %p22
    %p29 = scmp.eq.s32.totalorder %s13, 1
    %p30 = por %p28, %p29
    %p31 = scmp.ne.s32.totalorder %s23, %s26
    %p32 = scmp.eq.s32.totalorder %s13, 0
    %p33 = por %p31, %p32
    %p34 = scmp.ne.s32.totalorder %s23, %s26
    %p35 = scmp.eq.s32.totalorder %s18, 1
    %p36 = por %p34, %p35
    %p37 = scmp.ne.s32.totalorder %s26, %s27
    %p38 = scmp.eq.s32.totalorder %s18, 0
    %p39 = por %p37, %p38
    %p40 = scmp.ne.s32.totalorder %s26, %s27
    %p41 = scmp.eq.s32.totalorder %s19, 1
    %p42 = por %p40, %p41
    %p44 = scmp.ne.s32.totalorder %s27, %s43
    %p45 = scmp.eq.s32.totalorder %s19, 0
    %p46 = por %p44, %p45
    %s48 = sadd.s32 %s47, 1
    %p51 = scmp.eq.s32.totalorder %s13, 1
    %p52 = scmp.ne.s32.totalorder %s47, %s49
    %p53 = scmp.eq.s32.totalorder %s13, 0
    %p54 = por %p52, %p53
    %p55 = scmp.ne.s32.totalorder %s47, %s49
    %p56 = scmp.eq.s32.totalorder %s18, 1
    %p57 = por %p55, %p56
    %p58 = scmp.ne.s32.totalorder %s49, %s50
    %p59 = scmp.eq.s32.totalorder %s18, 0
    %p60 = por %p58, %p59
    %p61 = scmp.ne.s32.totalorder %s49, %s50
    %p62 = scmp.eq.s32.totalorder %s19, 1
    %p63 = por %p61, %p62
    %p65 = scmp.ne.s32.totalorder %s50, %s64
    %p66 = scmp.eq.s32.totalorder %s19, 0
    %p67 = por %p65, %p66
    %s69 = sadd.s32 %s68, 1
    %p72 = scmp.eq.s32.totalorder %s13, 1
    %p73 = scmp.ne.s32.totalorder %s68, %s70
    %p74 = scmp.eq.s32.totalorder %s13, 0
    %p75 = por %p73, %p74
    %p76 = scmp.ne.s32.totalorder %s68, %s70
    %p77 = scmp.eq.s32.totalorder %s18, 1
    %p78 = por %p76, %p77
    %p79 = scmp.ne.s32.totalorder %s70, %s71
    %p80 = scmp.eq.s32.totalorder %s18, 0
    %p81 = por %p79, %p80
    %p82 = scmp.ne.s32.totalorder %s70, %s71
    %p83 = scmp.eq.s32.totalorder %s19, 1
    %p84 = por %p82, %p83
    %p86 = scmp.ne.s32.totalorder %s71, %s85
    %p87 = scmp.eq.s32.totalorder %s19, 0
    %p88 = por %p86, %p87
    %s90 = sadd.s32 %s89, 1
    %p93 = scmp.eq.s32.totalorder %s13, 1
    %p94 = scmp.ne.s32.totalorder %s89, %s91
    %p95 = scmp.eq.s32.totalorder %s13, 0
    %p96 = por %p94, %p95
    %p97 = scmp.ne.s32.totalorder %s89, %s91
    %p98 = scmp.eq.s32.totalorder %s18, 1
    %p99 = por %p97, %p98
    %p100 = scmp.ne.s32.totalorder %s91, %s92
    %p101 = scmp.eq.s32.totalorder %s18, 0
    %p102 = por %p100, %p101
    %p103 = scmp.ne.s32.totalorder %s91, %s92
    %p104 = scmp.eq.s32.totalorder %s19, 1
    %p105 = por %p103, %p104
    %p107 = scmp.ne.s32.totalorder %s92, %s106
    %p108 = scmp.eq.s32.totalorder %s19, 0
    %p109 = por %p107, %p108
    %s110 = ssub.s32 %s13, %s20
    %p111 = scmp.eq.s32.totalorder %s110, 0
    %s113 = sadd.s32 %s112, 1
    %s114 = scalar_select %p111, %s112, %s113
    %p117 = pneg %p111
    %p118 = scmp.eq.s32.totalorder %s13, 1
    %p119 = por %p117, %p118
    %p120 = scmp.ne.s32.totalorder %s112, %s115
    %p121 = scmp.eq.s32.totalorder %s13, 0
    %p122 = por %p120, %p121
    %p123 = scmp.ne.s32.totalorder %s112, %s115
    %p124 = scmp.eq.s32.totalorder %s18, 1
    %p125 = por %p123, %p124
    %p126 = scmp.ne.s32.totalorder %s115, %s116
    %p127 = scmp.eq.s32.totalorder %s18, 0
    %p128 = por %p126, %p127
    %p129 = scmp.ne.s32.totalorder %s115, %s116
    %p130 = scmp.eq.s32.totalorder %s19, 1
    %p131 = por %p129, %p130
    %p133 = scmp.ne.s32.totalorder %s116, %s132
    %p134 = scmp.eq.s32.totalorder %s19, 0
    %p135 = por %p133, %p134
    %s136 = ssub.s32 %s13, %s20
    %p137 = scmp.eq.s32.totalorder %s136, 0
    %s139 = sadd.s32 %s138, 1
    %s140 = scalar_select %p137, %s138, %s139
    %p143 = pneg %p137
    %p144 = scmp.eq.s32.totalorder %s13, 1
    %p145 = por %p143, %p144
    %p146 = scmp.ne.s32.totalorder %s138, %s141
    %p147 = scmp.eq.s32.totalorder %s13, 0
    %p148 = por %p146, %p147
    %p149 = scmp.ne.s32.totalorder %s138, %s141
    %p150 = scmp.eq.s32.totalorder %s18, 1
    %p151 = por %p149, %p150
    %p152 = scmp.ne.s32.totalorder %s141, %s142
    %p153 = scmp.eq.s32.totalorder %s18, 0
    %p154 = por %p152, %p153
    %p155 = scmp.ne.s32.totalorder %s141, %s142
    %p156 = scmp.eq.s32.totalorder %s19, 1
    %p157 = por %p155, %p156
    %p159 = scmp.ne.s32.totalorder %s142, %s158
    %p160 = scmp.eq.s32.totalorder %s19, 0
    %p161 = por %p159, %p160
    %s162 = ssub.s32 %s13, %s20
    %p163 = scmp.eq.s32.totalorder %s162, 0
    %s165 = sadd.s32 %s164, 1
    %s166 = scalar_select %p163, %s164, %s165
    %p169 = pneg %p163
    %p170 = scmp.eq.s32.totalorder %s13, 1
    %p171 = por %p169, %p170
    %p172 = scmp.ne.s32.totalorder %s164, %s167
    %p173 = scmp.eq.s32.totalorder %s13, 0
    %p174 = por %p172, %p173
    %p175 = scmp.ne.s32.totalorder %s164, %s167
    %p176 = scmp.eq.s32.totalorder %s18, 1
    %p177 = por %p175, %p176
    %p178 = scmp.ne.s32.totalorder %s167, %s168
    %p179 = scmp.eq.s32.totalorder %s18, 0
    %p180 = por %p178, %p179
    %p181 = scmp.ne.s32.totalorder %s167, %s168
    %p182 = scmp.eq.s32.totalorder %s19, 1
    %p183 = por %p181, %p182
    %p185 = scmp.ne.s32.totalorder %s168, %s184
    %p186 = scmp.eq.s32.totalorder %s19, 0
    %p187 = por %p185, %p186
    %p188 = scmp.le.s32.totalorder 1, %s13
    %p189 = scmp.lt.s32.totalorder %s13, 3
    %p190 = pnand %p188, %p189
    %p191 = pneg %p190
    // Predicated region
    $region9: #{gat2layer_forward.5} parent=5 // pred_check
      _
    $region10: #{gat2layer_forward.5} parent=5 // pred_check_branch
      %193 = sbr.rel (%p190) target = $region12
    $region11: #{gat2layer_forward.5} parent=5 // pred_region
      %s194 = ssub.s32 %s13, 1
      // Predicated region
      $region13: #{gat2layer_forward.5} parent=11 // pred_check
        %p195 = pneg %p60
      $region14: #{gat2layer_forward.5} parent=11 // pred_check_branch
        %197 = sbr.rel (%p195) target = $region16
      $region15: #{gat2layer_forward.5} parent=11 // pred_region
        _
      $region16: #{gat2layer_forward.5} parent=11 // pred_fallthru
        _
      // Predicated region
      $region17: #{gat2layer_forward.5} parent=11 // pred_check
        %p198 = pneg %p81
      $region18: #{gat2layer_forward.5} parent=11 // pred_check_branch
        %200 = sbr.rel (%p198) target = $region20
      $region19: #{gat2layer_forward.5} parent=11 // pred_region
        _
      $region20: #{gat2layer_forward.5} parent=11 // pred_fallthru
        _
      // Predicated region
      $region21: #{gat2layer_forward.5} parent=11 // pred_check
        %p201 = pneg %p102
      $region22: #{gat2layer_forward.5} parent=11 // pred_check_branch
        %203 = sbr.rel (%p201) target = $region24
      $region23: #{gat2layer_forward.5} parent=11 // pred_region
        _
      $region24: #{gat2layer_forward.5} parent=11 // pred_fallthru
        _
    $region12: #{gat2layer_forward.5} parent=5 // pred_fallthru
      _
    %p204 = scmp.lt.s32.totalorder %s13, 2
    // Predicated region
    $region25: #{gat2layer_forward.5} parent=5 // pred_check
      %p205 = pneg %p204
    $region26: #{gat2layer_forward.5} parent=5 // pred_check_branch
      %207 = sbr.rel (%p205) target = $region28
    $region27: #{gat2layer_forward.5} parent=5 // pred_region
      // Predicated region
      $region29: #{gat2layer_forward.5} parent=27 // pred_check
        %p208 = pneg %p33
      $region30: #{gat2layer_forward.5} parent=27 // pred_check_branch
        %210 = sbr.rel (%p208) target = $region32
      $region31: #{gat2layer_forward.5} parent=27 // pred_region
        %s211 = smul.u32 32, %s13
        %p212 = scmp.lt.s32.totalorder %s211, 63
        %s213 = scalar_select %p212, %s211, 63
        %s214 = smul.addr %s213, 8
        %s215 = scalar_lea.vmem %s0, %s214
        %s216 = smul.u32 32, %s13
      $region32: #{gat2layer_forward.5} parent=27 // pred_fallthru
        _
    $region28: #{gat2layer_forward.5} parent=5 // pred_fallthru
      _
    %p217 = scmp.le.s32.totalorder 1, %s13
    %p218 = scmp.lt.s32.totalorder %s13, 3
    %p219 = pnand %p217, %p218
    %p220 = pneg %p219
    // Predicated region
    $region33: #{gat2layer_forward.5} parent=5 // pred_check
      _
    $region34: #{gat2layer_forward.5} parent=5 // pred_check_branch
      %222 = sbr.rel (%p219) target = $region36
    $region35: #{gat2layer_forward.5} parent=5 // pred_region
      %s223 = ssub.s32 %s13, 1
      %s224 = smul.u32 32, %s18
      %p225 = scmp.lt.s32.totalorder %s224, 63
      %s226 = scalar_select %p225, %s224, 63
      %s227 = smul.addr %s226, 8
      %s228 = scalar_lea.vmem %s0, %s227
      %p229 = pneg %p39
      %p230 = pneg %p36
      %p231 = pneg %p60
      %p232 = pneg %p57
      %p233 = pneg %p81
      %p234 = pneg %p78
      %p235 = pneg %p102
      %p236 = pneg %p99
      %p237 = pneg %p128
      %p238 = pneg %p125
      %s239 = smul.u32 32, %s18
      %p240 = scmp.lt.s32.totalorder %s239, 63
      %s241 = scalar_select %p240, %s239, 63
      %s242 = smul.addr %s241, 4
      %s243 = scalar_lea.vmem %s4, %s242
      %p244 = pneg %p154
      %p245 = pneg %p151
      %s246 = smul.u32 32, %s18
      %p247 = scmp.lt.s32.totalorder %s246, 63
      %s248 = scalar_select %p247, %s246, 63
      %s249 = smul.addr %s248, 8
      %s250 = scalar_lea.vmem %s5, %s249
      %p251 = pneg %p180
      %p252 = pneg %p177
      %s253 = smul.u32 32, %s18
      %p254 = scmp.lt.s32.totalorder %s253, 63
      %s255 = scalar_select %p254, %s253, 63
      %s256 = smul.addr %s255, 8
      %s257 = scalar_lea.vmem %s6, %s256
      %s258 = smul.u32 32, %s18
      %p259 = scmp.lt.s32.totalorder %s258, 63
      %s260 = scalar_select %p259, %s258, 63
      %s261 = smul.addr %s260, 8
      %s262 = scalar_lea.vmem %s0, %s261
      %s263 = smul.u32 32, %s18
      %s264 = smul.u32 32, %s18
      %p265 = scmp.lt.s32.totalorder %s264, 63
      %s266 = scalar_select %p265, %s264, 63
      %s267 = smul.addr %s266, 4
      %s268 = scalar_lea.vmem %s4, %s267
      %s269 = smul.u32 32, %s18
      %s270 = smul.u32 32, %s18
      %p271 = scmp.lt.s32.totalorder %s270, 63
      %s272 = scalar_select %p271, %s270, 63
      %s273 = smul.addr %s272, 8
      %s274 = scalar_lea.vmem %s5, %s273
      %s275 = smul.u32 32, %s18
      %s276 = smul.u32 32, %s18
      %p277 = scmp.lt.s32.totalorder %s276, 63
      %s278 = scalar_select %p277, %s276, 63
      %s279 = smul.addr %s278, 8
      %s280 = scalar_lea.vmem %s6, %s279
      %s281 = smul.u32 32, %s18
      %v282 = vld [vmem:[%s262] sm:$0xff]
      %v283 = vld [vmem:[%s262 + $0x8] sm:$0xff]
      %v284 = vld [vmem:[%s262 + $0x10] sm:$0xff]
      %v285 = vld [vmem:[%s262 + $0x18] sm:$0xff]
      %v286 = vld [vmem:[%s262 + $0x20] sm:$0xff]
      %v287 = vld [vmem:[%s262 + $0x28] sm:$0xff]
      %v288 = vld [vmem:[%s262 + $0x30] sm:$0xff]
      %v289 = vld [vmem:[%s262 + $0x38] sm:$0xff]
      %v290 = vld [vmem:[%s262 + $0x40] sm:$0xff]
      %v291 = vld [vmem:[%s262 + $0x48] sm:$0xff]
      %v292 = vld [vmem:[%s262 + $0x50] sm:$0xff]
      %v293 = vld [vmem:[%s262 + $0x58] sm:$0xff]
      %v294 = vld [vmem:[%s262 + $0x60] sm:$0xff]
      %v295 = vld [vmem:[%s262 + $0x68] sm:$0xff]
      %v296 = vld [vmem:[%s262 + $0x70] sm:$0xff]
      %v297 = vld [vmem:[%s262 + $0x78] sm:$0xff]
      %v298 = vld [vmem:[%s262 + $0x80] sm:$0xff]
      %v299 = vld [vmem:[%s262 + $0x88] sm:$0xff]
      %v300 = vld [vmem:[%s262 + $0x90] sm:$0xff]
      %v301 = vld [vmem:[%s262 + $0x98] sm:$0xff]
      %v302 = vld [vmem:[%s262 + $0xa0] sm:$0xff]
      %v303 = vld [vmem:[%s262 + $0xa8] sm:$0xff]
      %v304 = vld [vmem:[%s262 + $0xb0] sm:$0xff]
      %v305 = vld [vmem:[%s262 + $0xb8] sm:$0xff]
      %v306 = vld [vmem:[%s262 + $0xc0] sm:$0xff]
      %v307 = vld [vmem:[%s262 + $0xc8] sm:$0xff]
      %v308 = vld [vmem:[%s262 + $0xd0] sm:$0xff]
      %v309 = vld [vmem:[%s262 + $0xd8] sm:$0xff]
      %v310 = vld [vmem:[%s262 + $0xe0] sm:$0xff]
      %v311 = vld [vmem:[%s262 + $0xe8] sm:$0xff]
      %v312 = vld [vmem:[%s262 + $0xf0] sm:$0xff]
      %v313 = vld [vmem:[%s262 + $0xf8] sm:$0xff]
      %v314 = vld [vmem:[%s1] sm:$0xff]
      %v315 = vld [vmem:[%s1 + $0x8] sm:$0xff]
      %v316 = vld [vmem:[%s1 + $0x10] sm:$0xff]
      %v317 = vld [vmem:[%s1 + $0x18] sm:$0xff]
      %v318 = vld [vmem:[%s1 + $0x20] sm:$0xff]
      %v319 = vld [vmem:[%s1 + $0x28] sm:$0xff]
      %v320 = vld [vmem:[%s1 + $0x30] sm:$0xff]
      %v321 = vld [vmem:[%s1 + $0x38] sm:$0xff]
      %v322 = vld [vmem:[%s1 + $0x40] sm:$0xff]
      %v323 = vld [vmem:[%s1 + $0x48] sm:$0xff]
      %v324 = vld [vmem:[%s1 + $0x50] sm:$0xff]
      %v325 = vld [vmem:[%s1 + $0x58] sm:$0xff]
      %v326 = vld [vmem:[%s1 + $0x60] sm:$0xff]
      %v327 = vld [vmem:[%s1 + $0x68] sm:$0xff]
      %v328 = vld [vmem:[%s1 + $0x70] sm:$0xff]
      %v329 = vld [vmem:[%s1 + $0x78] sm:$0xff]
      %330 = vmatprep.subr.mxu0 0.0
      %331 = vmatpush1.msra.mxu0 %v314
      %332 = vmatprep.subr.mxu0 0.0
      %333 = vmatpush1.msra.mxu0 %v315
      %334 = vmatprep.subr.mxu0 0.0
      %335 = vmatpush1.msra.mxu0 %v316
      %336 = vmatprep.subr.mxu0 0.0
      %337 = vmatpush1.msra.mxu0 %v317
      %338 = vmatprep.subr.mxu0 0.0
      %339 = vmatpush1.msra.mxu0 %v318
      %340 = vmatprep.subr.mxu0 0.0
      %341 = vmatpush1.msra.mxu0 %v319
      %342 = vmatprep.subr.mxu0 0.0
      %343 = vmatpush1.msra.mxu0 %v320
      %344 = vmatprep.subr.mxu0 0.0
      %345 = vmatpush1.msra.mxu0 %v321
      %346 = vmatprep.subr.mxu0 0.0
      %347 = vmatpush1.msra.mxu0 %v322
      %348 = vmatprep.subr.mxu0 0.0
      %349 = vmatpush1.msra.mxu0 %v323
      %350 = vmatprep.subr.mxu0 0.0
      %351 = vmatpush1.msra.mxu0 %v324
      %352 = vmatprep.subr.mxu0 0.0
      %353 = vmatpush1.msra.mxu0 %v325
      %354 = vmatprep.subr.mxu0 0.0
      %355 = vmatpush1.msra.mxu0 %v326
      %356 = vmatprep.subr.mxu0 0.0
      %357 = vmatpush1.msra.mxu0 %v327
      %358 = vmatprep.subr.mxu0 0.0
      %359 = vmatpush1.msra.mxu0 %v328
      %360 = vmatprep.subr.mxu0 0.0
      %361 = vmatpush1.msra.mxu0 %v329
      %362 = vmatprep.subr.mxu0 0.0
      %363 = vmatpush1.msra.mxu0 0.0
      %364 = vmatprep.subr.mxu0 0.0
      %365 = vmatpush1.msra.mxu0 0.0
      %366 = vmatprep.subr.mxu0 0.0
      %367 = vmatpush1.msra.mxu0 0.0
      %368 = vmatprep.subr.mxu0 0.0
      %369 = vmatpush1.msra.mxu0 0.0
      %370 = vmatprep.subr.mxu0 0.0
      %371 = vmatpush1.msra.mxu0 0.0
      %372 = vmatprep.subr.mxu0 0.0
      %373 = vmatpush1.msra.mxu0 0.0
      %374 = vmatprep.subr.mxu0 0.0
      %375 = vmatpush1.msra.mxu0 0.0
      %376 = vmatprep.subr.mxu0 0.0
      %377 = vmatpush1.msra.mxu0 0.0
      %378 = vmatprep.subr.mxu0 0.0
      %379 = vmatpush1.msra.mxu0 0.0
      %380 = vmatprep.subr.mxu0 0.0
      %381 = vmatpush1.msra.mxu0 0.0
      %382 = vmatprep.subr.mxu0 0.0
      %383 = vmatpush1.msra.mxu0 0.0
      %384 = vmatprep.subr.mxu0 0.0
      %385 = vmatpush1.msra.mxu0 0.0
      %386 = vmatprep.subr.mxu0 0.0
      %387 = vmatpush1.msra.mxu0 0.0
      %388 = vmatprep.subr.mxu0 0.0
      %389 = vmatpush1.msra.mxu0 0.0
      %390 = vmatprep.subr.mxu0 0.0
      %391 = vmatpush1.msra.mxu0 0.0
      %392 = vmatprep.subr.mxu0 0.0
      %393 = vmatpush1.msra.mxu0 0.0
      %394 = vmatprep.mubr.f32.mxu0 0.0
      %395 = vmatmul.mubr.f32.gmra.mrb[0].mxu0 %v282
      %v396 = vpop.f32.mrb[0].mxu0
      %v397 = vadd.f32 0.0, %v396
      %v398 = vpop.f32.mrb[0].mxu0
      %399 = vmatprep.mubr.f32.mxu0 0.0
      %400 = vmatmul.mubr.f32.gmra.mrb[0].mxu0 %v283
      %v401 = vpop.f32.mrb[0].mxu0
      %v402 = vadd.f32 0.0, %v401
      %v403 = vpop.f32.mrb[0].mxu0
      %404 = vmatprep.mubr.f32.mxu0 0.0
      %405 = vmatmul.mubr.f32.gmra.mrb[0].mxu0 %v284
      %v406 = vpop.f32.mrb[0].mxu0
      %v407 = vadd.f32 0.0, %v406
      %v408 = vpop.f32.mrb[0].mxu0
      %409 = vmatprep.mubr.f32.mxu0 0.0
      %410 = vmatmul.mubr.f32.gmra.mrb[0].mxu0 %v285
      %v411 = vpop.f32.mrb[0].mxu0
      %v412 = vadd.f32 0.0, %v411
      %v413 = vpop.f32.mrb[0].mxu0
      %414 = vmatprep.mubr.f32.mxu0 0.0
      %415 = vmatmul.mubr.f32.gmra.mrb[0].mxu0 %v286
      %v416 = vpop.f32.mrb[0].mxu0
      %v417 = vadd.f32 0.0, %v416
      %v418 = vpop.f32.mrb[0].mxu0
      %419 = vmatprep.mubr.f32.mxu0 0.0
      %420 = vmatmul.mubr.f32.gmra.mrb[0].mxu0 %v287
      %v421 = vpop.f32.mrb[0].mxu0
      %v422 = vadd.f32 0.0, %v421
      %v423 = vpop.f32.mrb[0].mxu0
      %424 = vmatprep.mubr.f32.mxu0 0.0
      %425 = vmatmul.mubr.f32.gmra.mrb[0].mxu0 %v288
      %v426 = vpop.f32.mrb[0].mxu0
      %v427 = vadd.f32 0.0, %v426
      %v428 = vpop.f32.mrb[0].mxu0
      %429 = vmatprep.mubr.f32.mxu0 0.0
      %430 = vmatmul.mubr.f32.gmra.mrb[0].mxu0 %v289
      %v431 = vpop.f32.mrb[0].mxu0
      %v432 = vadd.f32 0.0, %v431
      %v433 = vpop.f32.mrb[0].mxu0
      %434 = vmatprep.mubr.f32.mxu0 0.0
      %435 = vmatmul.mubr.f32.gmra.mrb[0].mxu0 %v290
      %v436 = vpop.f32.mrb[0].mxu0
      %v437 = vadd.f32 0.0, %v436
      %v438 = vpop.f32.mrb[0].mxu0
      %439 = vmatprep.mubr.f32.mxu0 0.0
      %440 = vmatmul.mubr.f32.gmra.mrb[0].mxu0 %v291
      %v441 = vpop.f32.mrb[0].mxu0
      %v442 = vadd.f32 0.0, %v441
      %v443 = vpop.f32.mrb[0].mxu0
      %444 = vmatprep.mubr.f32.mxu0 0.0
      %445 = vmatmul.mubr.f32.gmra.mrb[0].mxu0 %v292
      %v446 = vpop.f32.mrb[0].mxu0
      %v447 = vadd.f32 0.0, %v446
      %v448 = vpop.f32.mrb[0].mxu0
      %449 = vmatprep.mubr.f32.mxu0 0.0
      %450 = vmatmul.mubr.f32.gmra.mrb[0].mxu0 %v293
      %v451 = vpop.f32.mrb[0].mxu0
      %v452 = vadd.f32 0.0, %v451
      %v453 = vpop.f32.mrb[0].mxu0
      %454 = vmatprep.mubr.f32.mxu0 0.0
      %455 = vmatmul.mubr.f32.gmra.mrb[0].mxu0 %v294
      %v456 = vpop.f32.mrb[0].mxu0
      %v457 = vadd.f32 0.0, %v456
      %v458 = vpop.f32.mrb[0].mxu0
      %459 = vmatprep.mubr.f32.mxu0 0.0
      %460 = vmatmul.mubr.f32.gmra.mrb[0].mxu0 %v295
      %v461 = vpop.f32.mrb[0].mxu0
      %v462 = vadd.f32 0.0, %v461
      %v463 = vpop.f32.mrb[0].mxu0
      %464 = vmatprep.mubr.f32.mxu0 0.0
      %465 = vmatmul.mubr.f32.gmra.mrb[0].mxu0 %v296
      %v466 = vpop.f32.mrb[0].mxu0
      %v467 = vadd.f32 0.0, %v466
      %v468 = vpop.f32.mrb[0].mxu0
      %469 = vmatprep.mubr.f32.mxu0 0.0
      %470 = vmatmul.mubr.f32.gmra.mrb[0].mxu0 %v297
      %v471 = vpop.f32.mrb[0].mxu0
      %v472 = vadd.f32 0.0, %v471
      %v473 = vpop.f32.mrb[0].mxu0
      %474 = vmatprep.mubr.f32.mxu0 0.0
      %475 = vmatmul.mubr.f32.gmra.mrb[0].mxu0 %v298
      %v476 = vpop.f32.mrb[0].mxu0
      %v477 = vadd.f32 0.0, %v476
      %v478 = vpop.f32.mrb[0].mxu0
      %479 = vmatprep.mubr.f32.mxu0 0.0
      %480 = vmatmul.mubr.f32.gmra.mrb[0].mxu0 %v299
      %v481 = vpop.f32.mrb[0].mxu0
      %v482 = vadd.f32 0.0, %v481
      %v483 = vpop.f32.mrb[0].mxu0
      %484 = vmatprep.mubr.f32.mxu0 0.0
      %485 = vmatmul.mubr.f32.gmra.mrb[0].mxu0 %v300
      %v486 = vpop.f32.mrb[0].mxu0
      %v487 = vadd.f32 0.0, %v486
      %v488 = vpop.f32.mrb[0].mxu0
      %489 = vmatprep.mubr.f32.mxu0 0.0
      %490 = vmatmul.mubr.f32.gmra.mrb[0].mxu0 %v301
      %v491 = vpop.f32.mrb[0].mxu0
      %v492 = vadd.f32 0.0, %v491
      %v493 = vpop.f32.mrb[0].mxu0
      %494 = vmatprep.mubr.f32.mxu0 0.0
      %495 = vmatmul.mubr.f32.gmra.mrb[0].mxu0 %v302
      %v496 = vpop.f32.mrb[0].mxu0
      %v497 = vadd.f32 0.0, %v496
      %v498 = vpop.f32.mrb[0].mxu0
      %499 = vmatprep.mubr.f32.mxu0 0.0
      %500 = vmatmul.mubr.f32.gmra.mrb[0].mxu0 %v303
      %v501 = vpop.f32.mrb[0].mxu0
      %v502 = vadd.f32 0.0, %v501
      %v503 = vpop.f32.mrb[0].mxu0
      %504 = vmatprep.mubr.f32.mxu0 0.0
      %505 = vmatmul.mubr.f32.gmra.mrb[0].mxu0 %v304
      %v506 = vpop.f32.mrb[0].mxu0
      %v507 = vadd.f32 0.0, %v506
      %v508 = vpop.f32.mrb[0].mxu0
      %509 = vmatprep.mubr.f32.mxu0 0.0
      %510 = vmatmul.mubr.f32.gmra.mrb[0].mxu0 %v305
      %v511 = vpop.f32.mrb[0].mxu0
      %v512 = vadd.f32 0.0, %v511
      %v513 = vpop.f32.mrb[0].mxu0
      %514 = vmatprep.mubr.f32.mxu0 0.0
      %515 = vmatmul.mubr.f32.gmra.mrb[0].mxu0 %v306
      %v516 = vpop.f32.mrb[0].mxu0
      %v517 = vadd.f32 0.0, %v516
      %v518 = vpop.f32.mrb[0].mxu0
      %519 = vmatprep.mubr.f32.mxu0 0.0
      %520 = vmatmul.mubr.f32.gmra.mrb[0].mxu0 %v307
      %v521 = vpop.f32.mrb[0].mxu0
      %v522 = vadd.f32 0.0, %v521
      %v523 = vpop.f32.mrb[0].mxu0
      %524 = vmatprep.mubr.f32.mxu0 0.0
      %525 = vmatmul.mubr.f32.gmra.mrb[0].mxu0 %v308
      %v526 = vpop.f32.mrb[0].mxu0
      %v527 = vadd.f32 0.0, %v526
      %v528 = vpop.f32.mrb[0].mxu0
      %529 = vmatprep.mubr.f32.mxu0 0.0
      %530 = vmatmul.mubr.f32.gmra.mrb[0].mxu0 %v309
      %v531 = vpop.f32.mrb[0].mxu0
      %v532 = vadd.f32 0.0, %v531
      %v533 = vpop.f32.mrb[0].mxu0
      %534 = vmatprep.mubr.f32.mxu0 0.0
      %535 = vmatmul.mubr.f32.gmra.mrb[0].mxu0 %v310
      %v536 = vpop.f32.mrb[0].mxu0
      %v537 = vadd.f32 0.0, %v536
      %v538 = vpop.f32.mrb[0].mxu0
      %539 = vmatprep.mubr.f32.mxu0 0.0
      %540 = vmatmul.mubr.f32.gmra.mrb[0].mxu0 %v311
      %v541 = vpop.f32.mrb[0].mxu0
      %v542 = vadd.f32 0.0, %v541
      %v543 = vpop.f32.mrb[0].mxu0
      %544 = vmatprep.mubr.f32.mxu0 0.0
      %545 = vmatmul.mubr.f32.gmra.mrb[0].mxu0 %v312
      %v546 = vpop.f32.mrb[0].mxu0
      %v547 = vadd.f32 0.0, %v546
      %v548 = vpop.f32.mrb[0].mxu0
      %549 = vmatprep.mubr.f32.mxu0 0.0
      %550 = vmatmul.mubr.f32.gmra.mrb[0].mxu0 %v313
      %v551 = vpop.f32.mrb[0].mxu0
      %v552 = vadd.f32 0.0, %v551
      %v553 = vpop.f32.mrb[0].mxu0
      %554 = vdwg.mxu0
      %v555 = vpack.c.bf16 %v402, %v397
      %v556 = vpack.c.bf16 %v412, %v407
      %v557 = vpack.c.bf16 %v422, %v417
      %v558 = vpack.c.bf16 %v432, %v427
      %v559 = vpack.c.bf16 %v442, %v437
      %v560 = vpack.c.bf16 %v452, %v447
      %v561 = vpack.c.bf16 %v462, %v457
      %v562 = vpack.c.bf16 %v472, %v467
      %v563 = vpack.c.bf16 %v482, %v477
      %v564 = vpack.c.bf16 %v492, %v487
      %v565 = vpack.c.bf16 %v502, %v497
      %v566 = vpack.c.bf16 %v512, %v507
      %v567 = vpack.c.bf16 %v522, %v517
      %v568 = vpack.c.bf16 %v532, %v527
      %v569 = vpack.c.bf16 %v542, %v537
      %v570 = vpack.c.bf16 %v552, %v547
      %v587 = vunpack.c.l.b16 %v555
      %v588 = vunpack.c.h.b16 %v555
      %v589 = vunpack.c.l.b16 %v556
      %v590 = vunpack.c.h.b16 %v556
      %v591 = vunpack.c.l.b16 %v557
      %v592 = vunpack.c.h.b16 %v557
      %v593 = vunpack.c.l.b16 %v558
      %v594 = vunpack.c.h.b16 %v558
      %v595 = vunpack.c.l.b16 %v559
      %v596 = vunpack.c.h.b16 %v559
      %v597 = vunpack.c.l.b16 %v560
      %v598 = vunpack.c.h.b16 %v560
      %v599 = vunpack.c.l.b16 %v561
      %v600 = vunpack.c.h.b16 %v561
      %v601 = vunpack.c.l.b16 %v562
      %v602 = vunpack.c.h.b16 %v562
      %v603 = vunpack.c.l.b16 %v563
      %v604 = vunpack.c.h.b16 %v563
      %v605 = vunpack.c.l.b16 %v564
      %v606 = vunpack.c.h.b16 %v564
      %v607 = vunpack.c.l.b16 %v565
      %v608 = vunpack.c.h.b16 %v565
      %v609 = vunpack.c.l.b16 %v566
      %v610 = vunpack.c.h.b16 %v566
      %v611 = vunpack.c.l.b16 %v567
      %v612 = vunpack.c.h.b16 %v567
      %v613 = vunpack.c.l.b16 %v568
      %v614 = vunpack.c.h.b16 %v568
      %v615 = vunpack.c.l.b16 %v569
      %v616 = vunpack.c.h.b16 %v569
      %v617 = vunpack.c.l.b16 %v570
      %v618 = vunpack.c.h.b16 %v570
      %v619 = vpack.c.b16 %v587, %v587
      %v620 = vpack.c.b16 %v588, %v588
      %v621 = vpack.c.b16 %v589, %v589
      %v622 = vpack.c.b16 %v590, %v590
      %v623 = vpack.c.b16 %v591, %v591
      %v624 = vpack.c.b16 %v592, %v592
      %v625 = vpack.c.b16 %v593, %v593
      %v626 = vpack.c.b16 %v594, %v594
      %v627 = vpack.c.b16 %v595, %v595
      %v628 = vpack.c.b16 %v596, %v596
      %v629 = vpack.c.b16 %v597, %v597
      %v630 = vpack.c.b16 %v598, %v598
      %v631 = vpack.c.b16 %v599, %v599
      %v632 = vpack.c.b16 %v600, %v600
      %v633 = vpack.c.b16 %v601, %v601
      %v634 = vpack.c.b16 %v602, %v602
      %v635 = vpack.c.b16 %v603, %v603
      %v636 = vpack.c.b16 %v604, %v604
      %v637 = vpack.c.b16 %v605, %v605
      %v638 = vpack.c.b16 %v606, %v606
      %v639 = vpack.c.b16 %v607, %v607
      %v640 = vpack.c.b16 %v608, %v608
      %v641 = vpack.c.b16 %v609, %v609
      %v642 = vpack.c.b16 %v610, %v610
      %v643 = vpack.c.b16 %v611, %v611
      %v644 = vpack.c.b16 %v612, %v612
      %v645 = vpack.c.b16 %v613, %v613
      %v646 = vpack.c.b16 %v614, %v614
      %v647 = vpack.c.b16 %v615, %v615
      %v648 = vpack.c.b16 %v616, %v616
      %v649 = vpack.c.b16 %v617, %v617
      %v650 = vpack.c.b16 %v618, %v618
      %683 = vst [vmem:[%s268] sm:$0xf] %v619
      %684 = vst [vmem:[%s268 + $0x4] sm:$0xf] %v620
      %685 = vst [vmem:[%s268 + $0x8] sm:$0xf] %v621
      %686 = vst [vmem:[%s268 + $0xc] sm:$0xf] %v622
      %687 = vst [vmem:[%s268 + $0x10] sm:$0xf] %v623
      %688 = vst [vmem:[%s268 + $0x14] sm:$0xf] %v624
      %689 = vst [vmem:[%s268 + $0x18] sm:$0xf] %v625
      %690 = vst [vmem:[%s268 + $0x1c] sm:$0xf] %v626
      %691 = vst [vmem:[%s268 + $0x20] sm:$0xf] %v627
      %692 = vst [vmem:[%s268 + $0x24] sm:$0xf] %v628
      %693 = vst [vmem:[%s268 + $0x28] sm:$0xf] %v629
      %694 = vst [vmem:[%s268 + $0x2c] sm:$0xf] %v630
      %695 = vst [vmem:[%s268 + $0x30] sm:$0xf] %v631
      %696 = vst [vmem:[%s268 + $0x34] sm:$0xf] %v632
      %697 = vst [vmem:[%s268 + $0x38] sm:$0xf] %v633
      %698 = vst [vmem:[%s268 + $0x3c] sm:$0xf] %v634
      %699 = vst [vmem:[%s268 + $0x40] sm:$0xf] %v635
      %700 = vst [vmem:[%s268 + $0x44] sm:$0xf] %v636
      %701 = vst [vmem:[%s268 + $0x48] sm:$0xf] %v637
      %702 = vst [vmem:[%s268 + $0x4c] sm:$0xf] %v638
      %703 = vst [vmem:[%s268 + $0x50] sm:$0xf] %v639
      %704 = vst [vmem:[%s268 + $0x54] sm:$0xf] %v640
      %705 = vst [vmem:[%s268 + $0x58] sm:$0xf] %v641
      %706 = vst [vmem:[%s268 + $0x5c] sm:$0xf] %v642
      %707 = vst [vmem:[%s268 + $0x60] sm:$0xf] %v643
      %708 = vst [vmem:[%s268 + $0x64] sm:$0xf] %v644
      %709 = vst [vmem:[%s268 + $0x68] sm:$0xf] %v645
      %710 = vst [vmem:[%s268 + $0x6c] sm:$0xf] %v646
      %711 = vst [vmem:[%s268 + $0x70] sm:$0xf] %v647
      %712 = vst [vmem:[%s268 + $0x74] sm:$0xf] %v648
      %713 = vst [vmem:[%s268 + $0x78] sm:$0xf] %v649
      %714 = vst [vmem:[%s268 + $0x7c] sm:$0xf] %v650
      %v715 = vld [vmem:[%s2] sm:$0x1]
      %v717 = vlaneseq
      %v718 = vshrl.u32 %v717, 7
      %v719 = vsub.s32 0, %v718
      %v720 = vrot.slane %v715, %v719
      %v722 = vmul.f32 %v397, %v720
      %v723 = vmul.f32 %v402, %v720
      %v724 = vmul.f32 %v407, %v720
      %v725 = vmul.f32 %v412, %v720
      %v726 = vmul.f32 %v417, %v720
      %v727 = vmul.f32 %v422, %v720
      %v728 = vmul.f32 %v427, %v720
      %v729 = vmul.f32 %v432, %v720
      %v730 = vmul.f32 %v437, %v720
      %v731 = vmul.f32 %v442, %v720
      %v732 = vmul.f32 %v447, %v720
      %v733 = vmul.f32 %v452, %v720
      %v734 = vmul.f32 %v457, %v720
      %v735 = vmul.f32 %v462, %v720
      %v736 = vmul.f32 %v467, %v720
      %v737 = vmul.f32 %v472, %v720
      %v738 = vmul.f32 %v477, %v720
      %v739 = vmul.f32 %v482, %v720
      %v740 = vmul.f32 %v487, %v720
      %v741 = vmul.f32 %v492, %v720
      %v742 = vmul.f32 %v497, %v720
      %v743 = vmul.f32 %v502, %v720
      %v744 = vmul.f32 %v507, %v720
      %v745 = vmul.f32 %v512, %v720
      %v746 = vmul.f32 %v517, %v720
      %v747 = vmul.f32 %v522, %v720
      %v748 = vmul.f32 %v527, %v720
      %v749 = vmul.f32 %v532, %v720
      %v750 = vmul.f32 %v537, %v720
      %v751 = vmul.f32 %v542, %v720
      %v752 = vmul.f32 %v547, %v720
      %v753 = vmul.f32 %v552, %v720
      %754 = vadd.xlane.f32.xlu0 %v722
      %v755 = vpop.xlane.xlu0 %754
      %756 = vadd.xlane.f32.xlu0 %v723
      %v757 = vpop.xlane.xlu0 %756
      %758 = vadd.xlane.f32.xlu0 %v724
      %v759 = vpop.xlane.xlu0 %758
      %760 = vadd.xlane.f32.xlu0 %v725
      %v761 = vpop.xlane.xlu0 %760
      %762 = vadd.xlane.f32.xlu0 %v726
      %v763 = vpop.xlane.xlu0 %762
      %764 = vadd.xlane.f32.xlu0 %v727
      %v765 = vpop.xlane.xlu0 %764
      %766 = vadd.xlane.f32.xlu0 %v728
      %v767 = vpop.xlane.xlu0 %766
      %768 = vadd.xlane.f32.xlu0 %v729
      %v769 = vpop.xlane.xlu0 %768
      %770 = vadd.xlane.f32.xlu0 %v730
      %v771 = vpop.xlane.xlu0 %770
      %772 = vadd.xlane.f32.xlu0 %v731
      %v773 = vpop.xlane.xlu0 %772
      %774 = vadd.xlane.f32.xlu0 %v732
      %v775 = vpop.xlane.xlu0 %774
      %776 = vadd.xlane.f32.xlu0 %v733
      %v777 = vpop.xlane.xlu0 %776
      %778 = vadd.xlane.f32.xlu0 %v734
      %v779 = vpop.xlane.xlu0 %778
      %780 = vadd.xlane.f32.xlu0 %v735
      %v781 = vpop.xlane.xlu0 %780
      %782 = vadd.xlane.f32.xlu0 %v736
      %v783 = vpop.xlane.xlu0 %782
      %784 = vadd.xlane.f32.xlu0 %v737
      %v785 = vpop.xlane.xlu0 %784
      %786 = vadd.xlane.f32.xlu0 %v738
      %v787 = vpop.xlane.xlu0 %786
      %788 = vadd.xlane.f32.xlu0 %v739
      %v789 = vpop.xlane.xlu0 %788
      %790 = vadd.xlane.f32.xlu0 %v740
      %v791 = vpop.xlane.xlu0 %790
      %792 = vadd.xlane.f32.xlu0 %v741
      %v793 = vpop.xlane.xlu0 %792
      %794 = vadd.xlane.f32.xlu0 %v742
      %v795 = vpop.xlane.xlu0 %794
      %796 = vadd.xlane.f32.xlu0 %v743
      %v797 = vpop.xlane.xlu0 %796
      %798 = vadd.xlane.f32.xlu0 %v744
      %v799 = vpop.xlane.xlu0 %798
      %800 = vadd.xlane.f32.xlu0 %v745
      %v801 = vpop.xlane.xlu0 %800
      %802 = vadd.xlane.f32.xlu0 %v746
      %v803 = vpop.xlane.xlu0 %802
      %804 = vadd.xlane.f32.xlu0 %v747
      %v805 = vpop.xlane.xlu0 %804
      %806 = vadd.xlane.f32.xlu0 %v748
      %v807 = vpop.xlane.xlu0 %806
      %808 = vadd.xlane.f32.xlu0 %v749
      %v809 = vpop.xlane.xlu0 %808
      %810 = vadd.xlane.f32.xlu0 %v750
      %v811 = vpop.xlane.xlu0 %810
      %812 = vadd.xlane.f32.xlu0 %v751
      %v813 = vpop.xlane.xlu0 %812
      %814 = vadd.xlane.f32.xlu0 %v752
      %v815 = vpop.xlane.xlu0 %814
      %816 = vadd.xlane.f32.xlu0 %v753
      %v817 = vpop.xlane.xlu0 %816
      %vm818 = vcmask 7168
      %819 = vst.msk [vmem:[%s274] sm:$0xff] %vm818, %v755
      %820 = vst.msk [vmem:[%s274 + $0x8] sm:$0xff] %vm818, %v757
      %821 = vst.msk [vmem:[%s274 + $0x10] sm:$0xff] %vm818, %v759
      %822 = vst.msk [vmem:[%s274 + $0x18] sm:$0xff] %vm818, %v761
      %823 = vst.msk [vmem:[%s274 + $0x20] sm:$0xff] %vm818, %v763
      %824 = vst.msk [vmem:[%s274 + $0x28] sm:$0xff] %vm818, %v765
      %825 = vst.msk [vmem:[%s274 + $0x30] sm:$0xff] %vm818, %v767
      %826 = vst.msk [vmem:[%s274 + $0x38] sm:$0xff] %vm818, %v769
      %827 = vst.msk [vmem:[%s274 + $0x40] sm:$0xff] %vm818, %v771
      %828 = vst.msk [vmem:[%s274 + $0x48] sm:$0xff] %vm818, %v773
      %829 = vst.msk [vmem:[%s274 + $0x50] sm:$0xff] %vm818, %v775
      %830 = vst.msk [vmem:[%s274 + $0x58] sm:$0xff] %vm818, %v777
      %831 = vst.msk [vmem:[%s274 + $0x60] sm:$0xff] %vm818, %v779
      %832 = vst.msk [vmem:[%s274 + $0x68] sm:$0xff] %vm818, %v781
      %833 = vst.msk [vmem:[%s274 + $0x70] sm:$0xff] %vm818, %v783
      %834 = vst.msk [vmem:[%s274 + $0x78] sm:$0xff] %vm818, %v785
      %835 = vst.msk [vmem:[%s274 + $0x80] sm:$0xff] %vm818, %v787
      %836 = vst.msk [vmem:[%s274 + $0x88] sm:$0xff] %vm818, %v789
      %837 = vst.msk [vmem:[%s274 + $0x90] sm:$0xff] %vm818, %v791
      %838 = vst.msk [vmem:[%s274 + $0x98] sm:$0xff] %vm818, %v793
      %839 = vst.msk [vmem:[%s274 + $0xa0] sm:$0xff] %vm818, %v795
      %840 = vst.msk [vmem:[%s274 + $0xa8] sm:$0xff] %vm818, %v797
      %841 = vst.msk [vmem:[%s274 + $0xb0] sm:$0xff] %vm818, %v799
      %842 = vst.msk [vmem:[%s274 + $0xb8] sm:$0xff] %vm818, %v801
      %843 = vst.msk [vmem:[%s274 + $0xc0] sm:$0xff] %vm818, %v803
      %844 = vst.msk [vmem:[%s274 + $0xc8] sm:$0xff] %vm818, %v805
      %845 = vst.msk [vmem:[%s274 + $0xd0] sm:$0xff] %vm818, %v807
      %846 = vst.msk [vmem:[%s274 + $0xd8] sm:$0xff] %vm818, %v809
      %847 = vst.msk [vmem:[%s274 + $0xe0] sm:$0xff] %vm818, %v811
      %848 = vst.msk [vmem:[%s274 + $0xe8] sm:$0xff] %vm818, %v813
      %849 = vst.msk [vmem:[%s274 + $0xf0] sm:$0xff] %vm818, %v815
      %850 = vst.msk [vmem:[%s274 + $0xf8] sm:$0xff] %vm818, %v817
      %v851 = vld [vmem:[%s3] sm:$0x1]
      %v853 = vlaneseq
      %v854 = vshrl.u32 %v853, 7
      %v855 = vsub.s32 0, %v854
      %v856 = vrot.slane %v851, %v855
      %v858 = vmul.f32 %v397, %v856
      %v859 = vmul.f32 %v402, %v856
      %v860 = vmul.f32 %v407, %v856
      %v861 = vmul.f32 %v412, %v856
      %v862 = vmul.f32 %v417, %v856
      %v863 = vmul.f32 %v422, %v856
      %v864 = vmul.f32 %v427, %v856
      %v865 = vmul.f32 %v432, %v856
      %v866 = vmul.f32 %v437, %v856
      %v867 = vmul.f32 %v442, %v856
      %v868 = vmul.f32 %v447, %v856
      %v869 = vmul.f32 %v452, %v856
      %v870 = vmul.f32 %v457, %v856
      %v871 = vmul.f32 %v462, %v856
      %v872 = vmul.f32 %v467, %v856
      %v873 = vmul.f32 %v472, %v856
      %v874 = vmul.f32 %v477, %v856
      %v875 = vmul.f32 %v482, %v856
      %v876 = vmul.f32 %v487, %v856
      %v877 = vmul.f32 %v492, %v856
      %v878 = vmul.f32 %v497, %v856
      %v879 = vmul.f32 %v502, %v856
      %v880 = vmul.f32 %v507, %v856
      %v881 = vmul.f32 %v512, %v856
      %v882 = vmul.f32 %v517, %v856
      %v883 = vmul.f32 %v522, %v856
      %v884 = vmul.f32 %v527, %v856
      %v885 = vmul.f32 %v532, %v856
      %v886 = vmul.f32 %v537, %v856
      %v887 = vmul.f32 %v542, %v856
      %v888 = vmul.f32 %v547, %v856
      %v889 = vmul.f32 %v552, %v856
      %890 = vadd.xlane.f32.xlu0 %v858
      %v891 = vpop.xlane.xlu0 %890
      %892 = vadd.xlane.f32.xlu0 %v859
      %v893 = vpop.xlane.xlu0 %892
      %894 = vadd.xlane.f32.xlu0 %v860
      %v895 = vpop.xlane.xlu0 %894
      %896 = vadd.xlane.f32.xlu0 %v861
      %v897 = vpop.xlane.xlu0 %896
      %898 = vadd.xlane.f32.xlu0 %v862
      %v899 = vpop.xlane.xlu0 %898
      %900 = vadd.xlane.f32.xlu0 %v863
      %v901 = vpop.xlane.xlu0 %900
      %902 = vadd.xlane.f32.xlu0 %v864
      %v903 = vpop.xlane.xlu0 %902
      %904 = vadd.xlane.f32.xlu0 %v865
      %v905 = vpop.xlane.xlu0 %904
      %906 = vadd.xlane.f32.xlu0 %v866
      %v907 = vpop.xlane.xlu0 %906
      %908 = vadd.xlane.f32.xlu0 %v867
      %v909 = vpop.xlane.xlu0 %908
      %910 = vadd.xlane.f32.xlu0 %v868
      %v911 = vpop.xlane.xlu0 %910
      %912 = vadd.xlane.f32.xlu0 %v869
      %v913 = vpop.xlane.xlu0 %912
      %914 = vadd.xlane.f32.xlu0 %v870
      %v915 = vpop.xlane.xlu0 %914
      %916 = vadd.xlane.f32.xlu0 %v871
      %v917 = vpop.xlane.xlu0 %916
      %918 = vadd.xlane.f32.xlu0 %v872
      %v919 = vpop.xlane.xlu0 %918
      %920 = vadd.xlane.f32.xlu0 %v873
      %v921 = vpop.xlane.xlu0 %920
      %922 = vadd.xlane.f32.xlu0 %v874
      %v923 = vpop.xlane.xlu0 %922
      %924 = vadd.xlane.f32.xlu0 %v875
      %v925 = vpop.xlane.xlu0 %924
      %926 = vadd.xlane.f32.xlu0 %v876
      %v927 = vpop.xlane.xlu0 %926
      %928 = vadd.xlane.f32.xlu0 %v877
      %v929 = vpop.xlane.xlu0 %928
      %930 = vadd.xlane.f32.xlu0 %v878
      %v931 = vpop.xlane.xlu0 %930
      %932 = vadd.xlane.f32.xlu0 %v879
      %v933 = vpop.xlane.xlu0 %932
      %934 = vadd.xlane.f32.xlu0 %v880
      %v935 = vpop.xlane.xlu0 %934
      %936 = vadd.xlane.f32.xlu0 %v881
      %v937 = vpop.xlane.xlu0 %936
      %938 = vadd.xlane.f32.xlu0 %v882
      %v939 = vpop.xlane.xlu0 %938
      %940 = vadd.xlane.f32.xlu0 %v883
      %v941 = vpop.xlane.xlu0 %940
      %942 = vadd.xlane.f32.xlu0 %v884
      %v943 = vpop.xlane.xlu0 %942
      %944 = vadd.xlane.f32.xlu0 %v885
      %v945 = vpop.xlane.xlu0 %944
      %946 = vadd.xlane.f32.xlu0 %v886
      %v947 = vpop.xlane.xlu0 %946
      %948 = vadd.xlane.f32.xlu0 %v887
      %v949 = vpop.xlane.xlu0 %948
      %950 = vadd.xlane.f32.xlu0 %v888
      %v951 = vpop.xlane.xlu0 %950
      %952 = vadd.xlane.f32.xlu0 %v889
      %v953 = vpop.xlane.xlu0 %952
      %954 = vst.msk [vmem:[%s280] sm:$0xff] %vm818, %v891
      %955 = vst.msk [vmem:[%s280 + $0x8] sm:$0xff] %vm818, %v893
      %956 = vst.msk [vmem:[%s280 + $0x10] sm:$0xff] %vm818, %v895
      %957 = vst.msk [vmem:[%s280 + $0x18] sm:$0xff] %vm818, %v897
      %958 = vst.msk [vmem:[%s280 + $0x20] sm:$0xff] %vm818, %v899
      %959 = vst.msk [vmem:[%s280 + $0x28] sm:$0xff] %vm818, %v901
      %960 = vst.msk [vmem:[%s280 + $0x30] sm:$0xff] %vm818, %v903
      %961 = vst.msk [vmem:[%s280 + $0x38] sm:$0xff] %vm818, %v905
      %962 = vst.msk [vmem:[%s280 + $0x40] sm:$0xff] %vm818, %v907
      %963 = vst.msk [vmem:[%s280 + $0x48] sm:$0xff] %vm818, %v909
      %964 = vst.msk [vmem:[%s280 + $0x50] sm:$0xff] %vm818, %v911
      %965 = vst.msk [vmem:[%s280 + $0x58] sm:$0xff] %vm818, %v913
      %966 = vst.msk [vmem:[%s280 + $0x60] sm:$0xff] %vm818, %v915
      %967 = vst.msk [vmem:[%s280 + $0x68] sm:$0xff] %vm818, %v917
      %968 = vst.msk [vmem:[%s280 + $0x70] sm:$0xff] %vm818, %v919
      %969 = vst.msk [vmem:[%s280 + $0x78] sm:$0xff] %vm818, %v921
      %970 = vst.msk [vmem:[%s280 + $0x80] sm:$0xff] %vm818, %v923
      %971 = vst.msk [vmem:[%s280 + $0x88] sm:$0xff] %vm818, %v925
      %972 = vst.msk [vmem:[%s280 + $0x90] sm:$0xff] %vm818, %v927
      %973 = vst.msk [vmem:[%s280 + $0x98] sm:$0xff] %vm818, %v929
      %974 = vst.msk [vmem:[%s280 + $0xa0] sm:$0xff] %vm818, %v931
      %975 = vst.msk [vmem:[%s280 + $0xa8] sm:$0xff] %vm818, %v933
      %976 = vst.msk [vmem:[%s280 + $0xb0] sm:$0xff] %vm818, %v935
      %977 = vst.msk [vmem:[%s280 + $0xb8] sm:$0xff] %vm818, %v937
      %978 = vst.msk [vmem:[%s280 + $0xc0] sm:$0xff] %vm818, %v939
      %979 = vst.msk [vmem:[%s280 + $0xc8] sm:$0xff] %vm818, %v941
      %980 = vst.msk [vmem:[%s280 + $0xd0] sm:$0xff] %vm818, %v943
      %981 = vst.msk [vmem:[%s280 + $0xd8] sm:$0xff] %vm818, %v945
      %982 = vst.msk [vmem:[%s280 + $0xe0] sm:$0xff] %vm818, %v947
      %983 = vst.msk [vmem:[%s280 + $0xe8] sm:$0xff] %vm818, %v949
      %984 = vst.msk [vmem:[%s280 + $0xf0] sm:$0xff] %vm818, %v951
      %985 = vst.msk [vmem:[%s280 + $0xf8] sm:$0xff] %vm818, %v953
      %s986 = smul.u32 32, %s18
      %p987 = scmp.lt.s32.totalorder %s986, 63
      %s988 = scalar_select %p987, %s986, 63
      %s989 = smul.addr %s988, 4
      %s990 = scalar_lea.vmem %s4, %s989
      %s991 = smul.u32 32, %s18
      %p992 = scmp.lt.s32.totalorder %s991, 63
      %s993 = scalar_select %p992, %s991, 63
      %s994 = smul.addr %s993, 8
      %s995 = scalar_lea.vmem %s5, %s994
      %s996 = smul.u32 32, %s18
      %p997 = scmp.lt.s32.totalorder %s996, 63
      %s998 = scalar_select %p997, %s996, 63
      %s999 = smul.addr %s998, 8
      %s1000 = scalar_lea.vmem %s6, %s999
      // Predicated region
      $region37: #{gat2layer_forward.5} parent=35 // pred_check
        %p1001 = pneg %p125
      $region38: #{gat2layer_forward.5} parent=35 // pred_check_branch
        %1003 = sbr.rel (%p1001) target = $region40
      $region39: #{gat2layer_forward.5} parent=35 // pred_region
        %s1004 = smul.u32 32, %s18
      $region40: #{gat2layer_forward.5} parent=35 // pred_fallthru
        _
      // Predicated region
      $region41: #{gat2layer_forward.5} parent=35 // pred_check
        %p1005 = pneg %p151
      $region42: #{gat2layer_forward.5} parent=35 // pred_check_branch
        %1007 = sbr.rel (%p1005) target = $region44
      $region43: #{gat2layer_forward.5} parent=35 // pred_region
        %s1008 = smul.u32 32, %s18
      $region44: #{gat2layer_forward.5} parent=35 // pred_fallthru
        _
      // Predicated region
      $region45: #{gat2layer_forward.5} parent=35 // pred_check
        %p1009 = pneg %p177
      $region46: #{gat2layer_forward.5} parent=35 // pred_check_branch
        %1011 = sbr.rel (%p1009) target = $region48
      $region47: #{gat2layer_forward.5} parent=35 // pred_region
        %s1012 = smul.u32 32, %s18
      $region48: #{gat2layer_forward.5} parent=35 // pred_fallthru
        _
    $region36: #{gat2layer_forward.5} parent=5 // pred_fallthru
      _
    %p1013 = scmp.le.s32.totalorder 2, %s13
    // Predicated region
    $region49: #{gat2layer_forward.5} parent=5 // pred_check
      %p1014 = pneg %p1013
    $region50: #{gat2layer_forward.5} parent=5 // pred_check_branch
      %1016 = sbr.rel (%p1014) target = $region52
    $region51: #{gat2layer_forward.5} parent=5 // pred_region
      %s1017 = ssub.s32 %s13, 2
      // Predicated region
      $region53: #{gat2layer_forward.5} parent=51 // pred_check
        %p1018 = pneg %p131
      $region54: #{gat2layer_forward.5} parent=51 // pred_check_branch
        %1020 = sbr.rel (%p1018) target = $region56
      $region55: #{gat2layer_forward.5} parent=51 // pred_region
        %s1021 = smul.u32 32, %s19
        %p1022 = scmp.lt.s32.totalorder %s1021, 63
        %s1023 = scalar_select %p1022, %s1021, 63
        %s1024 = smul.addr %s1023, 4
        %s1025 = scalar_lea.vmem %s4, %s1024
      $region56: #{gat2layer_forward.5} parent=51 // pred_fallthru
        _
      // Predicated region
      $region57: #{gat2layer_forward.5} parent=51 // pred_check
        %p1026 = pneg %p157
      $region58: #{gat2layer_forward.5} parent=51 // pred_check_branch
        %1028 = sbr.rel (%p1026) target = $region60
      $region59: #{gat2layer_forward.5} parent=51 // pred_region
        %s1029 = smul.u32 32, %s19
        %p1030 = scmp.lt.s32.totalorder %s1029, 63
        %s1031 = scalar_select %p1030, %s1029, 63
        %s1032 = smul.addr %s1031, 8
        %s1033 = scalar_lea.vmem %s5, %s1032
      $region60: #{gat2layer_forward.5} parent=51 // pred_fallthru
        _
      // Predicated region
      $region61: #{gat2layer_forward.5} parent=51 // pred_check
        %p1034 = pneg %p183
      $region62: #{gat2layer_forward.5} parent=51 // pred_check_branch
        %1036 = sbr.rel (%p1034) target = $region64
      $region63: #{gat2layer_forward.5} parent=51 // pred_region
        %s1037 = smul.u32 32, %s19
        %p1038 = scmp.lt.s32.totalorder %s1037, 63
        %s1039 = scalar_select %p1038, %s1037, 63
        %s1040 = smul.addr %s1039, 8
        %s1041 = scalar_lea.vmem %s6, %s1040
      $region64: #{gat2layer_forward.5} parent=51 // pred_fallthru
        _
    $region52: #{gat2layer_forward.5} parent=5 // pred_fallthru
      _
  $region6: #{gat2layer_forward.5} parent=0 // loop_footer
    %s17 = sadd.s32 1, %s13
  $region7: #{gat2layer_forward.5} parent=0 // loop_footer_branch
    %12 = sbr.rel target = $region3
  $region8: #{gat2layer_forward.5} parent=0 // loop_exit
    _

// kernel: gat2layer_forward.6
$region0: #{gat2layer_forward.6}
  #allocation0 [shape = 'u32[]', space=smem, size = 0x4, offset = 0x4, fixed_abs, tag = 'smem constant byte address 0x4 - core index']
  #allocation1 [shape = 'u32[144,128]{1,0:T(1,128)}', space=vmem, size = 0x12000, scoped, tag = 'internal scratch']
  #allocation2 [shape = 'f32[256,1]{1,0:T(8,128)}', space=vmem, size = 0x20000, scoped, tag = 'scratch operand']
  #allocation3 [shape = 'f32[256,1]{1,0:T(8,128)}', space=vmem, size = 0x20000, scoped, tag = 'scratch operand']
  #allocation4 [shape = 'f32[256,128]{1,0:T(8,128)}', space=vmem, size = 0x20000, scoped, tag = 'scratch operand']
  #allocation5 [shape = 's32[1]{0}', space=sflag, size = 0x4, scoped, tag = 'scoped memory for gat2layer_forward.6']
  #allocation6 [shape = 'u8[1024]{0}', space=smem, size = 0x400, scoped, tag = 'prefetched SMEM operand 0']
  %s0 = inlined_call_operand.vmem [shape: s32[2,2], index: 0, kind: input, shape index: {}]
  %s1 = inlined_call_operand.vmem [shape: s8[512,512], index: 1, kind: input, shape index: {}]
  %s2 = inlined_call_operand.vmem [shape: f32[512,1], index: 2, kind: input, shape index: {}]
  %s3 = inlined_call_operand.vmem [shape: f32[1,512], index: 3, kind: input, shape index: {}]
  %s4 = inlined_call_operand.vmem [shape: bf16[512,128], index: 4, kind: input, shape index: {}]
  %s5 = inlined_call_operand.vmem [shape: f32[1,128], index: 5, kind: input, shape index: {}]
  %s6 = inlined_call_operand.vmem [shape: f32[512,128], index: 6, kind: output, shape index: {}]
  %s7 = sld [smem:[#allocation0]]
  $region88: #{gat2layer_forward.6} parent=0
    _
  %s9 = ssub.s32 1, %s7
  %s10 = scalar_select 0, %s9, %s7
  %s11 = sshll.u32 %s0, 4
  %s12 = int_to_ptr.vmem [resolvable:$true] %s11
  %14 = dma.vmem_to_smem %s12, 32, [#allocation6], [#allocation5]
  %15 = dma.done [#allocation5], 32
  %16 = sfence
  $region1: #{gat2layer_forward.6} parent=0
    #allocation7 [shape = 'u8[131072]{0}', space=vmem, size = 0x20000, scoped, tag = 'input window, operand 1']
    loop: start=0, step=1, limit=6
    $region2: #{gat2layer_forward.6} parent=1 // loop_pre_header
      _
    $region3: #{gat2layer_forward.6} parent=1 // loop_header
      %s18 = sphi 0, %s22
      %p19 = scmp.ge.s32.totalorder %s18, 6
      %s25 = sphi 0, %s37
      %s26 = sphi 0, %s33
      %s27 = sphi 0, %s25
      %s28 = sphi 0, %s26
      %s29 = sphi 0, %s27
      %s30 = sphi 0, %s28
      %s42 = sphi 0, %s44
      %s45 = sphi 0, %s42
      %s46 = sphi 0, %s45
      %s62 = sphi 0, %s46
      %s68 = sphi 0, %s70
      %s71 = sphi 0, %s68
      %s72 = sphi 0, %s71
      %s88 = sphi 0, %s72
      %s94 = sphi 0, %s96
      %s97 = sphi 0, %s94
      %s98 = sphi 0, %s97
      %s114 = sphi 0, %s98
      %s118 = sphi 0, %s118
      %s120 = sphi 0, %s118
      %s121 = sphi 0, %s120
      %s135 = sphi 0, %s121
      %s139 = sphi 0, %s139
      %s141 = sphi 0, %s139
      %s142 = sphi 0, %s141
      %s156 = sphi 0, %s142
      %s162 = sphi 0, %s164
      %s165 = sphi 0, %s162
      %s166 = sphi 0, %s165
      %s182 = sphi 0, %s166
    $region4: #{gat2layer_forward.6} parent=1 // loop_header_branch
      %21 = sbr.rel (%p19) target = $region8
    $region5: #{gat2layer_forward.6} parent=1 // loop_body
      %s23 = ssub.s32 %s18, 1
      %s24 = ssub.s32 %s18, 2
      %s31 = sadd.s32 1, %s26
      %p32 = scmp.ge.s32.totalorder %s31, 2
      %s33 = scalar_select %p32, 0, %s31
      %s34 = sadd.s32 1, %s25
      %s35 = scalar_select %p32, %s34, %s25
      %p36 = scmp.ge.s32.totalorder %s35, 2
      %s37 = scalar_select %p36, 0, %s35
      %s38 = ssub.s32 %s25, %s37
      %s39 = ssub.s32 %s26, %s33
      %s40 = sor.u32 %s38, %s39
      %p41 = scmp.eq.s32.totalorder %s40, 0
      %s43 = sadd.s32 %s42, 1
      %s44 = scalar_select %p41, %s42, %s43
      %p47 = pneg %p41
      %p48 = scmp.eq.s32.totalorder %s18, 3
      %p49 = por %p47, %p48
      %p50 = scmp.ne.s32.totalorder %s42, %s45
      %p51 = scmp.eq.s32.totalorder %s18, 0
      %p52 = por %p50, %p51
      %p53 = scmp.ne.s32.totalorder %s42, %s45
      %p54 = scmp.eq.s32.totalorder %s23, 3
      %p55 = por %p53, %p54
      %p56 = scmp.ne.s32.totalorder %s45, %s46
      %p57 = scmp.eq.s32.totalorder %s23, 0
      %p58 = por %p56, %p57
      %p59 = scmp.ne.s32.totalorder %s45, %s46
      %p60 = scmp.eq.s32.totalorder %s24, 3
      %p61 = por %p59, %p60
      %p63 = scmp.ne.s32.totalorder %s46, %s62
      %p64 = scmp.eq.s32.totalorder %s24, 0
      %p65 = por %p63, %p64
      %s66 = ssub.s32 %s25, %s37
      %p67 = scmp.eq.s32.totalorder %s66, 0
      %s69 = sadd.s32 %s68, 1
      %s70 = scalar_select %p67, %s68, %s69
      %p73 = pneg %p67
      %p74 = scmp.eq.s32.totalorder %s18, 3
      %p75 = por %p73, %p74
      %p76 = scmp.ne.s32.totalorder %s68, %s71
      %p77 = scmp.eq.s32.totalorder %s18, 0
      %p78 = por %p76, %p77
      %p79 = scmp.ne.s32.totalorder %s68, %s71
      %p80 = scmp.eq.s32.totalorder %s23, 3
      %p81 = por %p79, %p80
      %p82 = scmp.ne.s32.totalorder %s71, %s72
      %p83 = scmp.eq.s32.totalorder %s23, 0
      %p84 = por %p82, %p83
      %p85 = scmp.ne.s32.totalorder %s71, %s72
      %p86 = scmp.eq.s32.totalorder %s24, 3
      %p87 = por %p85, %p86
      %p89 = scmp.ne.s32.totalorder %s72, %s88
      %p90 = scmp.eq.s32.totalorder %s24, 0
      %p91 = por %p89, %p90
      %s92 = ssub.s32 %s26, %s33
      %p93 = scmp.eq.s32.totalorder %s92, 0
      %s95 = sadd.s32 %s94, 1
      %s96 = scalar_select %p93, %s94, %s95
      %p99 = pneg %p93
      %p100 = scmp.eq.s32.totalorder %s18, 3
      %p101 = por %p99, %p100
      %p102 = scmp.ne.s32.totalorder %s94, %s97
      %p103 = scmp.eq.s32.totalorder %s18, 0
      %p104 = por %p102, %p103
      %p105 = scmp.ne.s32.totalorder %s94, %s97
      %p106 = scmp.eq.s32.totalorder %s23, 3
      %p107 = por %p105, %p106
      %p108 = scmp.ne.s32.totalorder %s97, %s98
      %p109 = scmp.eq.s32.totalorder %s23, 0
      %p110 = por %p108, %p109
      %p111 = scmp.ne.s32.totalorder %s97, %s98
      %p112 = scmp.eq.s32.totalorder %s24, 3
      %p113 = por %p111, %p112
      %p115 = scmp.ne.s32.totalorder %s98, %s114
      %p116 = scmp.eq.s32.totalorder %s24, 0
      %p117 = por %p115, %p116
      %s119 = sadd.s32 %s118, 1
      %p122 = scmp.eq.s32.totalorder %s18, 3
      %p123 = scmp.ne.s32.totalorder %s118, %s120
      %p124 = scmp.eq.s32.totalorder %s18, 0
      %p125 = por %p123, %p124
      %p126 = scmp.ne.s32.totalorder %s118, %s120
      %p127 = scmp.eq.s32.totalorder %s23, 3
      %p128 = por %p126, %p127
      %p129 = scmp.ne.s32.totalorder %s120, %s121
      %p130 = scmp.eq.s32.totalorder %s23, 0
      %p131 = por %p129, %p130
      %p132 = scmp.ne.s32.totalorder %s120, %s121
      %p133 = scmp.eq.s32.totalorder %s24, 3
      %p134 = por %p132, %p133
      %p136 = scmp.ne.s32.totalorder %s121, %s135
      %p137 = scmp.eq.s32.totalorder %s24, 0
      %p138 = por %p136, %p137
      %s140 = sadd.s32 %s139, 1
      %p143 = scmp.eq.s32.totalorder %s18, 3
      %p144 = scmp.ne.s32.totalorder %s139, %s141
      %p145 = scmp.eq.s32.totalorder %s18, 0
      %p146 = por %p144, %p145
      %p147 = scmp.ne.s32.totalorder %s139, %s141
      %p148 = scmp.eq.s32.totalorder %s23, 3
      %p149 = por %p147, %p148
      %p150 = scmp.ne.s32.totalorder %s141, %s142
      %p151 = scmp.eq.s32.totalorder %s23, 0
      %p152 = por %p150, %p151
      %p153 = scmp.ne.s32.totalorder %s141, %s142
      %p154 = scmp.eq.s32.totalorder %s24, 3
      %p155 = por %p153, %p154
      %p157 = scmp.ne.s32.totalorder %s142, %s156
      %p158 = scmp.eq.s32.totalorder %s24, 0
      %p159 = por %p157, %p158
      %s160 = ssub.s32 %s25, %s37
      %p161 = scmp.eq.s32.totalorder %s160, 0
      %s163 = sadd.s32 %s162, 1
      %s164 = scalar_select %p161, %s162, %s163
      %p167 = pneg %p161
      %p168 = scmp.eq.s32.totalorder %s18, 3
      %p169 = por %p167, %p168
      %p170 = scmp.ne.s32.totalorder %s162, %s165
      %p171 = scmp.eq.s32.totalorder %s18, 0
      %p172 = por %p170, %p171
      %p173 = scmp.ne.s32.totalorder %s162, %s165
      %p174 = scmp.eq.s32.totalorder %s23, 3
      %p175 = por %p173, %p174
      %p176 = scmp.ne.s32.totalorder %s165, %s166
      %p177 = scmp.eq.s32.totalorder %s23, 0
      %p178 = por %p176, %p177
      %p179 = scmp.ne.s32.totalorder %s165, %s166
      %p180 = scmp.eq.s32.totalorder %s24, 3
      %p181 = por %p179, %p180
      %p183 = scmp.ne.s32.totalorder %s166, %s182
      %p184 = scmp.eq.s32.totalorder %s24, 0
      %p185 = por %p183, %p184
      %p186 = scmp.le.s32.totalorder 1, %s18
      %p187 = scmp.lt.s32.totalorder %s18, 5
      %p188 = pnand %p186, %p187
      %p189 = pneg %p188
      // Predicated region
      $region9: #{gat2layer_forward.6} parent=5 // pred_check
        _
      $region10: #{gat2layer_forward.6} parent=5 // pred_check_branch
        %191 = sbr.rel (%p188) target = $region12
      $region11: #{gat2layer_forward.6} parent=5 // pred_region
        %s192 = ssub.s32 %s18, 1
        // Predicated region
        $region13: #{gat2layer_forward.6} parent=11 // pred_check
          %p193 = pneg %p131
        $region14: #{gat2layer_forward.6} parent=11 // pred_check_branch
          %195 = sbr.rel (%p193) target = $region16
        $region15: #{gat2layer_forward.6} parent=11 // pred_region
          _
        $region16: #{gat2layer_forward.6} parent=11 // pred_fallthru
          _
        // Predicated region
        $region17: #{gat2layer_forward.6} parent=11 // pred_check
          %p196 = pneg %p152
        $region18: #{gat2layer_forward.6} parent=11 // pred_check_branch
          %198 = sbr.rel (%p196) target = $region20
        $region19: #{gat2layer_forward.6} parent=11 // pred_region
          _
        $region20: #{gat2layer_forward.6} parent=11 // pred_fallthru
          _
      $region12: #{gat2layer_forward.6} parent=5 // pred_fallthru
        _
      %p199 = scmp.lt.s32.totalorder %s18, 4
      // Predicated region
      $region21: #{gat2layer_forward.6} parent=5 // pred_check
        %p200 = pneg %p199
      $region22: #{gat2layer_forward.6} parent=5 // pred_check_branch
        %202 = sbr.rel (%p200) target = $region24
      $region23: #{gat2layer_forward.6} parent=5 // pred_region
        // Predicated region
        $region25: #{gat2layer_forward.6} parent=23 // pred_check
          %p203 = pneg %p52
        $region26: #{gat2layer_forward.6} parent=23 // pred_check_branch
          %205 = sbr.rel (%p203) target = $region28
        $region27: #{gat2layer_forward.6} parent=23 // pred_region
          %s206 = sand.u32 %s42, 1
          %s207 = sand.u32 %s42, 1
          %s208 = smul.addr %s207, 128
          %s209 = scalar_lea.vmem [#allocation7], %s208
          %s210 = smul.u32 8, %s25
          %s211 = smul.u32 2, %s26
          %s212 = smul.addr %s210, 4
          %s213 = sadd.s32 %s211, %s212
          %s214 = smul.addr %s213, 8
          %s215 = scalar_lea.vmem %s1, %s214
          // Predicated region
          $region29: #{gat2layer_forward.6} parent=27 // pred_check
            _
          $region30: #{gat2layer_forward.6} parent=27 // pred_check_branch
            %217 = sbr.rel (0) target = $region32
          $region31: #{gat2layer_forward.6} parent=27 // pred_region
            // Predicated region
            $region33: #{gat2layer_forward.6} parent=31 // pred_check
              _
            $region34: #{gat2layer_forward.6} parent=31 // pred_check_branch
              %219 = sbr.rel (0) target = $region36
            $region35: #{gat2layer_forward.6} parent=31 // pred_region
              loop: start=0, step=1, limit=1
              $region37: #{gat2layer_forward.6} parent=35 // loop_pre_header
                _
              $region38: #{gat2layer_forward.6} parent=35 // loop_header
                %s221 = sphi 0, %s225
                %p222 = scmp.ge.s32.totalorder %s221, 1
                %s226 = sphi %s215, %s215
                %s227 = sphi %s209, %s209
              $region39: #{gat2layer_forward.6} parent=35 // loop_header_branch
                %224 = sbr.rel (%p222) target = $region43
              $region40: #{gat2layer_forward.6} parent=35 // loop_body
                %v228 = vld [vmem:[%s226] sm:$0xff]
                %229 = vst [vmem:[%s227] sm:$0xff] %v228
                %v230 = vld [vmem:[%s226 + $0x8] sm:$0xff]
                %231 = vst [vmem:[%s227 + $0x8] sm:$0xff] %v230
                %v232 = vld [vmem:[%s226 + $0x20] sm:$0xff]
                %233 = vst [vmem:[%s227 + $0x10] sm:$0xff] %v232
                %v234 = vld [vmem:[%s226 + $0x28] sm:$0xff]
                %235 = vst [vmem:[%s227 + $0x18] sm:$0xff] %v234
                %v236 = vld [vmem:[%s226 + $0x40] sm:$0xff]
                %237 = vst [vmem:[%s227 + $0x20] sm:$0xff] %v236
                %v238 = vld [vmem:[%s226 + $0x48] sm:$0xff]
                %239 = vst [vmem:[%s227 + $0x28] sm:$0xff] %v238
                %v240 = vld [vmem:[%s226 + $0x60] sm:$0xff]
                %241 = vst [vmem:[%s227 + $0x30] sm:$0xff] %v240
                %v242 = vld [vmem:[%s226 + $0x68] sm:$0xff]
                %243 = vst [vmem:[%s227 + $0x38] sm:$0xff] %v242
                %v244 = vld [vmem:[%s226 + $0x80] sm:$0xff]
                %245 = vst [vmem:[%s227 + $0x40] sm:$0xff] %v244
                %v246 = vld [vmem:[%s226 + $0x88] sm:$0xff]
                %247 = vst [vmem:[%s227 + $0x48] sm:$0xff] %v246
                %v248 = vld [vmem:[%s226 + $0xa0] sm:$0xff]
                %249 = vst [vmem:[%s227 + $0x50] sm:$0xff] %v248
                %v250 = vld [vmem:[%s226 + $0xa8] sm:$0xff]
                %251 = vst [vmem:[%s227 + $0x58] sm:$0xff] %v250
                %v252 = vld [vmem:[%s226 + $0xc0] sm:$0xff]
                %253 = vst [vmem:[%s227 + $0x60] sm:$0xff] %v252
                %v254 = vld [vmem:[%s226 + $0xc8] sm:$0xff]
                %255 = vst [vmem:[%s227 + $0x68] sm:$0xff] %v254
                %v256 = vld [vmem:[%s226 + $0xe0] sm:$0xff]
                %257 = vst [vmem:[%s227 + $0x70] sm:$0xff] %v256
                %v258 = vld [vmem:[%s226 + $0xe8] sm:$0xff]
                %259 = vst [vmem:[%s227 + $0x78] sm:$0xff] %v258
              $region41: #{gat2layer_forward.6} parent=35 // loop_footer
                %s225 = sadd.s32 1, %s221
              $region42: #{gat2layer_forward.6} parent=35 // loop_footer_branch
                %220 = sbr.rel target = $region38
              $region43: #{gat2layer_forward.6} parent=35 // loop_exit
                _
            $region36: #{gat2layer_forward.6} parent=31 // pred_fallthru
              _
            // Predicated region
            $region44: #{gat2layer_forward.6} parent=31 // pred_check
              _
            $region45: #{gat2layer_forward.6} parent=31 // pred_check_branch
              %261 = sbr.rel target = $region47
            $region46: #{gat2layer_forward.6} parent=31 // pred_region
              _
            $region47: #{gat2layer_forward.6} parent=31 // pred_fallthru
              _
          $region32: #{gat2layer_forward.6} parent=27 // pred_fallthru
            _
          %262 = vnop
        $region28: #{gat2layer_forward.6} parent=23 // pred_fallthru
          _
        // Predicated region
        $region48: #{gat2layer_forward.6} parent=23 // pred_check
          %p263 = pneg %p78
        $region49: #{gat2layer_forward.6} parent=23 // pred_check_branch
          %265 = sbr.rel (%p263) target = $region51
        $region50: #{gat2layer_forward.6} parent=23 // pred_region
          %s266 = smul.u32 32, %s25
          %p267 = scmp.lt.s32.totalorder %s266, 63
          %s268 = scalar_select %p267, %s266, 63
          %s269 = smul.addr %s268, 8
          %s270 = scalar_lea.vmem %s2, %s269
          %s271 = smul.u32 32, %s25
        $region51: #{gat2layer_forward.6} parent=23 // pred_fallthru
          _
        // Predicated region
        $region52: #{gat2layer_forward.6} parent=23 // pred_check
          %p272 = pneg %p104
        $region53: #{gat2layer_forward.6} parent=23 // pred_check_branch
          %274 = sbr.rel (%p272) target = $region55
        $region54: #{gat2layer_forward.6} parent=23 // pred_region
          %s275 = smul.u32 2, %s26
          %p276 = scmp.lt.s32.totalorder %s275, 3
          %s277 = scalar_select %p276, %s275, 3
          %s278 = scalar_lea.vmem %s3, %s277
          %s279 = smul.u32 2, %s26
        $region55: #{gat2layer_forward.6} parent=23 // pred_fallthru
          _
      $region24: #{gat2layer_forward.6} parent=5 // pred_fallthru
        _
      %p280 = scmp.le.s32.totalorder 1, %s18
      %p281 = scmp.lt.s32.totalorder %s18, 5
      %p282 = pnand %p280, %p281
      %p283 = pneg %p282
      // Predicated region
      $region56: #{gat2layer_forward.6} parent=5 // pred_check
        _
      $region57: #{gat2layer_forward.6} parent=5 // pred_check_branch
        %285 = sbr.rel (%p282) target = $region59
      $region58: #{gat2layer_forward.6} parent=5 // pred_region
        %s286 = ssub.s32 %s18, 1
        %s287 = sand.u32 %s45, 1
        %s288 = sand.u32 %s45, 1
        %s289 = smul.addr %s288, 128
        %s290 = scalar_lea.vmem [#allocation7], %s289
        // Predicated region
        $region60: #{gat2layer_forward.6} parent=58 // pred_check
          %p291 = pneg %p58
        $region61: #{gat2layer_forward.6} parent=58 // pred_check_branch
          %293 = sbr.rel (%p291) target = $region63
        $region62: #{gat2layer_forward.6} parent=58 // pred_region
          _
        $region63: #{gat2layer_forward.6} parent=58 // pred_fallthru
          _
        %s294 = sand.u32 %s45, 1
        %s295 = sand.u32 %s45, 1
        %s296 = smul.addr %s295, 128
        %s297 = scalar_lea.vmem [#allocation7], %s296
        %p298 = pneg %p58
        %p299 = pneg %p55
        %s300 = smul.u32 32, %s27
        %p301 = scmp.lt.s32.totalorder %s300, 63
        %s302 = scalar_select %p301, %s300, 63
        %s303 = smul.addr %s302, 8
        %s304 = scalar_lea.vmem %s2, %s303
        %p305 = pneg %p84
        %p306 = pneg %p81
        %s307 = smul.u32 2, %s28
        %p308 = scmp.lt.s32.totalorder %s307, 3
        %s309 = scalar_select %p308, %s307, 3
        %s310 = scalar_lea.vmem %s3, %s309
        %p311 = pneg %p110
        %p312 = pneg %p107
        %p313 = pneg %p131
        %p314 = pneg %p128
        %p315 = pneg %p152
        %p316 = pneg %p149
        %p317 = pneg %p178
        %p318 = pneg %p175
        %s319 = smul.u32 32, %s27
        %p320 = scmp.lt.s32.totalorder %s319, 63
        %s321 = scalar_select %p320, %s319, 63
        %s322 = smul.addr %s321, 8
        %s323 = scalar_lea.vmem %s6, %s322
        %s324 = smul.u32 8, %s27
        %s325 = smul.u32 2, %s28
        %s326 = smul.u32 32, %s27
        %p327 = scmp.lt.s32.totalorder %s326, 63
        %s328 = scalar_select %p327, %s326, 63
        %s329 = smul.addr %s328, 8
        %s330 = scalar_lea.vmem %s2, %s329
        %s331 = smul.u32 32, %s27
        %s332 = smul.u32 2, %s28
        %p333 = scmp.lt.s32.totalorder %s332, 3
        %s334 = scalar_select %p333, %s332, 3
        %s335 = scalar_lea.vmem %s3, %s334
        %s336 = smul.u32 2, %s28
        %s337 = smul.u32 32, %s27
        %p338 = scmp.lt.s32.totalorder %s337, 63
        %s339 = scalar_select %p338, %s337, 63
        %s340 = smul.addr %s339, 8
        %s341 = scalar_lea.vmem %s6, %s340
        %s342 = smul.u32 32, %s27
        %p344 = scmp.eq.s32.totalorder %s28, 0
        // Predicated region
        $region64: #{gat2layer_forward.6} parent=58 // pred_check
          %p345 = pneg %p344
        $region65: #{gat2layer_forward.6} parent=58 // pred_check_branch
          %347 = sbr.rel (%p345) target = $region67
        $region66: #{gat2layer_forward.6} parent=58 // pred_region
          %vm348 = vcmask 7168
          %349 = vst.msk [vmem:[#allocation2] sm:$0xff] %vm348, -1e+30
          %350 = vst.msk [vmem:[#allocation2 + $0x8] sm:$0xff] %vm348, -1e+30
          %351 = vst.msk [vmem:[#allocation2 + $0x10] sm:$0xff] %vm348, -1e+30
          %352 = vst.msk [vmem:[#allocation2 + $0x18] sm:$0xff] %vm348, -1e+30
          %353 = vst.msk [vmem:[#allocation2 + $0x20] sm:$0xff] %vm348, -1e+30
          %354 = vst.msk [vmem:[#allocation2 + $0x28] sm:$0xff] %vm348, -1e+30
          %355 = vst.msk [vmem:[#allocation2 + $0x30] sm:$0xff] %vm348, -1e+30
          %356 = vst.msk [vmem:[#allocation2 + $0x38] sm:$0xff] %vm348, -1e+30
          %357 = vst.msk [vmem:[#allocation2 + $0x40] sm:$0xff] %vm348, -1e+30
          %358 = vst.msk [vmem:[#allocation2 + $0x48] sm:$0xff] %vm348, -1e+30
          %359 = vst.msk [vmem:[#allocation2 + $0x50] sm:$0xff] %vm348, -1e+30
          %360 = vst.msk [vmem:[#allocation2 + $0x58] sm:$0xff] %vm348, -1e+30
          %361 = vst.msk [vmem:[#allocation2 + $0x60] sm:$0xff] %vm348, -1e+30
          %362 = vst.msk [vmem:[#allocation2 + $0x68] sm:$0xff] %vm348, -1e+30
          %363 = vst.msk [vmem:[#allocation2 + $0x70] sm:$0xff] %vm348, -1e+30
          %364 = vst.msk [vmem:[#allocation2 + $0x78] sm:$0xff] %vm348, -1e+30
          %365 = vst.msk [vmem:[#allocation2 + $0x80] sm:$0xff] %vm348, -1e+30
          %366 = vst.msk [vmem:[#allocation2 + $0x88] sm:$0xff] %vm348, -1e+30
          %367 = vst.msk [vmem:[#allocation2 + $0x90] sm:$0xff] %vm348, -1e+30
          %368 = vst.msk [vmem:[#allocation2 + $0x98] sm:$0xff] %vm348, -1e+30
          %369 = vst.msk [vmem:[#allocation2 + $0xa0] sm:$0xff] %vm348, -1e+30
          %370 = vst.msk [vmem:[#allocation2 + $0xa8] sm:$0xff] %vm348, -1e+30
          %371 = vst.msk [vmem:[#allocation2 + $0xb0] sm:$0xff] %vm348, -1e+30
          %372 = vst.msk [vmem:[#allocation2 + $0xb8] sm:$0xff] %vm348, -1e+30
          %373 = vst.msk [vmem:[#allocation2 + $0xc0] sm:$0xff] %vm348, -1e+30
          %374 = vst.msk [vmem:[#allocation2 + $0xc8] sm:$0xff] %vm348, -1e+30
          %375 = vst.msk [vmem:[#allocation2 + $0xd0] sm:$0xff] %vm348, -1e+30
          %376 = vst.msk [vmem:[#allocation2 + $0xd8] sm:$0xff] %vm348, -1e+30
          %377 = vst.msk [vmem:[#allocation2 + $0xe0] sm:$0xff] %vm348, -1e+30
          %378 = vst.msk [vmem:[#allocation2 + $0xe8] sm:$0xff] %vm348, -1e+30
          %379 = vst.msk [vmem:[#allocation2 + $0xf0] sm:$0xff] %vm348, -1e+30
          %380 = vst.msk [vmem:[#allocation2 + $0xf8] sm:$0xff] %vm348, -1e+30
          %381 = vst.msk [vmem:[#allocation3] sm:$0xff] %vm348, 0.0
          %382 = vst.msk [vmem:[#allocation3 + $0x8] sm:$0xff] %vm348, 0.0
          %383 = vst.msk [vmem:[#allocation3 + $0x10] sm:$0xff] %vm348, 0.0
          %384 = vst.msk [vmem:[#allocation3 + $0x18] sm:$0xff] %vm348, 0.0
          %385 = vst.msk [vmem:[#allocation3 + $0x20] sm:$0xff] %vm348, 0.0
          %386 = vst.msk [vmem:[#allocation3 + $0x28] sm:$0xff] %vm348, 0.0
          %387 = vst.msk [vmem:[#allocation3 + $0x30] sm:$0xff] %vm348, 0.0
          %388 = vst.msk [vmem:[#allocation3 + $0x38] sm:$0xff] %vm348, 0.0
          %389 = vst.msk [vmem:[#allocation3 + $0x40] sm:$0xff] %vm348, 0.0
          %390 = vst.msk [vmem:[#allocation3 + $0x48] sm:$0xff] %vm348, 0.0
          %391 = vst.msk [vmem:[#allocation3 + $0x50] sm:$0xff] %vm348, 0.0
          %392 = vst.msk [vmem:[#allocation3 + $0x58] sm:$0xff] %vm348, 0.0
          %393 = vst.msk [vmem:[#allocation3 + $0x60] sm:$0xff] %vm348, 0.0
          %394 = vst.msk [vmem:[#allocation3 + $0x68] sm:$0xff] %vm348, 0.0
          %395 = vst.msk [vmem:[#allocation3 + $0x70] sm:$0xff] %vm348, 0.0
          %396 = vst.msk [vmem:[#allocation3 + $0x78] sm:$0xff] %vm348, 0.0
          %397 = vst.msk [vmem:[#allocation3 + $0x80] sm:$0xff] %vm348, 0.0
          %398 = vst.msk [vmem:[#allocation3 + $0x88] sm:$0xff] %vm348, 0.0
          %399 = vst.msk [vmem:[#allocation3 + $0x90] sm:$0xff] %vm348, 0.0
          %400 = vst.msk [vmem:[#allocation3 + $0x98] sm:$0xff] %vm348, 0.0
          %401 = vst.msk [vmem:[#allocation3 + $0xa0] sm:$0xff] %vm348, 0.0
          %402 = vst.msk [vmem:[#allocation3 + $0xa8] sm:$0xff] %vm348, 0.0
          %403 = vst.msk [vmem:[#allocation3 + $0xb0] sm:$0xff] %vm348, 0.0
          %404 = vst.msk [vmem:[#allocation3 + $0xb8] sm:$0xff] %vm348, 0.0
          %405 = vst.msk [vmem:[#allocation3 + $0xc0] sm:$0xff] %vm348, 0.0
          %406 = vst.msk [vmem:[#allocation3 + $0xc8] sm:$0xff] %vm348, 0.0
          %407 = vst.msk [vmem:[#allocation3 + $0xd0] sm:$0xff] %vm348, 0.0
          %408 = vst.msk [vmem:[#allocation3 + $0xd8] sm:$0xff] %vm348, 0.0
          %409 = vst.msk [vmem:[#allocation3 + $0xe0] sm:$0xff] %vm348, 0.0
          %410 = vst.msk [vmem:[#allocation3 + $0xe8] sm:$0xff] %vm348, 0.0
          %411 = vst.msk [vmem:[#allocation3 + $0xf0] sm:$0xff] %vm348, 0.0
          %412 = vst.msk [vmem:[#allocation3 + $0xf8] sm:$0xff] %vm348, 0.0
          %413 = vst [vmem:[#allocation4] sm:$0xff] 0.0
          %414 = vst [vmem:[#allocation4 + $0x8] sm:$0xff] 0.0
          %415 = vst [vmem:[#allocation4 + $0x10] sm:$0xff] 0.0
          %416 = vst [vmem:[#allocation4 + $0x18] sm:$0xff] 0.0
          %417 = vst [vmem:[#allocation4 + $0x20] sm:$0xff] 0.0
          %418 = vst [vmem:[#allocation4 + $0x28] sm:$0xff] 0.0
          %419 = vst [vmem:[#allocation4 + $0x30] sm:$0xff] 0.0
          %420 = vst [vmem:[#allocation4 + $0x38] sm:$0xff] 0.0
          %421 = vst [vmem:[#allocation4 + $0x40] sm:$0xff] 0.0
          %422 = vst [vmem:[#allocation4 + $0x48] sm:$0xff] 0.0
          %423 = vst [vmem:[#allocation4 + $0x50] sm:$0xff] 0.0
          %424 = vst [vmem:[#allocation4 + $0x58] sm:$0xff] 0.0
          %425 = vst [vmem:[#allocation4 + $0x60] sm:$0xff] 0.0
          %426 = vst [vmem:[#allocation4 + $0x68] sm:$0xff] 0.0
          %427 = vst [vmem:[#allocation4 + $0x70] sm:$0xff] 0.0
          %428 = vst [vmem:[#allocation4 + $0x78] sm:$0xff] 0.0
          %429 = vst [vmem:[#allocation4 + $0x80] sm:$0xff] 0.0
          %430 = vst [vmem:[#allocation4 + $0x88] sm:$0xff] 0.0
          %431 = vst [vmem:[#allocation4 + $0x90] sm:$0xff] 0.0
          %432 = vst [vmem:[#allocation4 + $0x98] sm:$0xff] 0.0
          %433 = vst [vmem:[#allocation4 + $0xa0] sm:$0xff] 0.0
          %434 = vst [vmem:[#allocation4 + $0xa8] sm:$0xff] 0.0
          %435 = vst [vmem:[#allocation4 + $0xb0] sm:$0xff] 0.0
          %436 = vst [vmem:[#allocation4 + $0xb8] sm:$0xff] 0.0
          %437 = vst [vmem:[#allocation4 + $0xc0] sm:$0xff] 0.0
          %438 = vst [vmem:[#allocation4 + $0xc8] sm:$0xff] 0.0
          %439 = vst [vmem:[#allocation4 + $0xd0] sm:$0xff] 0.0
          %440 = vst [vmem:[#allocation4 + $0xd8] sm:$0xff] 0.0
          %441 = vst [vmem:[#allocation4 + $0xe0] sm:$0xff] 0.0
          %442 = vst [vmem:[#allocation4 + $0xe8] sm:$0xff] 0.0
          %443 = vst [vmem:[#allocation4 + $0xf0] sm:$0xff] 0.0
          %444 = vst [vmem:[#allocation4 + $0xf8] sm:$0xff] 0.0
        $region67: #{gat2layer_forward.6} parent=58 // pred_fallthru
          _
        %s445 = sshra.s32 %s28, 7
        %s446 = sand.u32 %s28, 127
        %s447 = sadd.s32 %s445, %s27
        %s448 = smul.u32 %s447, 128
        %s449 = sshra.s32 %s28, 7
        %s450 = sand.u32 %s28, 127
        %s451 = sadd.s32 %s448, %s450
        %s452 = sld [smem:[#allocation6 + %s451]]
        %p453 = scmp.gt.s32.totalorder %s452, 0
        // Predicated region
        $region68: #{gat2layer_forward.6} parent=58 // pred_check
          %p454 = pneg %p453
        $region69: #{gat2layer_forward.6} parent=58 // pred_check_branch
          %456 = sbr.rel (%p454) target = $region71
        $region70: #{gat2layer_forward.6} parent=58 // pred_region
          %s457 = smul.u32 %s28, 256
          %s458 = sshra.s32 %s457, 3
          %s459 = sand.u32 %s457, 7
          %s460 = smul.addr %s458, 4
          %s461 = scalar_lea.vmem %s4, %s460
          %v462 = vld [vmem:[%s461] sm:$0xf]
          %v463 = vld [vmem:[%s461 + $0x4] sm:$0xf]
          %v464 = vld [vmem:[%s461 + $0x8] sm:$0xf]
          %v465 = vld [vmem:[%s461 + $0xc] sm:$0xf]
          %v466 = vld [vmem:[%s461 + $0x10] sm:$0xf]
          %v467 = vld [vmem:[%s461 + $0x14] sm:$0xf]
          %v468 = vld [vmem:[%s461 + $0x18] sm:$0xf]
          %v469 = vld [vmem:[%s461 + $0x1c] sm:$0xf]
          %v470 = vld [vmem:[%s461 + $0x20] sm:$0xf]
          %v471 = vld [vmem:[%s461 + $0x24] sm:$0xf]
          %v472 = vld [vmem:[%s461 + $0x28] sm:$0xf]
          %v473 = vld [vmem:[%s461 + $0x2c] sm:$0xf]
          %v474 = vld [vmem:[%s461 + $0x30] sm:$0xf]
          %v475 = vld [vmem:[%s461 + $0x34] sm:$0xf]
          %v476 = vld [vmem:[%s461 + $0x38] sm:$0xf]
          %v477 = vld [vmem:[%s461 + $0x3c] sm:$0xf]
          %v478 = vld [vmem:[%s461 + $0x40] sm:$0xf]
          %v479 = vld [vmem:[%s461 + $0x44] sm:$0xf]
          %v480 = vld [vmem:[%s461 + $0x48] sm:$0xf]
          %v481 = vld [vmem:[%s461 + $0x4c] sm:$0xf]
          %v482 = vld [vmem:[%s461 + $0x50] sm:$0xf]
          %v483 = vld [vmem:[%s461 + $0x54] sm:$0xf]
          %v484 = vld [vmem:[%s461 + $0x58] sm:$0xf]
          %v485 = vld [vmem:[%s461 + $0x5c] sm:$0xf]
          %v486 = vld [vmem:[%s461 + $0x60] sm:$0xf]
          %v487 = vld [vmem:[%s461 + $0x64] sm:$0xf]
          %v488 = vld [vmem:[%s461 + $0x68] sm:$0xf]
          %v489 = vld [vmem:[%s461 + $0x6c] sm:$0xf]
          %v490 = vld [vmem:[%s461 + $0x70] sm:$0xf]
          %v491 = vld [vmem:[%s461 + $0x74] sm:$0xf]
          %v492 = vld [vmem:[%s461 + $0x78] sm:$0xf]
          %v493 = vld [vmem:[%s461 + $0x7c] sm:$0xf]
          %v494 = vld [vmem:[%s330] sm:$0xff]
          %v495 = vld [vmem:[%s330 + $0x8] sm:$0xff]
          %v496 = vld [vmem:[%s330 + $0x10] sm:$0xff]
          %v497 = vld [vmem:[%s330 + $0x18] sm:$0xff]
          %v498 = vld [vmem:[%s330 + $0x20] sm:$0xff]
          %v499 = vld [vmem:[%s330 + $0x28] sm:$0xff]
          %v500 = vld [vmem:[%s330 + $0x30] sm:$0xff]
          %v501 = vld [vmem:[%s330 + $0x38] sm:$0xff]
          %v502 = vld [vmem:[%s330 + $0x40] sm:$0xff]
          %v503 = vld [vmem:[%s330 + $0x48] sm:$0xff]
          %v504 = vld [vmem:[%s330 + $0x50] sm:$0xff]
          %v505 = vld [vmem:[%s330 + $0x58] sm:$0xff]
          %v506 = vld [vmem:[%s330 + $0x60] sm:$0xff]
          %v507 = vld [vmem:[%s330 + $0x68] sm:$0xff]
          %v508 = vld [vmem:[%s330 + $0x70] sm:$0xff]
          %v509 = vld [vmem:[%s330 + $0x78] sm:$0xff]
          %v510 = vld [vmem:[%s330 + $0x80] sm:$0xff]
          %v511 = vld [vmem:[%s330 + $0x88] sm:$0xff]
          %v512 = vld [vmem:[%s330 + $0x90] sm:$0xff]
          %v513 = vld [vmem:[%s330 + $0x98] sm:$0xff]
          %v514 = vld [vmem:[%s330 + $0xa0] sm:$0xff]
          %v515 = vld [vmem:[%s330 + $0xa8] sm:$0xff]
          %v516 = vld [vmem:[%s330 + $0xb0] sm:$0xff]
          %v517 = vld [vmem:[%s330 + $0xb8] sm:$0xff]
          %v518 = vld [vmem:[%s330 + $0xc0] sm:$0xff]
          %v519 = vld [vmem:[%s330 + $0xc8] sm:$0xff]
          %v520 = vld [vmem:[%s330 + $0xd0] sm:$0xff]
          %v521 = vld [vmem:[%s330 + $0xd8] sm:$0xff]
          %v522 = vld [vmem:[%s330 + $0xe0] sm:$0xff]
          %v523 = vld [vmem:[%s330 + $0xe8] sm:$0xff]
          %v524 = vld [vmem:[%s330 + $0xf0] sm:$0xff]
          %v525 = vld [vmem:[%s330 + $0xf8] sm:$0xff]
          %v526 = vld [vmem:[%s335] sm:$0x3]
          %528 = vset.pattern.permute.xlu0 0
          %529 = vperm.xlu0 %528, %v494
          %v530 = vpop.permute.xlu0 %529
          %533 = vset.pattern.permute.xlu0 0
          %534 = vperm.xlu0 %533, %v495
          %v535 = vpop.permute.xlu0 %534
          %538 = vset.pattern.permute.xlu0 0
          %539 = vperm.xlu0 %538, %v496
          %v540 = vpop.permute.xlu0 %539
          %543 = vset.pattern.permute.xlu0 0
          %544 = vperm.xlu0 %543, %v497
          %v545 = vpop.permute.xlu0 %544
          %548 = vset.pattern.permute.xlu0 0
          %549 = vperm.xlu0 %548, %v498
          %v550 = vpop.permute.xlu0 %549
          %553 = vset.pattern.permute.xlu0 0
          %554 = vperm.xlu0 %553, %v499
          %v555 = vpop.permute.xlu0 %554
          %558 = vset.pattern.permute.xlu0 0
          %559 = vperm.xlu0 %558, %v500
          %v560 = vpop.permute.xlu0 %559
          %563 = vset.pattern.permute.xlu0 0
          %564 = vperm.xlu0 %563, %v501
          %v565 = vpop.permute.xlu0 %564
          %568 = vset.pattern.permute.xlu0 0
          %569 = vperm.xlu0 %568, %v502
          %v570 = vpop.permute.xlu0 %569
          %573 = vset.pattern.permute.xlu0 0
          %574 = vperm.xlu0 %573, %v503
          %v575 = vpop.permute.xlu0 %574
          %578 = vset.pattern.permute.xlu0 0
          %579 = vperm.xlu0 %578, %v504
          %v580 = vpop.permute.xlu0 %579
          %583 = vset.pattern.permute.xlu0 0
          %584 = vperm.xlu0 %583, %v505
          %v585 = vpop.permute.xlu0 %584
          %588 = vset.pattern.permute.xlu0 0
          %589 = vperm.xlu0 %588, %v506
          %v590 = vpop.permute.xlu0 %589
          %593 = vset.pattern.permute.xlu0 0
          %594 = vperm.xlu0 %593, %v507
          %v595 = vpop.permute.xlu0 %594
          %598 = vset.pattern.permute.xlu0 0
          %599 = vperm.xlu0 %598, %v508
          %v600 = vpop.permute.xlu0 %599
          %603 = vset.pattern.permute.xlu0 0
          %604 = vperm.xlu0 %603, %v509
          %v605 = vpop.permute.xlu0 %604
          %608 = vset.pattern.permute.xlu0 0
          %609 = vperm.xlu0 %608, %v510
          %v610 = vpop.permute.xlu0 %609
          %613 = vset.pattern.permute.xlu0 0
          %614 = vperm.xlu0 %613, %v511
          %v615 = vpop.permute.xlu0 %614
          %618 = vset.pattern.permute.xlu0 0
          %619 = vperm.xlu0 %618, %v512
          %v620 = vpop.permute.xlu0 %619
          %623 = vset.pattern.permute.xlu0 0
          %624 = vperm.xlu0 %623, %v513
          %v625 = vpop.permute.xlu0 %624
          %628 = vset.pattern.permute.xlu0 0
          %629 = vperm.xlu0 %628, %v514
          %v630 = vpop.permute.xlu0 %629
          %633 = vset.pattern.permute.xlu0 0
          %634 = vperm.xlu0 %633, %v515
          %v635 = vpop.permute.xlu0 %634
          %638 = vset.pattern.permute.xlu0 0
          %639 = vperm.xlu0 %638, %v516
          %v640 = vpop.permute.xlu0 %639
          %643 = vset.pattern.permute.xlu0 0
          %644 = vperm.xlu0 %643, %v517
          %v645 = vpop.permute.xlu0 %644
          %648 = vset.pattern.permute.xlu0 0
          %649 = vperm.xlu0 %648, %v518
          %v650 = vpop.permute.xlu0 %649
          %653 = vset.pattern.permute.xlu0 0
          %654 = vperm.xlu0 %653, %v519
          %v655 = vpop.permute.xlu0 %654
          %658 = vset.pattern.permute.xlu0 0
          %659 = vperm.xlu0 %658, %v520
          %v660 = vpop.permute.xlu0 %659
          %663 = vset.pattern.permute.xlu0 0
          %664 = vperm.xlu0 %663, %v521
          %v665 = vpop.permute.xlu0 %664
          %668 = vset.pattern.permute.xlu0 0
          %669 = vperm.xlu0 %668, %v522
          %v670 = vpop.permute.xlu0 %669
          %673 = vset.pattern.permute.xlu0 0
          %674 = vperm.xlu0 %673, %v523
          %v675 = vpop.permute.xlu0 %674
          %678 = vset.pattern.permute.xlu0 0
          %679 = vperm.xlu0 %678, %v524
          %v680 = vpop.permute.xlu0 %679
          %683 = vset.pattern.permute.xlu0 0
          %684 = vperm.xlu0 %683, %v525
          %v685 = vpop.permute.xlu0 %684
          %v688 = vlaneseq
          %v689 = vshrl.u32 %v688, 7
          %v690 = vsub.s32 0, %v689
          %v691 = vrot.slane %v526, %v690
          %v692 = vlaneseq
          %v693 = vshrl.u32 %v692, 7
          %v694 = vsub.s32 1, %v693
          %v695 = vrot.slane %v526, %v694
          %v698 = vadd.f32 %v530, %v691
          %v699 = vadd.f32 %v530, %v695
          %v700 = vadd.f32 %v535, %v691
          %v701 = vadd.f32 %v535, %v695
          %v702 = vadd.f32 %v540, %v691
          %v703 = vadd.f32 %v540, %v695
          %v704 = vadd.f32 %v545, %v691
          %v705 = vadd.f32 %v545, %v695
          %v706 = vadd.f32 %v550, %v691
          %v707 = vadd.f32 %v550, %v695
          %v708 = vadd.f32 %v555, %v691
          %v709 = vadd.f32 %v555, %v695
          %v710 = vadd.f32 %v560, %v691
          %v711 = vadd.f32 %v560, %v695
          %v712 = vadd.f32 %v565, %v691
          %v713 = vadd.f32 %v565, %v695
          %v714 = vadd.f32 %v570, %v691
          %v715 = vadd.f32 %v570, %v695
          %v716 = vadd.f32 %v575, %v691
          %v717 = vadd.f32 %v575, %v695
          %v718 = vadd.f32 %v580, %v691
          %v719 = vadd.f32 %v580, %v695
          %v720 = vadd.f32 %v585, %v691
          %v721 = vadd.f32 %v585, %v695
          %v722 = vadd.f32 %v590, %v691
          %v723 = vadd.f32 %v590, %v695
          %v724 = vadd.f32 %v595, %v691
          %v725 = vadd.f32 %v595, %v695
          %v726 = vadd.f32 %v600, %v691
          %v727 = vadd.f32 %v600, %v695
          %v728 = vadd.f32 %v605, %v691
          %v729 = vadd.f32 %v605, %v695
          %v730 = vadd.f32 %v610, %v691
          %v731 = vadd.f32 %v610, %v695
          %v732 = vadd.f32 %v615, %v691
          %v733 = vadd.f32 %v615, %v695
          %v734 = vadd.f32 %v620, %v691
          %v735 = vadd.f32 %v620, %v695
          %v736 = vadd.f32 %v625, %v691
          %v737 = vadd.f32 %v625, %v695
          %v738 = vadd.f32 %v630, %v691
          %v739 = vadd.f32 %v630, %v695
          %v740 = vadd.f32 %v635, %v691
          %v741 = vadd.f32 %v635, %v695
          %v742 = vadd.f32 %v640, %v691
          %v743 = vadd.f32 %v640, %v695
          %v744 = vadd.f32 %v645, %v691
          %v745 = vadd.f32 %v645, %v695
          %v746 = vadd.f32 %v650, %v691
          %v747 = vadd.f32 %v650, %v695
          %v748 = vadd.f32 %v655, %v691
          %v749 = vadd.f32 %v655, %v695
          %v750 = vadd.f32 %v660, %v691
          %v751 = vadd.f32 %v660, %v695
          %v752 = vadd.f32 %v665, %v691
          %v753 = vadd.f32 %v665, %v695
          %v754 = vadd.f32 %v670, %v691
          %v755 = vadd.f32 %v670, %v695
          %v756 = vadd.f32 %v675, %v691
          %v757 = vadd.f32 %v675, %v695
          %v758 = vadd.f32 %v680, %v691
          %v759 = vadd.f32 %v680, %v695
          %v760 = vadd.f32 %v685, %v691
          %v761 = vadd.f32 %v685, %v695
          %vm762 = vcmp.ge.f32.partialorder %v698, 0.0
          %vm763 = vcmp.ge.f32.partialorder %v699, 0.0
          %vm764 = vcmp.ge.f32.partialorder %v700, 0.0
          %vm765 = vcmp.ge.f32.partialorder %v701, 0.0
          %vm766 = vcmp.ge.f32.partialorder %v702, 0.0
          %vm767 = vcmp.ge.f32.partialorder %v703, 0.0
          %vm768 = vcmp.ge.f32.partialorder %v704, 0.0
          %vm769 = vcmp.ge.f32.partialorder %v705, 0.0
          %vm770 = vcmp.ge.f32.partialorder %v706, 0.0
          %vm771 = vcmp.ge.f32.partialorder %v707, 0.0
          %vm772 = vcmp.ge.f32.partialorder %v708, 0.0
          %vm773 = vcmp.ge.f32.partialorder %v709, 0.0
          %vm774 = vcmp.ge.f32.partialorder %v710, 0.0
          %vm775 = vcmp.ge.f32.partialorder %v711, 0.0
          %vm776 = vcmp.ge.f32.partialorder %v712, 0.0
          %vm777 = vcmp.ge.f32.partialorder %v713, 0.0
          %vm778 = vcmp.ge.f32.partialorder %v714, 0.0
          %vm779 = vcmp.ge.f32.partialorder %v715, 0.0
          %vm780 = vcmp.ge.f32.partialorder %v716, 0.0
          %vm781 = vcmp.ge.f32.partialorder %v717, 0.0
          %vm782 = vcmp.ge.f32.partialorder %v718, 0.0
          %vm783 = vcmp.ge.f32.partialorder %v719, 0.0
          %vm784 = vcmp.ge.f32.partialorder %v720, 0.0
          %vm785 = vcmp.ge.f32.partialorder %v721, 0.0
          %vm786 = vcmp.ge.f32.partialorder %v722, 0.0
          %vm787 = vcmp.ge.f32.partialorder %v723, 0.0
          %vm788 = vcmp.ge.f32.partialorder %v724, 0.0
          %vm789 = vcmp.ge.f32.partialorder %v725, 0.0
          %vm790 = vcmp.ge.f32.partialorder %v726, 0.0
          %vm791 = vcmp.ge.f32.partialorder %v727, 0.0
          %vm792 = vcmp.ge.f32.partialorder %v728, 0.0
          %vm793 = vcmp.ge.f32.partialorder %v729, 0.0
          %vm794 = vcmp.ge.f32.partialorder %v730, 0.0
          %vm795 = vcmp.ge.f32.partialorder %v731, 0.0
          %vm796 = vcmp.ge.f32.partialorder %v732, 0.0
          %vm797 = vcmp.ge.f32.partialorder %v733, 0.0
          %vm798 = vcmp.ge.f32.partialorder %v734, 0.0
          %vm799 = vcmp.ge.f32.partialorder %v735, 0.0
          %vm800 = vcmp.ge.f32.partialorder %v736, 0.0
          %vm801 = vcmp.ge.f32.partialorder %v737, 0.0
          %vm802 = vcmp.ge.f32.partialorder %v738, 0.0
          %vm803 = vcmp.ge.f32.partialorder %v739, 0.0
          %vm804 = vcmp.ge.f32.partialorder %v740, 0.0
          %vm805 = vcmp.ge.f32.partialorder %v741, 0.0
          %vm806 = vcmp.ge.f32.partialorder %v742, 0.0
          %vm807 = vcmp.ge.f32.partialorder %v743, 0.0
          %vm808 = vcmp.ge.f32.partialorder %v744, 0.0
          %vm809 = vcmp.ge.f32.partialorder %v745, 0.0
          %vm810 = vcmp.ge.f32.partialorder %v746, 0.0
          %vm811 = vcmp.ge.f32.partialorder %v747, 0.0
          %vm812 = vcmp.ge.f32.partialorder %v748, 0.0
          %vm813 = vcmp.ge.f32.partialorder %v749, 0.0
          %vm814 = vcmp.ge.f32.partialorder %v750, 0.0
          %vm815 = vcmp.ge.f32.partialorder %v751, 0.0
          %vm816 = vcmp.ge.f32.partialorder %v752, 0.0
          %vm817 = vcmp.ge.f32.partialorder %v753, 0.0
          %vm818 = vcmp.ge.f32.partialorder %v754, 0.0
          %vm819 = vcmp.ge.f32.partialorder %v755, 0.0
          %vm820 = vcmp.ge.f32.partialorder %v756, 0.0
          %vm821 = vcmp.ge.f32.partialorder %v757, 0.0
          %vm822 = vcmp.ge.f32.partialorder %v758, 0.0
          %vm823 = vcmp.ge.f32.partialorder %v759, 0.0
          %vm824 = vcmp.ge.f32.partialorder %v760, 0.0
          %vm825 = vcmp.ge.f32.partialorder %v761, 0.0
          %v826 = vmul.f32 %v698, 0.2
          %v827 = vmul.f32 %v699, 0.2
          %v828 = vmul.f32 %v700, 0.2
          %v829 = vmul.f32 %v701, 0.2
          %v830 = vmul.f32 %v702, 0.2
          %v831 = vmul.f32 %v703, 0.2
          %v832 = vmul.f32 %v704, 0.2
          %v833 = vmul.f32 %v705, 0.2
          %v834 = vmul.f32 %v706, 0.2
          %v835 = vmul.f32 %v707, 0.2
          %v836 = vmul.f32 %v708, 0.2
          %v837 = vmul.f32 %v709, 0.2
          %v838 = vmul.f32 %v710, 0.2
          %v839 = vmul.f32 %v711, 0.2
          %v840 = vmul.f32 %v712, 0.2
          %v841 = vmul.f32 %v713, 0.2
          %v842 = vmul.f32 %v714, 0.2
          %v843 = vmul.f32 %v715, 0.2
          %v844 = vmul.f32 %v716, 0.2
          %v845 = vmul.f32 %v717, 0.2
          %v846 = vmul.f32 %v718, 0.2
          %v847 = vmul.f32 %v719, 0.2
          %v848 = vmul.f32 %v720, 0.2
          %v849 = vmul.f32 %v721, 0.2
          %v850 = vmul.f32 %v722, 0.2
          %v851 = vmul.f32 %v723, 0.2
          %v852 = vmul.f32 %v724, 0.2
          %v853 = vmul.f32 %v725, 0.2
          %v854 = vmul.f32 %v726, 0.2
          %v855 = vmul.f32 %v727, 0.2
          %v856 = vmul.f32 %v728, 0.2
          %v857 = vmul.f32 %v729, 0.2
          %v858 = vmul.f32 %v730, 0.2
          %v859 = vmul.f32 %v731, 0.2
          %v860 = vmul.f32 %v732, 0.2
          %v861 = vmul.f32 %v733, 0.2
          %v862 = vmul.f32 %v734, 0.2
          %v863 = vmul.f32 %v735, 0.2
          %v864 = vmul.f32 %v736, 0.2
          %v865 = vmul.f32 %v737, 0.2
          %v866 = vmul.f32 %v738, 0.2
          %v867 = vmul.f32 %v739, 0.2
          %v868 = vmul.f32 %v740, 0.2
          %v869 = vmul.f32 %v741, 0.2
          %v870 = vmul.f32 %v742, 0.2
          %v871 = vmul.f32 %v743, 0.2
          %v872 = vmul.f32 %v744, 0.2
          %v873 = vmul.f32 %v745, 0.2
          %v874 = vmul.f32 %v746, 0.2
          %v875 = vmul.f32 %v747, 0.2
          %v876 = vmul.f32 %v748, 0.2
          %v877 = vmul.f32 %v749, 0.2
          %v878 = vmul.f32 %v750, 0.2
          %v879 = vmul.f32 %v751, 0.2
          %v880 = vmul.f32 %v752, 0.2
          %v881 = vmul.f32 %v753, 0.2
          %v882 = vmul.f32 %v754, 0.2
          %v883 = vmul.f32 %v755, 0.2
          %v884 = vmul.f32 %v756, 0.2
          %v885 = vmul.f32 %v757, 0.2
          %v886 = vmul.f32 %v758, 0.2
          %v887 = vmul.f32 %v759, 0.2
          %v888 = vmul.f32 %v760, 0.2
          %v889 = vmul.f32 %v761, 0.2
          %v890 = vsel %vm762, %v698, %v826
          %v891 = vsel %vm763, %v699, %v827
          %v892 = vsel %vm764, %v700, %v828
          %v893 = vsel %vm765, %v701, %v829
          %v894 = vsel %vm766, %v702, %v830
          %v895 = vsel %vm767, %v703, %v831
          %v896 = vsel %vm768, %v704, %v832
          %v897 = vsel %vm769, %v705, %v833
          %v898 = vsel %vm770, %v706, %v834
          %v899 = vsel %vm771, %v707, %v835
          %v900 = vsel %vm772, %v708, %v836
          %v901 = vsel %vm773, %v709, %v837
          %v902 = vsel %vm774, %v710, %v838
          %v903 = vsel %vm775, %v711, %v839
          %v904 = vsel %vm776, %v712, %v840
          %v905 = vsel %vm777, %v713, %v841
          %v906 = vsel %vm778, %v714, %v842
          %v907 = vsel %vm779, %v715, %v843
          %v908 = vsel %vm780, %v716, %v844
          %v909 = vsel %vm781, %v717, %v845
          %v910 = vsel %vm782, %v718, %v846
          %v911 = vsel %vm783, %v719, %v847
          %v912 = vsel %vm784, %v720, %v848
          %v913 = vsel %vm785, %v721, %v849
          %v914 = vsel %vm786, %v722, %v850
          %v915 = vsel %vm787, %v723, %v851
          %v916 = vsel %vm788, %v724, %v852
          %v917 = vsel %vm789, %v725, %v853
          %v918 = vsel %vm790, %v726, %v854
          %v919 = vsel %vm791, %v727, %v855
          %v920 = vsel %vm792, %v728, %v856
          %v921 = vsel %vm793, %v729, %v857
          %v922 = vsel %vm794, %v730, %v858
          %v923 = vsel %vm795, %v731, %v859
          %v924 = vsel %vm796, %v732, %v860
          %v925 = vsel %vm797, %v733, %v861
          %v926 = vsel %vm798, %v734, %v862
          %v927 = vsel %vm799, %v735, %v863
          %v928 = vsel %vm800, %v736, %v864
          %v929 = vsel %vm801, %v737, %v865
          %v930 = vsel %vm802, %v738, %v866
          %v931 = vsel %vm803, %v739, %v867
          %v932 = vsel %vm804, %v740, %v868
          %v933 = vsel %vm805, %v741, %v869
          %v934 = vsel %vm806, %v742, %v870
          %v935 = vsel %vm807, %v743, %v871
          %v936 = vsel %vm808, %v744, %v872
          %v937 = vsel %vm809, %v745, %v873
          %v938 = vsel %vm810, %v746, %v874
          %v939 = vsel %vm811, %v747, %v875
          %v940 = vsel %vm812, %v748, %v876
          %v941 = vsel %vm813, %v749, %v877
          %v942 = vsel %vm814, %v750, %v878
          %v943 = vsel %vm815, %v751, %v879
          %v944 = vsel %vm816, %v752, %v880
          %v945 = vsel %vm817, %v753, %v881
          %v946 = vsel %vm818, %v754, %v882
          %v947 = vsel %vm819, %v755, %v883
          %v948 = vsel %vm820, %v756, %v884
          %v949 = vsel %vm821, %v757, %v885
          %v950 = vsel %vm822, %v758, %v886
          %v951 = vsel %vm823, %v759, %v887
          %v952 = vsel %vm824, %v760, %v888
          %v953 = vsel %vm825, %v761, %v889
          %v954 = vld [vmem:[%s290] sm:$0xff]
          %v955 = vld [vmem:[%s290 + $0x8] sm:$0xff]
          %v956 = vld [vmem:[%s290 + $0x10] sm:$0xff]
          %v957 = vld [vmem:[%s290 + $0x18] sm:$0xff]
          %v958 = vld [vmem:[%s290 + $0x20] sm:$0xff]
          %v959 = vld [vmem:[%s290 + $0x28] sm:$0xff]
          %v960 = vld [vmem:[%s290 + $0x30] sm:$0xff]
          %v961 = vld [vmem:[%s290 + $0x38] sm:$0xff]
          %v962 = vld [vmem:[%s290 + $0x40] sm:$0xff]
          %v963 = vld [vmem:[%s290 + $0x48] sm:$0xff]
          %v964 = vld [vmem:[%s290 + $0x50] sm:$0xff]
          %v965 = vld [vmem:[%s290 + $0x58] sm:$0xff]
          %v966 = vld [vmem:[%s290 + $0x60] sm:$0xff]
          %v967 = vld [vmem:[%s290 + $0x68] sm:$0xff]
          %v968 = vld [vmem:[%s290 + $0x70] sm:$0xff]
          %v969 = vld [vmem:[%s290 + $0x78] sm:$0xff]
          %v970 = vunpack.c.0.s8 %v954
          %v971 = vunpack.c.0.s8 %v955
          %v972 = vunpack.c.1.s8 %v954
          %v973 = vunpack.c.1.s8 %v955
          %v974 = vunpack.c.2.s8 %v954
          %v975 = vunpack.c.2.s8 %v955
          %v976 = vunpack.c.3.s8 %v954
          %v977 = vunpack.c.3.s8 %v955
          %v978 = vunpack.c.0.s8 %v956
          %v979 = vunpack.c.0.s8 %v957
          %v980 = vunpack.c.1.s8 %v956
          %v981 = vunpack.c.1.s8 %v957
          %v982 = vunpack.c.2.s8 %v956
          %v983 = vunpack.c.2.s8 %v957
          %v984 = vunpack.c.3.s8 %v956
          %v985 = vunpack.c.3.s8 %v957
          %v986 = vunpack.c.0.s8 %v958
          %v987 = vunpack.c.0.s8 %v959
          %v988 = vunpack.c.1.s8 %v958
          %v989 = vunpack.c.1.s8 %v959
          %v990 = vunpack.c.2.s8 %v958
          %v991 = vunpack.c.2.s8 %v959
          %v992 = vunpack.c.3.s8 %v958
          %v993 = vunpack.c.3.s8 %v959
          %v994 = vunpack.c.0.s8 %v960
          %v995 = vunpack.c.0.s8 %v961
          %v996 = vunpack.c.1.s8 %v960
          %v997 = vunpack.c.1.s8 %v961
          %v998 = vunpack.c.2.s8 %v960
          %v999 = vunpack.c.2.s8 %v961
          %v1000 = vunpack.c.3.s8 %v960
          %v1001 = vunpack.c.3.s8 %v961
          %v1002 = vunpack.c.0.s8 %v962
          %v1003 = vunpack.c.0.s8 %v963
          %v1004 = vunpack.c.1.s8 %v962
          %v1005 = vunpack.c.1.s8 %v963
          %v1006 = vunpack.c.2.s8 %v962
          %v1007 = vunpack.c.2.s8 %v963
          %v1008 = vunpack.c.3.s8 %v962
          %v1009 = vunpack.c.3.s8 %v963
          %v1010 = vunpack.c.0.s8 %v964
          %v1011 = vunpack.c.0.s8 %v965
          %v1012 = vunpack.c.1.s8 %v964
          %v1013 = vunpack.c.1.s8 %v965
          %v1014 = vunpack.c.2.s8 %v964
          %v1015 = vunpack.c.2.s8 %v965
          %v1016 = vunpack.c.3.s8 %v964
          %v1017 = vunpack.c.3.s8 %v965
          %v1018 = vunpack.c.0.s8 %v966
          %v1019 = vunpack.c.0.s8 %v967
          %v1020 = vunpack.c.1.s8 %v966
          %v1021 = vunpack.c.1.s8 %v967
          %v1022 = vunpack.c.2.s8 %v966
          %v1023 = vunpack.c.2.s8 %v967
          %v1024 = vunpack.c.3.s8 %v966
          %v1025 = vunpack.c.3.s8 %v967
          %v1026 = vunpack.c.0.s8 %v968
          %v1027 = vunpack.c.0.s8 %v969
          %v1028 = vunpack.c.1.s8 %v968
          %v1029 = vunpack.c.1.s8 %v969
          %v1030 = vunpack.c.2.s8 %v968
          %v1031 = vunpack.c.2.s8 %v969
          %v1032 = vunpack.c.3.s8 %v968
          %v1033 = vunpack.c.3.s8 %v969
          %v1034 = vcvt.s32.f32 %v970
          %v1035 = vcvt.s32.f32 %v971
          %v1036 = vcvt.s32.f32 %v972
          %v1037 = vcvt.s32.f32 %v973
          %v1038 = vcvt.s32.f32 %v974
          %v1039 = vcvt.s32.f32 %v975
          %v1040 = vcvt.s32.f32 %v976
          %v1041 = vcvt.s32.f32 %v977
          %v1042 = vcvt.s32.f32 %v978
          %v1043 = vcvt.s32.f32 %v979
          %v1044 = vcvt.s32.f32 %v980
          %v1045 = vcvt.s32.f32 %v981
          %v1046 = vcvt.s32.f32 %v982
          %v1047 = vcvt.s32.f32 %v983
          %v1048 = vcvt.s32.f32 %v984
          %v1049 = vcvt.s32.f32 %v985
          %v1050 = vcvt.s32.f32 %v986
          %v1051 = vcvt.s32.f32 %v987
          %v1052 = vcvt.s32.f32 %v988
          %v1053 = vcvt.s32.f32 %v989
          %v1054 = vcvt.s32.f32 %v990
          %v1055 = vcvt.s32.f32 %v991
          %v1056 = vcvt.s32.f32 %v992
          %v1057 = vcvt.s32.f32 %v993
          %v1058 = vcvt.s32.f32 %v994
          %v1059 = vcvt.s32.f32 %v995
          %v1060 = vcvt.s32.f32 %v996
          %v1061 = vcvt.s32.f32 %v997
          %v1062 = vcvt.s32.f32 %v998
          %v1063 = vcvt.s32.f32 %v999
          %v1064 = vcvt.s32.f32 %v1000
          %v1065 = vcvt.s32.f32 %v1001
          %v1066 = vcvt.s32.f32 %v1002
          %v1067 = vcvt.s32.f32 %v1003
          %v1068 = vcvt.s32.f32 %v1004
          %v1069 = vcvt.s32.f32 %v1005
          %v1070 = vcvt.s32.f32 %v1006
          %v1071 = vcvt.s32.f32 %v1007
          %v1072 = vcvt.s32.f32 %v1008
          %v1073 = vcvt.s32.f32 %v1009
          %v1074 = vcvt.s32.f32 %v1010
          %v1075 = vcvt.s32.f32 %v1011
          %v1076 = vcvt.s32.f32 %v1012
          %v1077 = vcvt.s32.f32 %v1013
          %v1078 = vcvt.s32.f32 %v1014
          %v1079 = vcvt.s32.f32 %v1015
          %v1080 = vcvt.s32.f32 %v1016
          %v1081 = vcvt.s32.f32 %v1017
          %v1082 = vcvt.s32.f32 %v1018
          %v1083 = vcvt.s32.f32 %v1019
          %v1084 = vcvt.s32.f32 %v1020
          %v1085 = vcvt.s32.f32 %v1021
          %v1086 = vcvt.s32.f32 %v1022
          %v1087 = vcvt.s32.f32 %v1023
          %v1088 = vcvt.s32.f32 %v1024
          %v1089 = vcvt.s32.f32 %v1025
          %v1090 = vcvt.s32.f32 %v1026
          %v1091 = vcvt.s32.f32 %v1027
          %v1092 = vcvt.s32.f32 %v1028
          %v1093 = vcvt.s32.f32 %v1029
          %v1094 = vcvt.s32.f32 %v1030
          %v1095 = vcvt.s32.f32 %v1031
          %v1096 = vcvt.s32.f32 %v1032
          %v1097 = vcvt.s32.f32 %v1033
          %vm1098 = vcmp.gt.f32.partialorder %v1034, 0.0
          %vm1099 = vcmp.gt.f32.partialorder %v1035, 0.0
          %vm1100 = vcmp.gt.f32.partialorder %v1036, 0.0
          %vm1101 = vcmp.gt.f32.partialorder %v1037, 0.0
          %vm1102 = vcmp.gt.f32.partialorder %v1038, 0.0
          %vm1103 = vcmp.gt.f32.partialorder %v1039, 0.0
          %vm1104 = vcmp.gt.f32.partialorder %v1040, 0.0
          %vm1105 = vcmp.gt.f32.partialorder %v1041, 0.0
          %vm1106 = vcmp.gt.f32.partialorder %v1042, 0.0
          %vm1107 = vcmp.gt.f32.partialorder %v1043, 0.0
          %vm1108 = vcmp.gt.f32.partialorder %v1044, 0.0
          %vm1109 = vcmp.gt.f32.partialorder %v1045, 0.0
          %vm1110 = vcmp.gt.f32.partialorder %v1046, 0.0
          %vm1111 = vcmp.gt.f32.partialorder %v1047, 0.0
          %vm1112 = vcmp.gt.f32.partialorder %v1048, 0.0
          %vm1113 = vcmp.gt.f32.partialorder %v1049, 0.0
          %vm1114 = vcmp.gt.f32.partialorder %v1050, 0.0
          %vm1115 = vcmp.gt.f32.partialorder %v1051, 0.0
          %vm1116 = vcmp.gt.f32.partialorder %v1052, 0.0
          %vm1117 = vcmp.gt.f32.partialorder %v1053, 0.0
          %vm1118 = vcmp.gt.f32.partialorder %v1054, 0.0
          %vm1119 = vcmp.gt.f32.partialorder %v1055, 0.0
          %vm1120 = vcmp.gt.f32.partialorder %v1056, 0.0
          %vm1121 = vcmp.gt.f32.partialorder %v1057, 0.0
          %vm1122 = vcmp.gt.f32.partialorder %v1058, 0.0
          %vm1123 = vcmp.gt.f32.partialorder %v1059, 0.0
          %vm1124 = vcmp.gt.f32.partialorder %v1060, 0.0
          %vm1125 = vcmp.gt.f32.partialorder %v1061, 0.0
          %vm1126 = vcmp.gt.f32.partialorder %v1062, 0.0
          %vm1127 = vcmp.gt.f32.partialorder %v1063, 0.0
          %vm1128 = vcmp.gt.f32.partialorder %v1064, 0.0
          %vm1129 = vcmp.gt.f32.partialorder %v1065, 0.0
          %vm1130 = vcmp.gt.f32.partialorder %v1066, 0.0
          %vm1131 = vcmp.gt.f32.partialorder %v1067, 0.0
          %vm1132 = vcmp.gt.f32.partialorder %v1068, 0.0
          %vm1133 = vcmp.gt.f32.partialorder %v1069, 0.0
          %vm1134 = vcmp.gt.f32.partialorder %v1070, 0.0
          %vm1135 = vcmp.gt.f32.partialorder %v1071, 0.0
          %vm1136 = vcmp.gt.f32.partialorder %v1072, 0.0
          %vm1137 = vcmp.gt.f32.partialorder %v1073, 0.0
          %vm1138 = vcmp.gt.f32.partialorder %v1074, 0.0
          %vm1139 = vcmp.gt.f32.partialorder %v1075, 0.0
          %vm1140 = vcmp.gt.f32.partialorder %v1076, 0.0
          %vm1141 = vcmp.gt.f32.partialorder %v1077, 0.0
          %vm1142 = vcmp.gt.f32.partialorder %v1078, 0.0
          %vm1143 = vcmp.gt.f32.partialorder %v1079, 0.0
          %vm1144 = vcmp.gt.f32.partialorder %v1080, 0.0
          %vm1145 = vcmp.gt.f32.partialorder %v1081, 0.0
          %vm1146 = vcmp.gt.f32.partialorder %v1082, 0.0
          %vm1147 = vcmp.gt.f32.partialorder %v1083, 0.0
          %vm1148 = vcmp.gt.f32.partialorder %v1084, 0.0
          %vm1149 = vcmp.gt.f32.partialorder %v1085, 0.0
          %vm1150 = vcmp.gt.f32.partialorder %v1086, 0.0
          %vm1151 = vcmp.gt.f32.partialorder %v1087, 0.0
          %vm1152 = vcmp.gt.f32.partialorder %v1088, 0.0
          %vm1153 = vcmp.gt.f32.partialorder %v1089, 0.0
          %vm1154 = vcmp.gt.f32.partialorder %v1090, 0.0
          %vm1155 = vcmp.gt.f32.partialorder %v1091, 0.0
          %vm1156 = vcmp.gt.f32.partialorder %v1092, 0.0
          %vm1157 = vcmp.gt.f32.partialorder %v1093, 0.0
          %vm1158 = vcmp.gt.f32.partialorder %v1094, 0.0
          %vm1159 = vcmp.gt.f32.partialorder %v1095, 0.0
          %vm1160 = vcmp.gt.f32.partialorder %v1096, 0.0
          %vm1161 = vcmp.gt.f32.partialorder %v1097, 0.0
          %v1162 = vsel %vm1098, %v890, -1e+30
          %v1163 = vsel %vm1099, %v891, -1e+30
          %v1164 = vsel %vm1100, %v892, -1e+30
          %v1165 = vsel %vm1101, %v893, -1e+30
          %v1166 = vsel %vm1102, %v894, -1e+30
          %v1167 = vsel %vm1103, %v895, -1e+30
          %v1168 = vsel %vm1104, %v896, -1e+30
          %v1169 = vsel %vm1105, %v897, -1e+30
          %v1170 = vsel %vm1106, %v898, -1e+30
          %v1171 = vsel %vm1107, %v899, -1e+30
          %v1172 = vsel %vm1108, %v900, -1e+30
          %v1173 = vsel %vm1109, %v901, -1e+30
          %v1174 = vsel %vm1110, %v902, -1e+30
          %v1175 = vsel %vm1111, %v903, -1e+30
          %v1176 = vsel %vm1112, %v904, -1e+30
          %v1177 = vsel %vm1113, %v905, -1e+30
          %v1178 = vsel %vm1114, %v906, -1e+30
          %v1179 = vsel %vm1115, %v907, -1e+30
          %v1180 = vsel %vm1116, %v908, -1e+30
          %v1181 = vsel %vm1117, %v909, -1e+30
          %v1182 = vsel %vm1118, %v910, -1e+30
          %v1183 = vsel %vm1119, %v911, -1e+30
          %v1184 = vsel %vm1120, %v912, -1e+30
          %v1185 = vsel %vm1121, %v913, -1e+30
          %v1186 = vsel %vm1122, %v914, -1e+30
          %v1187 = vsel %vm1123, %v915, -1e+30
          %v1188 = vsel %vm1124, %v916, -1e+30
          %v1189 = vsel %vm1125, %v917, -1e+30
          %v1190 = vsel %vm1126, %v918, -1e+30
          %v1191 = vsel %vm1127, %v919, -1e+30
          %v1192 = vsel %vm1128, %v920, -1e+30
          %v1193 = vsel %vm1129, %v921, -1e+30
          %v1194 = vsel %vm1130, %v922, -1e+30
          %v1195 = vsel %vm1131, %v923, -1e+30
          %v1196 = vsel %vm1132, %v924, -1e+30
          %v1197 = vsel %vm1133, %v925, -1e+30
          %v1198 = vsel %vm1134, %v926, -1e+30
          %v1199 = vsel %vm1135, %v927, -1e+30
          %v1200 = vsel %vm1136, %v928, -1e+30
          %v1201 = vsel %vm1137, %v929, -1e+30
          %v1202 = vsel %vm1138, %v930, -1e+30
          %v1203 = vsel %vm1139, %v931, -1e+30
          %v1204 = vsel %vm1140, %v932, -1e+30
          %v1205 = vsel %vm1141, %v933, -1e+30
          %v1206 = vsel %vm1142, %v934, -1e+30
          %v1207 = vsel %vm1143, %v935, -1e+30
          %v1208 = vsel %vm1144, %v936, -1e+30
          %v1209 = vsel %vm1145, %v937, -1e+30
          %v1210 = vsel %vm1146, %v938, -1e+30
          %v1211 = vsel %vm1147, %v939, -1e+30
          %v1212 = vsel %vm1148, %v940, -1e+30
          %v1213 = vsel %vm1149, %v941, -1e+30
          %v1214 = vsel %vm1150, %v942, -1e+30
          %v1215 = vsel %vm1151, %v943, -1e+30
          %v1216 = vsel %vm1152, %v944, -1e+30
          %v1217 = vsel %vm1153, %v945, -1e+30
          %v1218 = vsel %vm1154, %v946, -1e+30
          %v1219 = vsel %vm1155, %v947, -1e+30
          %v1220 = vsel %vm1156, %v948, -1e+30
          %v1221 = vsel %vm1157, %v949, -1e+30
          %v1222 = vsel %vm1158, %v950, -1e+30
          %v1223 = vsel %vm1159, %v951, -1e+30
          %v1224 = vsel %vm1160, %v952, -1e+30
          %v1225 = vsel %vm1161, %v953, -1e+30
          %v1226 = vld [vmem:[#allocation2] sm:$0xff]
          %v1227 = vld [vmem:[#allocation2 + $0x8] sm:$0xff]
          %v1228 = vld [vmem:[#allocation2 + $0x10] sm:$0xff]
          %v1229 = vld [vmem:[#allocation2 + $0x18] sm:$0xff]
          %v1230 = vld [vmem:[#allocation2 + $0x20] sm:$0xff]
          %v1231 = vld [vmem:[#allocation2 + $0x28] sm:$0xff]
          %v1232 = vld [vmem:[#allocation2 + $0x30] sm:$0xff]
          %v1233 = vld [vmem:[#allocation2 + $0x38] sm:$0xff]
          %v1234 = vld [vmem:[#allocation2 + $0x40] sm:$0xff]
          %v1235 = vld [vmem:[#allocation2 + $0x48] sm:$0xff]
          %v1236 = vld [vmem:[#allocation2 + $0x50] sm:$0xff]
          %v1237 = vld [vmem:[#allocation2 + $0x58] sm:$0xff]
          %v1238 = vld [vmem:[#allocation2 + $0x60] sm:$0xff]
          %v1239 = vld [vmem:[#allocation2 + $0x68] sm:$0xff]
          %v1240 = vld [vmem:[#allocation2 + $0x70] sm:$0xff]
          %v1241 = vld [vmem:[#allocation2 + $0x78] sm:$0xff]
          %v1242 = vld [vmem:[#allocation2 + $0x80] sm:$0xff]
          %v1243 = vld [vmem:[#allocation2 + $0x88] sm:$0xff]
          %v1244 = vld [vmem:[#allocation2 + $0x90] sm:$0xff]
          %v1245 = vld [vmem:[#allocation2 + $0x98] sm:$0xff]
          %v1246 = vld [vmem:[#allocation2 + $0xa0] sm:$0xff]
          %v1247 = vld [vmem:[#allocation2 + $0xa8] sm:$0xff]
          %v1248 = vld [vmem:[#allocation2 + $0xb0] sm:$0xff]
          %v1249 = vld [vmem:[#allocation2 + $0xb8] sm:$0xff]
          %v1250 = vld [vmem:[#allocation2 + $0xc0] sm:$0xff]
          %v1251 = vld [vmem:[#allocation2 + $0xc8] sm:$0xff]
          %v1252 = vld [vmem:[#allocation2 + $0xd0] sm:$0xff]
          %v1253 = vld [vmem:[#allocation2 + $0xd8] sm:$0xff]
          %v1254 = vld [vmem:[#allocation2 + $0xe0] sm:$0xff]
          %v1255 = vld [vmem:[#allocation2 + $0xe8] sm:$0xff]
          %v1256 = vld [vmem:[#allocation2 + $0xf0] sm:$0xff]
          %v1257 = vld [vmem:[#allocation2 + $0xf8] sm:$0xff]
          %v1258 = vmax.f32 %v1162, %v1163
          %1259 = vmax.xlane.f32.xlu0 %v1258
          %v1260 = vpop.xlane.xlu0 %1259
          %v1261 = vmax.f32 %v1164, %v1165
          %1262 = vmax.xlane.f32.xlu0 %v1261
          %v1263 = vpop.xlane.xlu0 %1262
          %v1264 = vmax.f32 %v1166, %v1167
          %1265 = vmax.xlane.f32.xlu0 %v1264
          %v1266 = vpop.xlane.xlu0 %1265
          %v1267 = vmax.f32 %v1168, %v1169
          %1268 = vmax.xlane.f32.xlu0 %v1267
          %v1269 = vpop.xlane.xlu0 %1268
          %v1270 = vmax.f32 %v1170, %v1171
          %1271 = vmax.xlane.f32.xlu0 %v1270
          %v1272 = vpop.xlane.xlu0 %1271
          %v1273 = vmax.f32 %v1172, %v1173
          %1274 = vmax.xlane.f32.xlu0 %v1273
          %v1275 = vpop.xlane.xlu0 %1274
          %v1276 = vmax.f32 %v1174, %v1175
          %1277 = vmax.xlane.f32.xlu0 %v1276
          %v1278 = vpop.xlane.xlu0 %1277
          %v1279 = vmax.f32 %v1176, %v1177
          %1280 = vmax.xlane.f32.xlu0 %v1279
          %v1281 = vpop.xlane.xlu0 %1280
          %v1282 = vmax.f32 %v1178, %v1179
          %1283 = vmax.xlane.f32.xlu0 %v1282
          %v1284 = vpop.xlane.xlu0 %1283
          %v1285 = vmax.f32 %v1180, %v1181
          %1286 = vmax.xlane.f32.xlu0 %v1285
          %v1287 = vpop.xlane.xlu0 %1286
          %v1288 = vmax.f32 %v1182, %v1183
          %1289 = vmax.xlane.f32.xlu0 %v1288
          %v1290 = vpop.xlane.xlu0 %1289
          %v1291 = vmax.f32 %v1184, %v1185
          %1292 = vmax.xlane.f32.xlu0 %v1291
          %v1293 = vpop.xlane.xlu0 %1292
          %v1294 = vmax.f32 %v1186, %v1187
          %1295 = vmax.xlane.f32.xlu0 %v1294
          %v1296 = vpop.xlane.xlu0 %1295
          %v1297 = vmax.f32 %v1188, %v1189
          %1298 = vmax.xlane.f32.xlu0 %v1297
          %v1299 = vpop.xlane.xlu0 %1298
          %v1300 = vmax.f32 %v1190, %v1191
          %1301 = vmax.xlane.f32.xlu0 %v1300
          %v1302 = vpop.xlane.xlu0 %1301
          %v1303 = vmax.f32 %v1192, %v1193
          %1304 = vmax.xlane.f32.xlu0 %v1303
          %v1305 = vpop.xlane.xlu0 %1304
          %v1306 = vmax.f32 %v1194, %v1195
          %1307 = vmax.xlane.f32.xlu0 %v1306
          %v1308 = vpop.xlane.xlu0 %1307
          %v1309 = vmax.f32 %v1196, %v1197
          %1310 = vmax.xlane.f32.xlu0 %v1309
          %v1311 = vpop.xlane.xlu0 %1310
          %v1312 = vmax.f32 %v1198, %v1199
          %1313 = vmax.xlane.f32.xlu0 %v1312
          %v1314 = vpop.xlane.xlu0 %1313
          %v1315 = vmax.f32 %v1200, %v1201
          %1316 = vmax.xlane.f32.xlu0 %v1315
          %v1317 = vpop.xlane.xlu0 %1316
          %v1318 = vmax.f32 %v1202, %v1203
          %1319 = vmax.xlane.f32.xlu0 %v1318
          %v1320 = vpop.xlane.xlu0 %1319
          %v1321 = vmax.f32 %v1204, %v1205
          %1322 = vmax.xlane.f32.xlu0 %v1321
          %v1323 = vpop.xlane.xlu0 %1322
          %v1324 = vmax.f32 %v1206, %v1207
          %1325 = vmax.xlane.f32.xlu0 %v1324
          %v1326 = vpop.xlane.xlu0 %1325
          %v1327 = vmax.f32 %v1208, %v1209
          %1328 = vmax.xlane.f32.xlu0 %v1327
          %v1329 = vpop.xlane.xlu0 %1328
          %v1330 = vmax.f32 %v1210, %v1211
          %1331 = vmax.xlane.f32.xlu0 %v1330
          %v1332 = vpop.xlane.xlu0 %1331
          %v1333 = vmax.f32 %v1212, %v1213
          %1334 = vmax.xlane.f32.xlu0 %v1333
          %v1335 = vpop.xlane.xlu0 %1334
          %v1336 = vmax.f32 %v1214, %v1215
          %1337 = vmax.xlane.f32.xlu0 %v1336
          %v1338 = vpop.xlane.xlu0 %1337
          %v1339 = vmax.f32 %v1216, %v1217
          %1340 = vmax.xlane.f32.xlu0 %v1339
          %v1341 = vpop.xlane.xlu0 %1340
          %v1342 = vmax.f32 %v1218, %v1219
          %1343 = vmax.xlane.f32.xlu0 %v1342
          %v1344 = vpop.xlane.xlu0 %1343
          %v1345 = vmax.f32 %v1220, %v1221
          %1346 = vmax.xlane.f32.xlu0 %v1345
          %v1347 = vpop.xlane.xlu0 %1346
          %v1348 = vmax.f32 %v1222, %v1223
          %1349 = vmax.xlane.f32.xlu0 %v1348
          %v1350 = vpop.xlane.xlu0 %1349
          %v1351 = vmax.f32 %v1224, %v1225
          %1352 = vmax.xlane.f32.xlu0 %v1351
          %v1353 = vpop.xlane.xlu0 %1352
          %v1354 = vmax.f32 %v1226, %v1260
          %v1355 = vmax.f32 %v1227, %v1263
          %v1356 = vmax.f32 %v1228, %v1266
          %v1357 = vmax.f32 %v1229, %v1269
          %v1358 = vmax.f32 %v1230, %v1272
          %v1359 = vmax.f32 %v1231, %v1275
          %v1360 = vmax.f32 %v1232, %v1278
          %v1361 = vmax.f32 %v1233, %v1281
          %v1362 = vmax.f32 %v1234, %v1284
          %v1363 = vmax.f32 %v1235, %v1287
          %v1364 = vmax.f32 %v1236, %v1290
          %v1365 = vmax.f32 %v1237, %v1293
          %v1366 = vmax.f32 %v1238, %v1296
          %v1367 = vmax.f32 %v1239, %v1299
          %v1368 = vmax.f32 %v1240, %v1302
          %v1369 = vmax.f32 %v1241, %v1305
          %v1370 = vmax.f32 %v1242, %v1308
          %v1371 = vmax.f32 %v1243, %v1311
          %v1372 = vmax.f32 %v1244, %v1314
          %v1373 = vmax.f32 %v1245, %v1317
          %v1374 = vmax.f32 %v1246, %v1320
          %v1375 = vmax.f32 %v1247, %v1323
          %v1376 = vmax.f32 %v1248, %v1326
          %v1377 = vmax.f32 %v1249, %v1329
          %v1378 = vmax.f32 %v1250, %v1332
          %v1379 = vmax.f32 %v1251, %v1335
          %v1380 = vmax.f32 %v1252, %v1338
          %v1381 = vmax.f32 %v1253, %v1341
          %v1382 = vmax.f32 %v1254, %v1344
          %v1383 = vmax.f32 %v1255, %v1347
          %v1384 = vmax.f32 %v1256, %v1350
          %v1385 = vmax.f32 %v1257, %v1353
          %v1386 = vsub.f32 %v1226, %v1354
          %v1387 = vsub.f32 %v1227, %v1355
          %v1388 = vsub.f32 %v1228, %v1356
          %v1389 = vsub.f32 %v1229, %v1357
          %v1390 = vsub.f32 %v1230, %v1358
          %v1391 = vsub.f32 %v1231, %v1359
          %v1392 = vsub.f32 %v1232, %v1360
          %v1393 = vsub.f32 %v1233, %v1361
          %v1394 = vsub.f32 %v1234, %v1362
          %v1395 = vsub.f32 %v1235, %v1363
          %v1396 = vsub.f32 %v1236, %v1364
          %v1397 = vsub.f32 %v1237, %v1365
          %v1398 = vsub.f32 %v1238, %v1366
          %v1399 = vsub.f32 %v1239, %v1367
          %v1400 = vsub.f32 %v1240, %v1368
          %v1401 = vsub.f32 %v1241, %v1369
          %v1402 = vsub.f32 %v1242, %v1370
          %v1403 = vsub.f32 %v1243, %v1371
          %v1404 = vsub.f32 %v1244, %v1372
          %v1405 = vsub.f32 %v1245, %v1373
          %v1406 = vsub.f32 %v1246, %v1374
          %v1407 = vsub.f32 %v1247, %v1375
          %v1408 = vsub.f32 %v1248, %v1376
          %v1409 = vsub.f32 %v1249, %v1377
          %v1410 = vsub.f32 %v1250, %v1378
          %v1411 = vsub.f32 %v1251, %v1379
          %v1412 = vsub.f32 %v1252, %v1380
          %v1413 = vsub.f32 %v1253, %v1381
          %v1414 = vsub.f32 %v1254, %v1382
          %v1415 = vsub.f32 %v1255, %v1383
          %v1416 = vsub.f32 %v1256, %v1384
          %v1417 = vsub.f32 %v1257, %v1385
          %v1418 = vmul.f32 %v1386, 1.442695
          %v1419 = vpow.pop %v1418
          %v1420 = vmul.f32 %v1387, 1.442695
          %v1421 = vpow.pop %v1420
          %v1422 = vmul.f32 %v1388, 1.442695
          %v1423 = vpow.pop %v1422
          %v1424 = vmul.f32 %v1389, 1.442695
          %v1425 = vpow.pop %v1424
          %v1426 = vmul.f32 %v1390, 1.442695
          %v1427 = vpow.pop %v1426
          %v1428 = vmul.f32 %v1391, 1.442695
          %v1429 = vpow.pop %v1428
          %v1430 = vmul.f32 %v1392, 1.442695
          %v1431 = vpow.pop %v1430
          %v1432 = vmul.f32 %v1393, 1.442695
          %v1433 = vpow.pop %v1432
          %v1434 = vmul.f32 %v1394, 1.442695
          %v1435 = vpow.pop %v1434
          %v1436 = vmul.f32 %v1395, 1.442695
          %v1437 = vpow.pop %v1436
          %v1438 = vmul.f32 %v1396, 1.442695
          %v1439 = vpow.pop %v1438
          %v1440 = vmul.f32 %v1397, 1.442695
          %v1441 = vpow.pop %v1440
          %v1442 = vmul.f32 %v1398, 1.442695
          %v1443 = vpow.pop %v1442
          %v1444 = vmul.f32 %v1399, 1.442695
          %v1445 = vpow.pop %v1444
          %v1446 = vmul.f32 %v1400, 1.442695
          %v1447 = vpow.pop %v1446
          %v1448 = vmul.f32 %v1401, 1.442695
          %v1449 = vpow.pop %v1448
          %v1450 = vmul.f32 %v1402, 1.442695
          %v1451 = vpow.pop %v1450
          %v1452 = vmul.f32 %v1403, 1.442695
          %v1453 = vpow.pop %v1452
          %v1454 = vmul.f32 %v1404, 1.442695
          %v1455 = vpow.pop %v1454
          %v1456 = vmul.f32 %v1405, 1.442695
          %v1457 = vpow.pop %v1456
          %v1458 = vmul.f32 %v1406, 1.442695
          %v1459 = vpow.pop %v1458
          %v1460 = vmul.f32 %v1407, 1.442695
          %v1461 = vpow.pop %v1460
          %v1462 = vmul.f32 %v1408, 1.442695
          %v1463 = vpow.pop %v1462
          %v1464 = vmul.f32 %v1409, 1.442695
          %v1465 = vpow.pop %v1464
          %v1466 = vmul.f32 %v1410, 1.442695
          %v1467 = vpow.pop %v1466
          %v1468 = vmul.f32 %v1411, 1.442695
          %v1469 = vpow.pop %v1468
          %v1470 = vmul.f32 %v1412, 1.442695
          %v1471 = vpow.pop %v1470
          %v1472 = vmul.f32 %v1413, 1.442695
          %v1473 = vpow.pop %v1472
          %v1474 = vmul.f32 %v1414, 1.442695
          %v1475 = vpow.pop %v1474
          %v1476 = vmul.f32 %v1415, 1.442695
          %v1477 = vpow.pop %v1476
          %v1478 = vmul.f32 %v1416, 1.442695
          %v1479 = vpow.pop %v1478
          %v1480 = vmul.f32 %v1417, 1.442695
          %v1481 = vpow.pop %v1480
          %1483 = vset.pattern.permute.xlu0 0
          %1484 = vperm.xlu0 %1483, %v1354
          %v1485 = vpop.permute.xlu0 %1484
          %1488 = vset.pattern.permute.xlu0 0
          %1489 = vperm.xlu0 %1488, %v1355
          %v1490 = vpop.permute.xlu0 %1489
          %1493 = vset.pattern.permute.xlu0 0
          %1494 = vperm.xlu0 %1493, %v1356
          %v1495 = vpop.permute.xlu0 %1494
          %1498 = vset.pattern.permute.xlu0 0
          %1499 = vperm.xlu0 %1498, %v1357
          %v1500 = vpop.permute.xlu0 %1499
          %1503 = vset.pattern.permute.xlu0 0
          %1504 = vperm.xlu0 %1503, %v1358
          %v1505 = vpop.permute.xlu0 %1504
          %1508 = vset.pattern.permute.xlu0 0
          %1509 = vperm.xlu0 %1508, %v1359
          %v1510 = vpop.permute.xlu0 %1509
          %1513 = vset.pattern.permute.xlu0 0
          %1514 = vperm.xlu0 %1513, %v1360
          %v1515 = vpop.permute.xlu0 %1514
          %1518 = vset.pattern.permute.xlu0 0
          %1519 = vperm.xlu0 %1518, %v1361
          %v1520 = vpop.permute.xlu0 %1519
          %1523 = vset.pattern.permute.xlu0 0
          %1524 = vperm.xlu0 %1523, %v1362
          %v1525 = vpop.permute.xlu0 %1524
          %1528 = vset.pattern.permute.xlu0 0
          %1529 = vperm.xlu0 %1528, %v1363
          %v1530 = vpop.permute.xlu0 %1529
          %1533 = vset.pattern.permute.xlu0 0
          %1534 = vperm.xlu0 %1533, %v1364
          %v1535 = vpop.permute.xlu0 %1534
          %1538 = vset.pattern.permute.xlu0 0
          %1539 = vperm.xlu0 %1538, %v1365
          %v1540 = vpop.permute.xlu0 %1539
          %1543 = vset.pattern.permute.xlu0 0
          %1544 = vperm.xlu0 %1543, %v1366
          %v1545 = vpop.permute.xlu0 %1544
          %1548 = vset.pattern.permute.xlu0 0
          %1549 = vperm.xlu0 %1548, %v1367
          %v1550 = vpop.permute.xlu0 %1549
          %1553 = vset.pattern.permute.xlu0 0
          %1554 = vperm.xlu0 %1553, %v1368
          %v1555 = vpop.permute.xlu0 %1554
          %1558 = vset.pattern.permute.xlu0 0
          %1559 = vperm.xlu0 %1558, %v1369
          %v1560 = vpop.permute.xlu0 %1559
          %1563 = vset.pattern.permute.xlu0 0
          %1564 = vperm.xlu0 %1563, %v1370
          %v1565 = vpop.permute.xlu0 %1564
          %1568 = vset.pattern.permute.xlu0 0
          %1569 = vperm.xlu0 %1568, %v1371
          %v1570 = vpop.permute.xlu0 %1569
          %1573 = vset.pattern.permute.xlu0 0
          %1574 = vperm.xlu0 %1573, %v1372
          %v1575 = vpop.permute.xlu0 %1574
          %1578 = vset.pattern.permute.xlu0 0
          %1579 = vperm.xlu0 %1578, %v1373
          %v1580 = vpop.permute.xlu0 %1579
          %1583 = vset.pattern.permute.xlu0 0
          %1584 = vperm.xlu0 %1583, %v1374
          %v1585 = vpop.permute.xlu0 %1584
          %1588 = vset.pattern.permute.xlu0 0
          %1589 = vperm.xlu0 %1588, %v1375
          %v1590 = vpop.permute.xlu0 %1589
          %1593 = vset.pattern.permute.xlu0 0
          %1594 = vperm.xlu0 %1593, %v1376
          %v1595 = vpop.permute.xlu0 %1594
          %1598 = vset.pattern.permute.xlu0 0
          %1599 = vperm.xlu0 %1598, %v1377
          %v1600 = vpop.permute.xlu0 %1599
          %1603 = vset.pattern.permute.xlu0 0
          %1604 = vperm.xlu0 %1603, %v1378
          %v1605 = vpop.permute.xlu0 %1604
          %1608 = vset.pattern.permute.xlu0 0
          %1609 = vperm.xlu0 %1608, %v1379
          %v1610 = vpop.permute.xlu0 %1609
          %1613 = vset.pattern.permute.xlu0 0
          %1614 = vperm.xlu0 %1613, %v1380
          %v1615 = vpop.permute.xlu0 %1614
          %1618 = vset.pattern.permute.xlu0 0
          %1619 = vperm.xlu0 %1618, %v1381
          %v1620 = vpop.permute.xlu0 %1619
          %1623 = vset.pattern.permute.xlu0 0
          %1624 = vperm.xlu0 %1623, %v1382
          %v1625 = vpop.permute.xlu0 %1624
          %1628 = vset.pattern.permute.xlu0 0
          %1629 = vperm.xlu0 %1628, %v1383
          %v1630 = vpop.permute.xlu0 %1629
          %1633 = vset.pattern.permute.xlu0 0
          %1634 = vperm.xlu0 %1633, %v1384
          %v1635 = vpop.permute.xlu0 %1634
          %1638 = vset.pattern.permute.xlu0 0
          %1639 = vperm.xlu0 %1638, %v1385
          %v1640 = vpop.permute.xlu0 %1639
          %v1642 = vsub.f32 %v1162, %v1485
          %v1643 = vsub.f32 %v1163, %v1485
          %v1644 = vsub.f32 %v1164, %v1490
          %v1645 = vsub.f32 %v1165, %v1490
          %v1646 = vsub.f32 %v1166, %v1495
          %v1647 = vsub.f32 %v1167, %v1495
          %v1648 = vsub.f32 %v1168, %v1500
          %v1649 = vsub.f32 %v1169, %v1500
          %v1650 = vsub.f32 %v1170, %v1505
          %v1651 = vsub.f32 %v1171, %v1505
          %v1652 = vsub.f32 %v1172, %v1510
          %v1653 = vsub.f32 %v1173, %v1510
          %v1654 = vsub.f32 %v1174, %v1515
          %v1655 = vsub.f32 %v1175, %v1515
          %v1656 = vsub.f32 %v1176, %v1520
          %v1657 = vsub.f32 %v1177, %v1520
          %v1658 = vsub.f32 %v1178, %v1525
          %v1659 = vsub.f32 %v1179, %v1525
          %v1660 = vsub.f32 %v1180, %v1530
          %v1661 = vsub.f32 %v1181, %v1530
          %v1662 = vsub.f32 %v1182, %v1535
          %v1663 = vsub.f32 %v1183, %v1535
          %v1664 = vsub.f32 %v1184, %v1540
          %v1665 = vsub.f32 %v1185, %v1540
          %v1666 = vsub.f32 %v1186, %v1545
          %v1667 = vsub.f32 %v1187, %v1545
          %v1668 = vsub.f32 %v1188, %v1550
          %v1669 = vsub.f32 %v1189, %v1550
          %v1670 = vsub.f32 %v1190, %v1555
          %v1671 = vsub.f32 %v1191, %v1555
          %v1672 = vsub.f32 %v1192, %v1560
          %v1673 = vsub.f32 %v1193, %v1560
          %v1674 = vsub.f32 %v1194, %v1565
          %v1675 = vsub.f32 %v1195, %v1565
          %v1676 = vsub.f32 %v1196, %v1570
          %v1677 = vsub.f32 %v1197, %v1570
          %v1678 = vsub.f32 %v1198, %v1575
          %v1679 = vsub.f32 %v1199, %v1575
          %v1680 = vsub.f32 %v1200, %v1580
          %v1681 = vsub.f32 %v1201, %v1580
          %v1682 = vsub.f32 %v1202, %v1585
          %v1683 = vsub.f32 %v1203, %v1585
          %v1684 = vsub.f32 %v1204, %v1590
          %v1685 = vsub.f32 %v1205, %v1590
          %v1686 = vsub.f32 %v1206, %v1595
          %v1687 = vsub.f32 %v1207, %v1595
          %v1688 = vsub.f32 %v1208, %v1600
          %v1689 = vsub.f32 %v1209, %v1600
          %v1690 = vsub.f32 %v1210, %v1605
          %v1691 = vsub.f32 %v1211, %v1605
          %v1692 = vsub.f32 %v1212, %v1610
          %v1693 = vsub.f32 %v1213, %v1610
          %v1694 = vsub.f32 %v1214, %v1615
          %v1695 = vsub.f32 %v1215, %v1615
          %v1696 = vsub.f32 %v1216, %v1620
          %v1697 = vsub.f32 %v1217, %v1620
          %v1698 = vsub.f32 %v1218, %v1625
          %v1699 = vsub.f32 %v1219, %v1625
          %v1700 = vsub.f32 %v1220, %v1630
          %v1701 = vsub.f32 %v1221, %v1630
          %v1702 = vsub.f32 %v1222, %v1635
          %v1703 = vsub.f32 %v1223, %v1635
          %v1704 = vsub.f32 %v1224, %v1640
          %v1705 = vsub.f32 %v1225, %v1640
          %v1706 = vmul.f32 %v1642, 1.442695
          %v1707 = vpow.pop %v1706
          %v1708 = vmul.f32 %v1643, 1.442695
          %v1709 = vpow.pop %v1708
          %v1710 = vmul.f32 %v1644, 1.442695
          %v1711 = vpow.pop %v1710
          %v1712 = vmul.f32 %v1645, 1.442695
          %v1713 = vpow.pop %v1712
          %v1714 = vmul.f32 %v1646, 1.442695
          %v1715 = vpow.pop %v1714
          %v1716 = vmul.f32 %v1647, 1.442695
          %v1717 = vpow.pop %v1716
          %v1718 = vmul.f32 %v1648, 1.442695
          %v1719 = vpow.pop %v1718
          %v1720 = vmul.f32 %v1649, 1.442695
          %v1721 = vpow.pop %v1720
          %v1722 = vmul.f32 %v1650, 1.442695
          %v1723 = vpow.pop %v1722
          %v1724 = vmul.f32 %v1651, 1.442695
          %v1725 = vpow.pop %v1724
          %v1726 = vmul.f32 %v1652, 1.442695
          %v1727 = vpow.pop %v1726
          %v1728 = vmul.f32 %v1653, 1.442695
          %v1729 = vpow.pop %v1728
          %v1730 = vmul.f32 %v1654, 1.442695
          %v1731 = vpow.pop %v1730
          %v1732 = vmul.f32 %v1655, 1.442695
          %v1733 = vpow.pop %v1732
          %v1734 = vmul.f32 %v1656, 1.442695
          %v1735 = vpow.pop %v1734
          %v1736 = vmul.f32 %v1657, 1.442695
          %v1737 = vpow.pop %v1736
          %v1738 = vmul.f32 %v1658, 1.442695
          %v1739 = vpow.pop %v1738
          %v1740 = vmul.f32 %v1659, 1.442695
          %v1741 = vpow.pop %v1740
          %v1742 = vmul.f32 %v1660, 1.442695
          %v1743 = vpow.pop %v1742
          %v1744 = vmul.f32 %v1661, 1.442695
          %v1745 = vpow.pop %v1744
          %v1746 = vmul.f32 %v1662, 1.442695
          %v1747 = vpow.pop %v1746
          %v1748 = vmul.f32 %v1663, 1.442695
          %v1749 = vpow.pop %v1748
          %v1750 = vmul.f32 %v1664, 1.442695
          %v1751 = vpow.pop %v1750
          %v1752 = vmul.f32 %v1665, 1.442695
          %v1753 = vpow.pop %v1752
          %v1754 = vmul.f32 %v1666, 1.442695
          %v1755 = vpow.pop %v1754
          %v1756 = vmul.f32 %v1667, 1.442695
          %v1757 = vpow.pop %v1756
          %v1758 = vmul.f32 %v1668, 1.442695
          %v1759 = vpow.pop %v1758
          %v1760 = vmul.f32 %v1669, 1.442695
          %v1761 = vpow.pop %v1760
          %v1762 = vmul.f32 %v1670, 1.442695
          %v1763 = vpow.pop %v1762
          %v1764 = vmul.f32 %v1671, 1.442695
          %v1765 = vpow.pop %v1764
          %v1766 = vmul.f32 %v1672, 1.442695
          %v1767 = vpow.pop %v1766
          %v1768 = vmul.f32 %v1673, 1.442695
          %v1769 = vpow.pop %v1768
          %v1770 = vmul.f32 %v1674, 1.442695
          %v1771 = vpow.pop %v1770
          %v1772 = vmul.f32 %v1675, 1.442695
          %v1773 = vpow.pop %v1772
          %v1774 = vmul.f32 %v1676, 1.442695
          %v1775 = vpow.pop %v1774
          %v1776 = vmul.f32 %v1677, 1.442695
          %v1777 = vpow.pop %v1776
          %v1778 = vmul.f32 %v1678, 1.442695
          %v1779 = vpow.pop %v1778
          %v1780 = vmul.f32 %v1679, 1.442695
          %v1781 = vpow.pop %v1780
          %v1782 = vmul.f32 %v1680, 1.442695
          %v1783 = vpow.pop %v1782
          %v1784 = vmul.f32 %v1681, 1.442695
          %v1785 = vpow.pop %v1784
          %v1786 = vmul.f32 %v1682, 1.442695
          %v1787 = vpow.pop %v1786
          %v1788 = vmul.f32 %v1683, 1.442695
          %v1789 = vpow.pop %v1788
          %v1790 = vmul.f32 %v1684, 1.442695
          %v1791 = vpow.pop %v1790
          %v1792 = vmul.f32 %v1685, 1.442695
          %v1793 = vpow.pop %v1792
          %v1794 = vmul.f32 %v1686, 1.442695
          %v1795 = vpow.pop %v1794
          %v1796 = vmul.f32 %v1687, 1.442695
          %v1797 = vpow.pop %v1796
          %v1798 = vmul.f32 %v1688, 1.442695
          %v1799 = vpow.pop %v1798
          %v1800 = vmul.f32 %v1689, 1.442695
          %v1801 = vpow.pop %v1800
          %v1802 = vmul.f32 %v1690, 1.442695
          %v1803 = vpow.pop %v1802
          %v1804 = vmul.f32 %v1691, 1.442695
          %v1805 = vpow.pop %v1804
          %v1806 = vmul.f32 %v1692, 1.442695
          %v1807 = vpow.pop %v1806
          %v1808 = vmul.f32 %v1693, 1.442695
          %v1809 = vpow.pop %v1808
          %v1810 = vmul.f32 %v1694, 1.442695
          %v1811 = vpow.pop %v1810
          %v1812 = vmul.f32 %v1695, 1.442695
          %v1813 = vpow.pop %v1812
          %v1814 = vmul.f32 %v1696, 1.442695
          %v1815 = vpow.pop %v1814
          %v1816 = vmul.f32 %v1697, 1.442695
          %v1817 = vpow.pop %v1816
          %v1818 = vmul.f32 %v1698, 1.442695
          %v1819 = vpow.pop %v1818
          %v1820 = vmul.f32 %v1699, 1.442695
          %v1821 = vpow.pop %v1820
          %v1822 = vmul.f32 %v1700, 1.442695
          %v1823 = vpow.pop %v1822
          %v1824 = vmul.f32 %v1701, 1.442695
          %v1825 = vpow.pop %v1824
          %v1826 = vmul.f32 %v1702, 1.442695
          %v1827 = vpow.pop %v1826
          %v1828 = vmul.f32 %v1703, 1.442695
          %v1829 = vpow.pop %v1828
          %v1830 = vmul.f32 %v1704, 1.442695
          %v1831 = vpow.pop %v1830
          %v1832 = vmul.f32 %v1705, 1.442695
          %v1833 = vpow.pop %v1832
          %v1834 = vld [vmem:[#allocation3] sm:$0xff]
          %v1835 = vld [vmem:[#allocation3 + $0x8] sm:$0xff]
          %v1836 = vld [vmem:[#allocation3 + $0x10] sm:$0xff]
          %v1837 = vld [vmem:[#allocation3 + $0x18] sm:$0xff]
          %v1838 = vld [vmem:[#allocation3 + $0x20] sm:$0xff]
          %v1839 = vld [vmem:[#allocation3 + $0x28] sm:$0xff]
          %v1840 = vld [vmem:[#allocation3 + $0x30] sm:$0xff]
          %v1841 = vld [vmem:[#allocation3 + $0x38] sm:$0xff]
          %v1842 = vld [vmem:[#allocation3 + $0x40] sm:$0xff]
          %v1843 = vld [vmem:[#allocation3 + $0x48] sm:$0xff]
          %v1844 = vld [vmem:[#allocation3 + $0x50] sm:$0xff]
          %v1845 = vld [vmem:[#allocation3 + $0x58] sm:$0xff]
          %v1846 = vld [vmem:[#allocation3 + $0x60] sm:$0xff]
          %v1847 = vld [vmem:[#allocation3 + $0x68] sm:$0xff]
          %v1848 = vld [vmem:[#allocation3 + $0x70] sm:$0xff]
          %v1849 = vld [vmem:[#allocation3 + $0x78] sm:$0xff]
          %v1850 = vld [vmem:[#allocation3 + $0x80] sm:$0xff]
          %v1851 = vld [vmem:[#allocation3 + $0x88] sm:$0xff]
          %v1852 = vld [vmem:[#allocation3 + $0x90] sm:$0xff]
          %v1853 = vld [vmem:[#allocation3 + $0x98] sm:$0xff]
          %v1854 = vld [vmem:[#allocation3 + $0xa0] sm:$0xff]
          %v1855 = vld [vmem:[#allocation3 + $0xa8] sm:$0xff]
          %v1856 = vld [vmem:[#allocation3 + $0xb0] sm:$0xff]
          %v1857 = vld [vmem:[#allocation3 + $0xb8] sm:$0xff]
          %v1858 = vld [vmem:[#allocation3 + $0xc0] sm:$0xff]
          %v1859 = vld [vmem:[#allocation3 + $0xc8] sm:$0xff]
          %v1860 = vld [vmem:[#allocation3 + $0xd0] sm:$0xff]
          %v1861 = vld [vmem:[#allocation3 + $0xd8] sm:$0xff]
          %v1862 = vld [vmem:[#allocation3 + $0xe0] sm:$0xff]
          %v1863 = vld [vmem:[#allocation3 + $0xe8] sm:$0xff]
          %v1864 = vld [vmem:[#allocation3 + $0xf0] sm:$0xff]
          %v1865 = vld [vmem:[#allocation3 + $0xf8] sm:$0xff]
          %v1866 = vmul.f32 %v1419, %v1834
          %v1867 = vmul.f32 %v1421, %v1835
          %v1868 = vmul.f32 %v1423, %v1836
          %v1869 = vmul.f32 %v1425, %v1837
          %v1870 = vmul.f32 %v1427, %v1838
          %v1871 = vmul.f32 %v1429, %v1839
          %v1872 = vmul.f32 %v1431, %v1840
          %v1873 = vmul.f32 %v1433, %v1841
          %v1874 = vmul.f32 %v1435, %v1842
          %v1875 = vmul.f32 %v1437, %v1843
          %v1876 = vmul.f32 %v1439, %v1844
          %v1877 = vmul.f32 %v1441, %v1845
          %v1878 = vmul.f32 %v1443, %v1846
          %v1879 = vmul.f32 %v1445, %v1847
          %v1880 = vmul.f32 %v1447, %v1848
          %v1881 = vmul.f32 %v1449, %v1849
          %v1882 = vmul.f32 %v1451, %v1850
          %v1883 = vmul.f32 %v1453, %v1851
          %v1884 = vmul.f32 %v1455, %v1852
          %v1885 = vmul.f32 %v1457, %v1853
          %v1886 = vmul.f32 %v1459, %v1854
          %v1887 = vmul.f32 %v1461, %v1855
          %v1888 = vmul.f32 %v1463, %v1856
          %v1889 = vmul.f32 %v1465, %v1857
          %v1890 = vmul.f32 %v1467, %v1858
          %v1891 = vmul.f32 %v1469, %v1859
          %v1892 = vmul.f32 %v1471, %v1860
          %v1893 = vmul.f32 %v1473, %v1861
          %v1894 = vmul.f32 %v1475, %v1862
          %v1895 = vmul.f32 %v1477, %v1863
          %v1896 = vmul.f32 %v1479, %v1864
          %v1897 = vmul.f32 %v1481, %v1865
          %v1898 = vadd.f32 %v1707, %v1709
          %1899 = vadd.xlane.f32.xlu0 %v1898
          %v1900 = vpop.xlane.xlu0 %1899
          %v1901 = vadd.f32 %v1711, %v1713
          %1902 = vadd.xlane.f32.xlu0 %v1901
          %v1903 = vpop.xlane.xlu0 %1902
          %v1904 = vadd.f32 %v1715, %v1717
          %1905 = vadd.xlane.f32.xlu0 %v1904
          %v1906 = vpop.xlane.xlu0 %1905
          %v1907 = vadd.f32 %v1719, %v1721
          %1908 = vadd.xlane.f32.xlu0 %v1907
          %v1909 = vpop.xlane.xlu0 %1908
          %v1910 = vadd.f32 %v1723, %v1725
          %1911 = vadd.xlane.f32.xlu0 %v1910
          %v1912 = vpop.xlane.xlu0 %1911
          %v1913 = vadd.f32 %v1727, %v1729
          %1914 = vadd.xlane.f32.xlu0 %v1913
          %v1915 = vpop.xlane.xlu0 %1914
          %v1916 = vadd.f32 %v1731, %v1733
          %1917 = vadd.xlane.f32.xlu0 %v1916
          %v1918 = vpop.xlane.xlu0 %1917
          %v1919 = vadd.f32 %v1735, %v1737
          %1920 = vadd.xlane.f32.xlu0 %v1919
          %v1921 = vpop.xlane.xlu0 %1920
          %v1922 = vadd.f32 %v1739, %v1741
          %1923 = vadd.xlane.f32.xlu0 %v1922
          %v1924 = vpop.xlane.xlu0 %1923
          %v1925 = vadd.f32 %v1743, %v1745
          %1926 = vadd.xlane.f32.xlu0 %v1925
          %v1927 = vpop.xlane.xlu0 %1926
          %v1928 = vadd.f32 %v1747, %v1749
          %1929 = vadd.xlane.f32.xlu0 %v1928
          %v1930 = vpop.xlane.xlu0 %1929
          %v1931 = vadd.f32 %v1751, %v1753
          %1932 = vadd.xlane.f32.xlu0 %v1931
          %v1933 = vpop.xlane.xlu0 %1932
          %v1934 = vadd.f32 %v1755, %v1757
          %1935 = vadd.xlane.f32.xlu0 %v1934
          %v1936 = vpop.xlane.xlu0 %1935
          %v1937 = vadd.f32 %v1759, %v1761
          %1938 = vadd.xlane.f32.xlu0 %v1937
          %v1939 = vpop.xlane.xlu0 %1938
          %v1940 = vadd.f32 %v1763, %v1765
          %1941 = vadd.xlane.f32.xlu0 %v1940
          %v1942 = vpop.xlane.xlu0 %1941
          %v1943 = vadd.f32 %v1767, %v1769
          %1944 = vadd.xlane.f32.xlu0 %v1943
          %v1945 = vpop.xlane.xlu0 %1944
          %v1946 = vadd.f32 %v1771, %v1773
          %1947 = vadd.xlane.f32.xlu0 %v1946
          %v1948 = vpop.xlane.xlu0 %1947
          %v1949 = vadd.f32 %v1775, %v1777
          %1950 = vadd.xlane.f32.xlu0 %v1949
          %v1951 = vpop.xlane.xlu0 %1950
          %v1952 = vadd.f32 %v1779, %v1781
          %1953 = vadd.xlane.f32.xlu0 %v1952
          %v1954 = vpop.xlane.xlu0 %1953
          %v1955 = vadd.f32 %v1783, %v1785
          %1956 = vadd.xlane.f32.xlu0 %v1955
          %v1957 = vpop.xlane.xlu0 %1956
          %v1958 = vadd.f32 %v1787, %v1789
          %1959 = vadd.xlane.f32.xlu0 %v1958
          %v1960 = vpop.xlane.xlu0 %1959
          %v1961 = vadd.f32 %v1791, %v1793
          %1962 = vadd.xlane.f32.xlu0 %v1961
          %v1963 = vpop.xlane.xlu0 %1962
          %v1964 = vadd.f32 %v1795, %v1797
          %1965 = vadd.xlane.f32.xlu0 %v1964
          %v1966 = vpop.xlane.xlu0 %1965
          %v1967 = vadd.f32 %v1799, %v1801
          %1968 = vadd.xlane.f32.xlu0 %v1967
          %v1969 = vpop.xlane.xlu0 %1968
          %v1970 = vadd.f32 %v1803, %v1805
          %1971 = vadd.xlane.f32.xlu0 %v1970
          %v1972 = vpop.xlane.xlu0 %1971
          %v1973 = vadd.f32 %v1807, %v1809
          %1974 = vadd.xlane.f32.xlu0 %v1973
          %v1975 = vpop.xlane.xlu0 %1974
          %v1976 = vadd.f32 %v1811, %v1813
          %1977 = vadd.xlane.f32.xlu0 %v1976
          %v1978 = vpop.xlane.xlu0 %1977
          %v1979 = vadd.f32 %v1815, %v1817
          %1980 = vadd.xlane.f32.xlu0 %v1979
          %v1981 = vpop.xlane.xlu0 %1980
          %v1982 = vadd.f32 %v1819, %v1821
          %1983 = vadd.xlane.f32.xlu0 %v1982
          %v1984 = vpop.xlane.xlu0 %1983
          %v1985 = vadd.f32 %v1823, %v1825
          %1986 = vadd.xlane.f32.xlu0 %v1985
          %v1987 = vpop.xlane.xlu0 %1986
          %v1988 = vadd.f32 %v1827, %v1829
          %1989 = vadd.xlane.f32.xlu0 %v1988
          %v1990 = vpop.xlane.xlu0 %1989
          %v1991 = vadd.f32 %v1831, %v1833
          %1992 = vadd.xlane.f32.xlu0 %v1991
          %v1993 = vpop.xlane.xlu0 %1992
          %v1994 = vadd.f32 %v1866, %v1900
          %v1995 = vadd.f32 %v1867, %v1903
          %v1996 = vadd.f32 %v1868, %v1906
          %v1997 = vadd.f32 %v1869, %v1909
          %v1998 = vadd.f32 %v1870, %v1912
          %v1999 = vadd.f32 %v1871, %v1915
          %v2000 = vadd.f32 %v1872, %v1918
          %v2001 = vadd.f32 %v1873, %v1921
          %v2002 = vadd.f32 %v1874, %v1924
          %v2003 = vadd.f32 %v1875, %v1927
          %v2004 = vadd.f32 %v1876, %v1930
          %v2005 = vadd.f32 %v1877, %v1933
          %v2006 = vadd.f32 %v1878, %v1936
          %v2007 = vadd.f32 %v1879, %v1939
          %v2008 = vadd.f32 %v1880, %v1942
          %v2009 = vadd.f32 %v1881, %v1945
          %v2010 = vadd.f32 %v1882, %v1948
          %v2011 = vadd.f32 %v1883, %v1951
          %v2012 = vadd.f32 %v1884, %v1954
          %v2013 = vadd.f32 %v1885, %v1957
          %v2014 = vadd.f32 %v1886, %v1960
          %v2015 = vadd.f32 %v1887, %v1963
          %v2016 = vadd.f32 %v1888, %v1966
          %v2017 = vadd.f32 %v1889, %v1969
          %v2018 = vadd.f32 %v1890, %v1972
          %v2019 = vadd.f32 %v1891, %v1975
          %v2020 = vadd.f32 %v1892, %v1978
          %v2021 = vadd.f32 %v1893, %v1981
          %v2022 = vadd.f32 %v1894, %v1984
          %v2023 = vadd.f32 %v1895, %v1987
          %v2024 = vadd.f32 %v1896, %v1990
          %v2025 = vadd.f32 %v1897, %v1993
          %vm2026 = vcmask 7168
          %2027 = vst.msk [vmem:[#allocation3] sm:$0xff] %vm2026, %v1994
          %2028 = vst.msk [vmem:[#allocation3 + $0x8] sm:$0xff] %vm2026, %v1995
          %2029 = vst.msk [vmem:[#allocation3 + $0x10] sm:$0xff] %vm2026, %v1996
          %2030 = vst.msk [vmem:[#allocation3 + $0x18] sm:$0xff] %vm2026, %v1997
          %2031 = vst.msk [vmem:[#allocation3 + $0x20] sm:$0xff] %vm2026, %v1998
          %2032 = vst.msk [vmem:[#allocation3 + $0x28] sm:$0xff] %vm2026, %v1999
          %2033 = vst.msk [vmem:[#allocation3 + $0x30] sm:$0xff] %vm2026, %v2000
          %2034 = vst.msk [vmem:[#allocation3 + $0x38] sm:$0xff] %vm2026, %v2001
          %2035 = vst.msk [vmem:[#allocation3 + $0x40] sm:$0xff] %vm2026, %v2002
          %2036 = vst.msk [vmem:[#allocation3 + $0x48] sm:$0xff] %vm2026, %v2003
          %2037 = vst.msk [vmem:[#allocation3 + $0x50] sm:$0xff] %vm2026, %v2004
          %2038 = vst.msk [vmem:[#allocation3 + $0x58] sm:$0xff] %vm2026, %v2005
          %2039 = vst.msk [vmem:[#allocation3 + $0x60] sm:$0xff] %vm2026, %v2006
          %2040 = vst.msk [vmem:[#allocation3 + $0x68] sm:$0xff] %vm2026, %v2007
          %2041 = vst.msk [vmem:[#allocation3 + $0x70] sm:$0xff] %vm2026, %v2008
          %2042 = vst.msk [vmem:[#allocation3 + $0x78] sm:$0xff] %vm2026, %v2009
          %2043 = vst.msk [vmem:[#allocation3 + $0x80] sm:$0xff] %vm2026, %v2010
          %2044 = vst.msk [vmem:[#allocation3 + $0x88] sm:$0xff] %vm2026, %v2011
          %2045 = vst.msk [vmem:[#allocation3 + $0x90] sm:$0xff] %vm2026, %v2012
          %2046 = vst.msk [vmem:[#allocation3 + $0x98] sm:$0xff] %vm2026, %v2013
          %2047 = vst.msk [vmem:[#allocation3 + $0xa0] sm:$0xff] %vm2026, %v2014
          %2048 = vst.msk [vmem:[#allocation3 + $0xa8] sm:$0xff] %vm2026, %v2015
          %2049 = vst.msk [vmem:[#allocation3 + $0xb0] sm:$0xff] %vm2026, %v2016
          %2050 = vst.msk [vmem:[#allocation3 + $0xb8] sm:$0xff] %vm2026, %v2017
          %2051 = vst.msk [vmem:[#allocation3 + $0xc0] sm:$0xff] %vm2026, %v2018
          %2052 = vst.msk [vmem:[#allocation3 + $0xc8] sm:$0xff] %vm2026, %v2019
          %2053 = vst.msk [vmem:[#allocation3 + $0xd0] sm:$0xff] %vm2026, %v2020
          %2054 = vst.msk [vmem:[#allocation3 + $0xd8] sm:$0xff] %vm2026, %v2021
          %2055 = vst.msk [vmem:[#allocation3 + $0xe0] sm:$0xff] %vm2026, %v2022
          %2056 = vst.msk [vmem:[#allocation3 + $0xe8] sm:$0xff] %vm2026, %v2023
          %2057 = vst.msk [vmem:[#allocation3 + $0xf0] sm:$0xff] %vm2026, %v2024
          %2058 = vst.msk [vmem:[#allocation3 + $0xf8] sm:$0xff] %vm2026, %v2025
          %v2059 = vld [vmem:[#allocation4] sm:$0xff]
          %v2060 = vld [vmem:[#allocation4 + $0x8] sm:$0xff]
          %v2061 = vld [vmem:[#allocation4 + $0x10] sm:$0xff]
          %v2062 = vld [vmem:[#allocation4 + $0x18] sm:$0xff]
          %v2063 = vld [vmem:[#allocation4 + $0x20] sm:$0xff]
          %v2064 = vld [vmem:[#allocation4 + $0x28] sm:$0xff]
          %v2065 = vld [vmem:[#allocation4 + $0x30] sm:$0xff]
          %v2066 = vld [vmem:[#allocation4 + $0x38] sm:$0xff]
          %v2067 = vld [vmem:[#allocation4 + $0x40] sm:$0xff]
          %v2068 = vld [vmem:[#allocation4 + $0x48] sm:$0xff]
          %v2069 = vld [vmem:[#allocation4 + $0x50] sm:$0xff]
          %v2070 = vld [vmem:[#allocation4 + $0x58] sm:$0xff]
          %v2071 = vld [vmem:[#allocation4 + $0x60] sm:$0xff]
          %v2072 = vld [vmem:[#allocation4 + $0x68] sm:$0xff]
          %v2073 = vld [vmem:[#allocation4 + $0x70] sm:$0xff]
          %v2074 = vld [vmem:[#allocation4 + $0x78] sm:$0xff]
          %v2075 = vld [vmem:[#allocation4 + $0x80] sm:$0xff]
          %v2076 = vld [vmem:[#allocation4 + $0x88] sm:$0xff]
          %v2077 = vld [vmem:[#allocation4 + $0x90] sm:$0xff]
          %v2078 = vld [vmem:[#allocation4 + $0x98] sm:$0xff]
          %v2079 = vld [vmem:[#allocation4 + $0xa0] sm:$0xff]
          %v2080 = vld [vmem:[#allocation4 + $0xa8] sm:$0xff]
          %v2081 = vld [vmem:[#allocation4 + $0xb0] sm:$0xff]
          %v2082 = vld [vmem:[#allocation4 + $0xb8] sm:$0xff]
          %v2083 = vld [vmem:[#allocation4 + $0xc0] sm:$0xff]
          %v2084 = vld [vmem:[#allocation4 + $0xc8] sm:$0xff]
          %v2085 = vld [vmem:[#allocation4 + $0xd0] sm:$0xff]
          %v2086 = vld [vmem:[#allocation4 + $0xd8] sm:$0xff]
          %v2087 = vld [vmem:[#allocation4 + $0xe0] sm:$0xff]
          %v2088 = vld [vmem:[#allocation4 + $0xe8] sm:$0xff]
          %v2089 = vld [vmem:[#allocation4 + $0xf0] sm:$0xff]
          %v2090 = vld [vmem:[#allocation4 + $0xf8] sm:$0xff]
          %2092 = vset.pattern.permute.xlu0 0
          %2093 = vperm.xlu0 %2092, %v1419
          %v2094 = vpop.permute.xlu0 %2093
          %2097 = vset.pattern.permute.xlu0 0
          %2098 = vperm.xlu0 %2097, %v1421
          %v2099 = vpop.permute.xlu0 %2098
          %2102 = vset.pattern.permute.xlu0 0
          %2103 = vperm.xlu0 %2102, %v1423
          %v2104 = vpop.permute.xlu0 %2103
          %2107 = vset.pattern.permute.xlu0 0
          %2108 = vperm.xlu0 %2107, %v1425
          %v2109 = vpop.permute.xlu0 %2108
          %2112 = vset.pattern.permute.xlu0 0
          %2113 = vperm.xlu0 %2112, %v1427
          %v2114 = vpop.permute.xlu0 %2113
          %2117 = vset.pattern.permute.xlu0 0
          %2118 = vperm.xlu0 %2117, %v1429
          %v2119 = vpop.permute.xlu0 %2118
          %2122 = vset.pattern.permute.xlu0 0
          %2123 = vperm.xlu0 %2122, %v1431
          %v2124 = vpop.permute.xlu0 %2123
          %2127 = vset.pattern.permute.xlu0 0
          %2128 = vperm.xlu0 %2127, %v1433
          %v2129 = vpop.permute.xlu0 %2128
          %2132 = vset.pattern.permute.xlu0 0
          %2133 = vperm.xlu0 %2132, %v1435
          %v2134 = vpop.permute.xlu0 %2133
          %2137 = vset.pattern.permute.xlu0 0
          %2138 = vperm.xlu0 %2137, %v1437
          %v2139 = vpop.permute.xlu0 %2138
          %2142 = vset.pattern.permute.xlu0 0
          %2143 = vperm.xlu0 %2142, %v1439
          %v2144 = vpop.permute.xlu0 %2143
          %2147 = vset.pattern.permute.xlu0 0
          %2148 = vperm.xlu0 %2147, %v1441
          %v2149 = vpop.permute.xlu0 %2148
          %2152 = vset.pattern.permute.xlu0 0
          %2153 = vperm.xlu0 %2152, %v1443
          %v2154 = vpop.permute.xlu0 %2153
          %2157 = vset.pattern.permute.xlu0 0
          %2158 = vperm.xlu0 %2157, %v1445
          %v2159 = vpop.permute.xlu0 %2158
          %2162 = vset.pattern.permute.xlu0 0
          %2163 = vperm.xlu0 %2162, %v1447
          %v2164 = vpop.permute.xlu0 %2163
          %2167 = vset.pattern.permute.xlu0 0
          %2168 = vperm.xlu0 %2167, %v1449
          %v2169 = vpop.permute.xlu0 %2168
          %2172 = vset.pattern.permute.xlu0 0
          %2173 = vperm.xlu0 %2172, %v1451
          %v2174 = vpop.permute.xlu0 %2173
          %2177 = vset.pattern.permute.xlu0 0
          %2178 = vperm.xlu0 %2177, %v1453
          %v2179 = vpop.permute.xlu0 %2178
          %2182 = vset.pattern.permute.xlu0 0
          %2183 = vperm.xlu0 %2182, %v1455
          %v2184 = vpop.permute.xlu0 %2183
          %2187 = vset.pattern.permute.xlu0 0
          %2188 = vperm.xlu0 %2187, %v1457
          %v2189 = vpop.permute.xlu0 %2188
          %2192 = vset.pattern.permute.xlu0 0
          %2193 = vperm.xlu0 %2192, %v1459
          %v2194 = vpop.permute.xlu0 %2193
          %2197 = vset.pattern.permute.xlu0 0
          %2198 = vperm.xlu0 %2197, %v1461
          %v2199 = vpop.permute.xlu0 %2198
          %2202 = vset.pattern.permute.xlu0 0
          %2203 = vperm.xlu0 %2202, %v1463
          %v2204 = vpop.permute.xlu0 %2203
          %2207 = vset.pattern.permute.xlu0 0
          %2208 = vperm.xlu0 %2207, %v1465
          %v2209 = vpop.permute.xlu0 %2208
          %2212 = vset.pattern.permute.xlu0 0
          %2213 = vperm.xlu0 %2212, %v1467
          %v2214 = vpop.permute.xlu0 %2213
          %2217 = vset.pattern.permute.xlu0 0
          %2218 = vperm.xlu0 %2217, %v1469
          %v2219 = vpop.permute.xlu0 %2218
          %2222 = vset.pattern.permute.xlu0 0
          %2223 = vperm.xlu0 %2222, %v1471
          %v2224 = vpop.permute.xlu0 %2223
          %2227 = vset.pattern.permute.xlu0 0
          %2228 = vperm.xlu0 %2227, %v1473
          %v2229 = vpop.permute.xlu0 %2228
          %2232 = vset.pattern.permute.xlu0 0
          %2233 = vperm.xlu0 %2232, %v1475
          %v2234 = vpop.permute.xlu0 %2233
          %2237 = vset.pattern.permute.xlu0 0
          %2238 = vperm.xlu0 %2237, %v1477
          %v2239 = vpop.permute.xlu0 %2238
          %2242 = vset.pattern.permute.xlu0 0
          %2243 = vperm.xlu0 %2242, %v1479
          %v2244 = vpop.permute.xlu0 %2243
          %2247 = vset.pattern.permute.xlu0 0
          %2248 = vperm.xlu0 %2247, %v1481
          %v2249 = vpop.permute.xlu0 %2248
          %v2251 = vmul.f32 %v2094, %v2059
          %v2252 = vmul.f32 %v2099, %v2060
          %v2253 = vmul.f32 %v2104, %v2061
          %v2254 = vmul.f32 %v2109, %v2062
          %v2255 = vmul.f32 %v2114, %v2063
          %v2256 = vmul.f32 %v2119, %v2064
          %v2257 = vmul.f32 %v2124, %v2065
          %v2258 = vmul.f32 %v2129, %v2066
          %v2259 = vmul.f32 %v2134, %v2067
          %v2260 = vmul.f32 %v2139, %v2068
          %v2261 = vmul.f32 %v2144, %v2069
          %v2262 = vmul.f32 %v2149, %v2070
          %v2263 = vmul.f32 %v2154, %v2071
          %v2264 = vmul.f32 %v2159, %v2072
          %v2265 = vmul.f32 %v2164, %v2073
          %v2266 = vmul.f32 %v2169, %v2074
          %v2267 = vmul.f32 %v2174, %v2075
          %v2268 = vmul.f32 %v2179, %v2076
          %v2269 = vmul.f32 %v2184, %v2077
          %v2270 = vmul.f32 %v2189, %v2078
          %v2271 = vmul.f32 %v2194, %v2079
          %v2272 = vmul.f32 %v2199, %v2080
          %v2273 = vmul.f32 %v2204, %v2081
          %v2274 = vmul.f32 %v2209, %v2082
          %v2275 = vmul.f32 %v2214, %v2083
          %v2276 = vmul.f32 %v2219, %v2084
          %v2277 = vmul.f32 %v2224, %v2085
          %v2278 = vmul.f32 %v2229, %v2086
          %v2279 = vmul.f32 %v2234, %v2087
          %v2280 = vmul.f32 %v2239, %v2088
          %v2281 = vmul.f32 %v2244, %v2089
          %v2282 = vmul.f32 %v2249, %v2090
          %v2283 = vpack.c.bf16 %v1711, %v1707
          %v2284 = vpack.c.bf16 %v1713, %v1709
          %v2285 = vpack.c.bf16 %v1719, %v1715
          %v2286 = vpack.c.bf16 %v1721, %v1717
          %v2287 = vpack.c.bf16 %v1727, %v1723
          %v2288 = vpack.c.bf16 %v1729, %v1725
          %v2289 = vpack.c.bf16 %v1735, %v1731
          %v2290 = vpack.c.bf16 %v1737, %v1733
          %v2291 = vpack.c.bf16 %v1743, %v1739
          %v2292 = vpack.c.bf16 %v1745, %v1741
          %v2293 = vpack.c.bf16 %v1751, %v1747
          %v2294 = vpack.c.bf16 %v1753, %v1749
          %v2295 = vpack.c.bf16 %v1759, %v1755
          %v2296 = vpack.c.bf16 %v1761, %v1757
          %v2297 = vpack.c.bf16 %v1767, %v1763
          %v2298 = vpack.c.bf16 %v1769, %v1765
          %v2299 = vpack.c.bf16 %v1775, %v1771
          %v2300 = vpack.c.bf16 %v1777, %v1773
          %v2301 = vpack.c.bf16 %v1783, %v1779
          %v2302 = vpack.c.bf16 %v1785, %v1781
          %v2303 = vpack.c.bf16 %v1791, %v1787
          %v2304 = vpack.c.bf16 %v1793, %v1789
          %v2305 = vpack.c.bf16 %v1799, %v1795
          %v2306 = vpack.c.bf16 %v1801, %v1797
          %v2307 = vpack.c.bf16 %v1807, %v1803
          %v2308 = vpack.c.bf16 %v1809, %v1805
          %v2309 = vpack.c.bf16 %v1815, %v1811
          %v2310 = vpack.c.bf16 %v1817, %v1813
          %v2311 = vpack.c.bf16 %v1823, %v1819
          %v2312 = vpack.c.bf16 %v1825, %v1821
          %v2313 = vpack.c.bf16 %v1831, %v1827
          %v2314 = vpack.c.bf16 %v1833, %v1829
          %v2347 = vunpack.c.l.b16 %v462
          %v2348 = vunpack.c.l.b16 %v463
          %v2349 = vunpack.c.l.b16 %v464
          %v2350 = vunpack.c.l.b16 %v465
          %v2351 = vunpack.c.l.b16 %v466
          %v2352 = vunpack.c.l.b16 %v467
          %v2353 = vunpack.c.l.b16 %v468
          %v2354 = vunpack.c.l.b16 %v469
          %v2355 = vunpack.c.l.b16 %v470
          %v2356 = vunpack.c.l.b16 %v471
          %v2357 = vunpack.c.l.b16 %v472
          %v2358 = vunpack.c.l.b16 %v473
          %v2359 = vunpack.c.l.b16 %v474
          %v2360 = vunpack.c.l.b16 %v475
          %v2361 = vunpack.c.l.b16 %v476
          %v2362 = vunpack.c.l.b16 %v477
          %v2363 = vunpack.c.l.b16 %v478
          %v2364 = vunpack.c.l.b16 %v479
          %v2365 = vunpack.c.l.b16 %v480
          %v2366 = vunpack.c.l.b16 %v481
          %v2367 = vunpack.c.l.b16 %v482
          %v2368 = vunpack.c.l.b16 %v483
          %v2369 = vunpack.c.l.b16 %v484
          %v2370 = vunpack.c.l.b16 %v485
          %v2371 = vunpack.c.l.b16 %v486
          %v2372 = vunpack.c.l.b16 %v487
          %v2373 = vunpack.c.l.b16 %v488
          %v2374 = vunpack.c.l.b16 %v489
          %v2375 = vunpack.c.l.b16 %v490
          %v2376 = vunpack.c.l.b16 %v491
          %v2377 = vunpack.c.l.b16 %v492
          %v2378 = vunpack.c.l.b16 %v493
          %v2379 = vpack.c.b16 %v2348, %v2347
          %v2380 = vpack.c.b16 %v2350, %v2349
          %v2381 = vpack.c.b16 %v2352, %v2351
          %v2382 = vpack.c.b16 %v2354, %v2353
          %v2383 = vpack.c.b16 %v2356, %v2355
          %v2384 = vpack.c.b16 %v2358, %v2357
          %v2385 = vpack.c.b16 %v2360, %v2359
          %v2386 = vpack.c.b16 %v2362, %v2361
          %v2387 = vpack.c.b16 %v2364, %v2363
          %v2388 = vpack.c.b16 %v2366, %v2365
          %v2389 = vpack.c.b16 %v2368, %v2367
          %v2390 = vpack.c.b16 %v2370, %v2369
          %v2391 = vpack.c.b16 %v2372, %v2371
          %v2392 = vpack.c.b16 %v2374, %v2373
          %v2393 = vpack.c.b16 %v2376, %v2375
          %v2394 = vpack.c.b16 %v2378, %v2377
          %2411 = vmatprep.subr.bf16.mxu0 0
          %2412 = vmatpush1.bf16.msra.mxu0 %v2379
          %2413 = vmatprep.subr.bf16.mxu0 0
          %2414 = vmatpush1.bf16.msra.mxu0 %v2380
          %2415 = vmatprep.subr.bf16.mxu0 0
          %2416 = vmatpush1.bf16.msra.mxu0 %v2381
          %2417 = vmatprep.subr.bf16.mxu0 0
          %2418 = vmatpush1.bf16.msra.mxu0 %v2382
          %2419 = vmatprep.subr.bf16.mxu0 0
          %2420 = vmatpush1.bf16.msra.mxu0 %v2383
          %2421 = vmatprep.subr.bf16.mxu0 0
          %2422 = vmatpush1.bf16.msra.mxu0 %v2384
          %2423 = vmatprep.subr.bf16.mxu0 0
          %2424 = vmatpush1.bf16.msra.mxu0 %v2385
          %2425 = vmatprep.subr.bf16.mxu0 0
          %2426 = vmatpush1.bf16.msra.mxu0 %v2386
          %2427 = vmatprep.subr.bf16.mxu0 0
          %2428 = vmatpush1.bf16.msra.mxu0 %v2387
          %2429 = vmatprep.subr.bf16.mxu0 0
          %2430 = vmatpush1.bf16.msra.mxu0 %v2388
          %2431 = vmatprep.subr.bf16.mxu0 0
          %2432 = vmatpush1.bf16.msra.mxu0 %v2389
          %2433 = vmatprep.subr.bf16.mxu0 0
          %2434 = vmatpush1.bf16.msra.mxu0 %v2390
          %2435 = vmatprep.subr.bf16.mxu0 0
          %2436 = vmatpush1.bf16.msra.mxu0 %v2391
          %2437 = vmatprep.subr.bf16.mxu0 0
          %2438 = vmatpush1.bf16.msra.mxu0 %v2392
          %2439 = vmatprep.subr.bf16.mxu0 0
          %2440 = vmatpush1.bf16.msra.mxu0 %v2393
          %2441 = vmatprep.subr.bf16.mxu0 0
          %2442 = vmatpush1.bf16.msra.mxu0 %v2394
          %2443 = vmatprep.mubr.bf16.mxu0 %v2284
          %2444 = vmatmul.mubr.bf16.gmra.mrb[0].mxu0 %v2283
          %v2445 = vpop.f32.mrb[0].mxu0
          %v2446 = vadd.f32 0.0, %v2445
          %v2447 = vpop.f32.mrb[0].mxu0
          %v2448 = vpop.f32.mrb[0].mxu0
          %v2449 = vadd.f32 0.0, %v2448
          %v2450 = vpop.f32.mrb[0].mxu0
          %2451 = vmatprep.mubr.bf16.mxu0 %v2286
          %2452 = vmatmul.mubr.bf16.gmra.mrb[0].mxu0 %v2285
          %v2453 = vpop.f32.mrb[0].mxu0
          %v2454 = vadd.f32 0.0, %v2453
          %v2455 = vpop.f32.mrb[0].mxu0
          %v2456 = vpop.f32.mrb[0].mxu0
          %v2457 = vadd.f32 0.0, %v2456
          %v2458 = vpop.f32.mrb[0].mxu0
          %2459 = vmatprep.mubr.bf16.mxu0 %v2288
          %2460 = vmatmul.mubr.bf16.gmra.mrb[0].mxu0 %v2287
          %v2461 = vpop.f32.mrb[0].mxu0
          %v2462 = vadd.f32 0.0, %v2461
          %v2463 = vpop.f32.mrb[0].mxu0
          %v2464 = vpop.f32.mrb[0].mxu0
          %v2465 = vadd.f32 0.0, %v2464
          %v2466 = vpop.f32.mrb[0].mxu0
          %2467 = vmatprep.mubr.bf16.mxu0 %v2290
          %2468 = vmatmul.mubr.bf16.gmra.mrb[0].mxu0 %v2289
          %v2469 = vpop.f32.mrb[0].mxu0
          %v2470 = vadd.f32 0.0, %v2469
          %v2471 = vpop.f32.mrb[0].mxu0
          %v2472 = vpop.f32.mrb[0].mxu0
          %v2473 = vadd.f32 0.0, %v2472
          %v2474 = vpop.f32.mrb[0].mxu0
          %2475 = vmatprep.mubr.bf16.mxu0 %v2292
          %2476 = vmatmul.mubr.bf16.gmra.mrb[0].mxu0 %v2291
          %v2477 = vpop.f32.mrb[0].mxu0
          %v2478 = vadd.f32 0.0, %v2477
          %v2479 = vpop.f32.mrb[0].mxu0
          %v2480 = vpop.f32.mrb[0].mxu0
          %v2481 = vadd.f32 0.0, %v2480
          %v2482 = vpop.f32.mrb[0].mxu0
          %2483 = vmatprep.mubr.bf16.mxu0 %v2294
          %2484 = vmatmul.mubr.bf16.gmra.mrb[0].mxu0 %v2293
          %v2485 = vpop.f32.mrb[0].mxu0
          %v2486 = vadd.f32 0.0, %v2485
          %v2487 = vpop.f32.mrb[0].mxu0
          %v2488 = vpop.f32.mrb[0].mxu0
          %v2489 = vadd.f32 0.0, %v2488
          %v2490 = vpop.f32.mrb[0].mxu0
          %2491 = vmatprep.mubr.bf16.mxu0 %v2296
          %2492 = vmatmul.mubr.bf16.gmra.mrb[0].mxu0 %v2295
          %v2493 = vpop.f32.mrb[0].mxu0
          %v2494 = vadd.f32 0.0, %v2493
          %v2495 = vpop.f32.mrb[0].mxu0
          %v2496 = vpop.f32.mrb[0].mxu0
          %v2497 = vadd.f32 0.0, %v2496
          %v2498 = vpop.f32.mrb[0].mxu0
          %2499 = vmatprep.mubr.bf16.mxu0 %v2298
          %2500 = vmatmul.mubr.bf16.gmra.mrb[0].mxu0 %v2297
          %v2501 = vpop.f32.mrb[0].mxu0
          %v2502 = vadd.f32 0.0, %v2501
          %v2503 = vpop.f32.mrb[0].mxu0
          %v2504 = vpop.f32.mrb[0].mxu0
          %v2505 = vadd.f32 0.0, %v2504
          %v2506 = vpop.f32.mrb[0].mxu0
          %2507 = vmatprep.mubr.bf16.mxu0 %v2300
          %2508 = vmatmul.mubr.bf16.gmra.mrb[0].mxu0 %v2299
          %v2509 = vpop.f32.mrb[0].mxu0
          %v2510 = vadd.f32 0.0, %v2509
          %v2511 = vpop.f32.mrb[0].mxu0
          %v2512 = vpop.f32.mrb[0].mxu0
          %v2513 = vadd.f32 0.0, %v2512
          %v2514 = vpop.f32.mrb[0].mxu0
          %2515 = vmatprep.mubr.bf16.mxu0 %v2302
          %2516 = vmatmul.mubr.bf16.gmra.mrb[0].mxu0 %v2301
          %v2517 = vpop.f32.mrb[0].mxu0
          %v2518 = vadd.f32 0.0, %v2517
          %v2519 = vpop.f32.mrb[0].mxu0
          %v2520 = vpop.f32.mrb[0].mxu0
          %v2521 = vadd.f32 0.0, %v2520
          %v2522 = vpop.f32.mrb[0].mxu0
          %2523 = vmatprep.mubr.bf16.mxu0 %v2304
          %2524 = vmatmul.mubr.bf16.gmra.mrb[0].mxu0 %v2303
          %v2525 = vpop.f32.mrb[0].mxu0
          %v2526 = vadd.f32 0.0, %v2525
          %v2527 = vpop.f32.mrb[0].mxu0
          %v2528 = vpop.f32.mrb[0].mxu0
          %v2529 = vadd.f32 0.0, %v2528
          %v2530 = vpop.f32.mrb[0].mxu0
          %2531 = vmatprep.mubr.bf16.mxu0 %v2306
          %2532 = vmatmul.mubr.bf16.gmra.mrb[0].mxu0 %v2305
          %v2533 = vpop.f32.mrb[0].mxu0
          %v2534 = vadd.f32 0.0, %v2533
          %v2535 = vpop.f32.mrb[0].mxu0
          %v2536 = vpop.f32.mrb[0].mxu0
          %v2537 = vadd.f32 0.0, %v2536
          %v2538 = vpop.f32.mrb[0].mxu0
          %2539 = vmatprep.mubr.bf16.mxu0 %v2308
          %2540 = vmatmul.mubr.bf16.gmra.mrb[0].mxu0 %v2307
          %v2541 = vpop.f32.mrb[0].mxu0
          %v2542 = vadd.f32 0.0, %v2541
          %v2543 = vpop.f32.mrb[0].mxu0
          %v2544 = vpop.f32.mrb[0].mxu0
          %v2545 = vadd.f32 0.0, %v2544
          %v2546 = vpop.f32.mrb[0].mxu0
          %2547 = vmatprep.mubr.bf16.mxu0 %v2310
          %2548 = vmatmul.mubr.bf16.gmra.mrb[0].mxu0 %v2309
          %v2549 = vpop.f32.mrb[0].mxu0
          %v2550 = vadd.f32 0.0, %v2549
          %v2551 = vpop.f32.mrb[0].mxu0
          %v2552 = vpop.f32.mrb[0].mxu0
          %v2553 = vadd.f32 0.0, %v2552
          %v2554 = vpop.f32.mrb[0].mxu0
          %2555 = vmatprep.mubr.bf16.mxu0 %v2312
          %2556 = vmatmul.mubr.bf16.gmra.mrb[0].mxu0 %v2311
          %v2557 = vpop.f32.mrb[0].mxu0
          %v2558 = vadd.f32 0.0, %v2557
          %v2559 = vpop.f32.mrb[0].mxu0
          %v2560 = vpop.f32.mrb[0].mxu0
          %v2561 = vadd.f32 0.0, %v2560
          %v2562 = vpop.f32.mrb[0].mxu0
          %2563 = vmatprep.mubr.bf16.mxu0 %v2314
          %2564 = vmatmul.mubr.bf16.gmra.mrb[0].mxu0 %v2313
          %v2565 = vpop.f32.mrb[0].mxu0
          %v2566 = vadd.f32 0.0, %v2565
          %v2567 = vpop.f32.mrb[0].mxu0
          %v2568 = vpop.f32.mrb[0].mxu0
          %v2569 = vadd.f32 0.0, %v2568
          %v2570 = vpop.f32.mrb[0].mxu0
          %2571 = vdwg.mxu0
          %v2572 = vadd.f32 %v2251, %v2446
          %v2573 = vadd.f32 %v2252, %v2449
          %v2574 = vadd.f32 %v2253, %v2454
          %v2575 = vadd.f32 %v2254, %v2457
          %v2576 = vadd.f32 %v2255, %v2462
          %v2577 = vadd.f32 %v2256, %v2465
          %v2578 = vadd.f32 %v2257, %v2470
          %v2579 = vadd.f32 %v2258, %v2473
          %v2580 = vadd.f32 %v2259, %v2478
          %v2581 = vadd.f32 %v2260, %v2481
          %v2582 = vadd.f32 %v2261, %v2486
          %v2583 = vadd.f32 %v2262, %v2489
          %v2584 = vadd.f32 %v2263, %v2494
          %v2585 = vadd.f32 %v2264, %v2497
          %v2586 = vadd.f32 %v2265, %v2502
          %v2587 = vadd.f32 %v2266, %v2505
          %v2588 = vadd.f32 %v2267, %v2510
          %v2589 = vadd.f32 %v2268, %v2513
          %v2590 = vadd.f32 %v2269, %v2518
          %v2591 = vadd.f32 %v2270, %v2521
          %v2592 = vadd.f32 %v2271, %v2526
          %v2593 = vadd.f32 %v2272, %v2529
          %v2594 = vadd.f32 %v2273, %v2534
          %v2595 = vadd.f32 %v2274, %v2537
          %v2596 = vadd.f32 %v2275, %v2542
          %v2597 = vadd.f32 %v2276, %v2545
          %v2598 = vadd.f32 %v2277, %v2550
          %v2599 = vadd.f32 %v2278, %v2553
          %v2600 = vadd.f32 %v2279, %v2558
          %v2601 = vadd.f32 %v2280, %v2561
          %v2602 = vadd.f32 %v2281, %v2566
          %v2603 = vadd.f32 %v2282, %v2569
          %2604 = vst [vmem:[#allocation4] sm:$0xff] %v2572
          %2605 = vst [vmem:[#allocation4 + $0x8] sm:$0xff] %v2573
          %2606 = vst [vmem:[#allocation4 + $0x10] sm:$0xff] %v2574
          %2607 = vst [vmem:[#allocation4 + $0x18] sm:$0xff] %v2575
          %2608 = vst [vmem:[#allocation4 + $0x20] sm:$0xff] %v2576
          %2609 = vst [vmem:[#allocation4 + $0x28] sm:$0xff] %v2577
          %2610 = vst [vmem:[#allocation4 + $0x30] sm:$0xff] %v2578
          %2611 = vst [vmem:[#allocation4 + $0x38] sm:$0xff] %v2579
          %2612 = vst [vmem:[#allocation4 + $0x40] sm:$0xff] %v2580
          %2613 = vst [vmem:[#allocation4 + $0x48] sm:$0xff] %v2581
          %2614 = vst [vmem:[#allocation4 + $0x50] sm:$0xff] %v2582
          %2615 = vst [vmem:[#allocation4 + $0x58] sm:$0xff] %v2583
          %2616 = vst [vmem:[#allocation4 + $0x60] sm:$0xff] %v2584
          %2617 = vst [vmem:[#allocation4 + $0x68] sm:$0xff] %v2585
          %2618 = vst [vmem:[#allocation4 + $0x70] sm:$0xff] %v2586
          %2619 = vst [vmem:[#allocation4 + $0x78] sm:$0xff] %v2587
          %2620 = vst [vmem:[#allocation4 + $0x80] sm:$0xff] %v2588
          %2621 = vst [vmem:[#allocation4 + $0x88] sm:$0xff] %v2589
          %2622 = vst [vmem:[#allocation4 + $0x90] sm:$0xff] %v2590
          %2623 = vst [vmem:[#allocation4 + $0x98] sm:$0xff] %v2591
          %2624 = vst [vmem:[#allocation4 + $0xa0] sm:$0xff] %v2592
          %2625 = vst [vmem:[#allocation4 + $0xa8] sm:$0xff] %v2593
          %2626 = vst [vmem:[#allocation4 + $0xb0] sm:$0xff] %v2594
          %2627 = vst [vmem:[#allocation4 + $0xb8] sm:$0xff] %v2595
          %2628 = vst [vmem:[#allocation4 + $0xc0] sm:$0xff] %v2596
          %2629 = vst [vmem:[#allocation4 + $0xc8] sm:$0xff] %v2597
          %2630 = vst [vmem:[#allocation4 + $0xd0] sm:$0xff] %v2598
          %2631 = vst [vmem:[#allocation4 + $0xd8] sm:$0xff] %v2599
          %2632 = vst [vmem:[#allocation4 + $0xe0] sm:$0xff] %v2600
          %2633 = vst [vmem:[#allocation4 + $0xe8] sm:$0xff] %v2601
          %2634 = vst [vmem:[#allocation4 + $0xf0] sm:$0xff] %v2602
          %2635 = vst [vmem:[#allocation4 + $0xf8] sm:$0xff] %v2603
          %2636 = vst.msk [vmem:[#allocation2] sm:$0xff] %vm2026, %v1354
          %2637 = vst.msk [vmem:[#allocation2 + $0x8] sm:$0xff] %vm2026, %v1355
          %2638 = vst.msk [vmem:[#allocation2 + $0x10] sm:$0xff] %vm2026, %v1356
          %2639 = vst.msk [vmem:[#allocation2 + $0x18] sm:$0xff] %vm2026, %v1357
          %2640 = vst.msk [vmem:[#allocation2 + $0x20] sm:$0xff] %vm2026, %v1358
          %2641 = vst.msk [vmem:[#allocation2 + $0x28] sm:$0xff] %vm2026, %v1359
          %2642 = vst.msk [vmem:[#allocation2 + $0x30] sm:$0xff] %vm2026, %v1360
          %2643 = vst.msk [vmem:[#allocation2 + $0x38] sm:$0xff] %vm2026, %v1361
          %2644 = vst.msk [vmem:[#allocation2 + $0x40] sm:$0xff] %vm2026, %v1362
          %2645 = vst.msk [vmem:[#allocation2 + $0x48] sm:$0xff] %vm2026, %v1363
          %2646 = vst.msk [vmem:[#allocation2 + $0x50] sm:$0xff] %vm2026, %v1364
          %2647 = vst.msk [vmem:[#allocation2 + $0x58] sm:$0xff] %vm2026, %v1365
          %2648 = vst.msk [vmem:[#allocation2 + $0x60] sm:$0xff] %vm2026, %v1366
          %2649 = vst.msk [vmem:[#allocation2 + $0x68] sm:$0xff] %vm2026, %v1367
          %2650 = vst.msk [vmem:[#allocation2 + $0x70] sm:$0xff] %vm2026, %v1368
          %2651 = vst.msk [vmem:[#allocation2 + $0x78] sm:$0xff] %vm2026, %v1369
          %2652 = vst.msk [vmem:[#allocation2 + $0x80] sm:$0xff] %vm2026, %v1370
          %2653 = vst.msk [vmem:[#allocation2 + $0x88] sm:$0xff] %vm2026, %v1371
          %2654 = vst.msk [vmem:[#allocation2 + $0x90] sm:$0xff] %vm2026, %v1372
          %2655 = vst.msk [vmem:[#allocation2 + $0x98] sm:$0xff] %vm2026, %v1373
          %2656 = vst.msk [vmem:[#allocation2 + $0xa0] sm:$0xff] %vm2026, %v1374
          %2657 = vst.msk [vmem:[#allocation2 + $0xa8] sm:$0xff] %vm2026, %v1375
          %2658 = vst.msk [vmem:[#allocation2 + $0xb0] sm:$0xff] %vm2026, %v1376
          %2659 = vst.msk [vmem:[#allocation2 + $0xb8] sm:$0xff] %vm2026, %v1377
          %2660 = vst.msk [vmem:[#allocation2 + $0xc0] sm:$0xff] %vm2026, %v1378
          %2661 = vst.msk [vmem:[#allocation2 + $0xc8] sm:$0xff] %vm2026, %v1379
          %2662 = vst.msk [vmem:[#allocation2 + $0xd0] sm:$0xff] %vm2026, %v1380
          %2663 = vst.msk [vmem:[#allocation2 + $0xd8] sm:$0xff] %vm2026, %v1381
          %2664 = vst.msk [vmem:[#allocation2 + $0xe0] sm:$0xff] %vm2026, %v1382
          %2665 = vst.msk [vmem:[#allocation2 + $0xe8] sm:$0xff] %vm2026, %v1383
          %2666 = vst.msk [vmem:[#allocation2 + $0xf0] sm:$0xff] %vm2026, %v1384
          %2667 = vst.msk [vmem:[#allocation2 + $0xf8] sm:$0xff] %vm2026, %v1385
        $region71: #{gat2layer_forward.6} parent=58 // pred_fallthru
          _
        %p2668 = scmp.eq.s32.totalorder %s28, 1
        // Predicated region
        $region72: #{gat2layer_forward.6} parent=58 // pred_check
          %p2669 = pneg %p2668
        $region73: #{gat2layer_forward.6} parent=58 // pred_check_branch
          %2671 = sbr.rel (%p2669) target = $region75
        $region74: #{gat2layer_forward.6} parent=58 // pred_region
          %v2672 = vld [vmem:[#allocation3] sm:$0xff]
          %v2673 = vld [vmem:[#allocation3 + $0x8] sm:$0xff]
          %v2674 = vld [vmem:[#allocation3 + $0x10] sm:$0xff]
          %v2675 = vld [vmem:[#allocation3 + $0x18] sm:$0xff]
          %v2676 = vld [vmem:[#allocation3 + $0x20] sm:$0xff]
          %v2677 = vld [vmem:[#allocation3 + $0x28] sm:$0xff]
          %v2678 = vld [vmem:[#allocation3 + $0x30] sm:$0xff]
          %v2679 = vld [vmem:[#allocation3 + $0x38] sm:$0xff]
          %v2680 = vld [vmem:[#allocation3 + $0x40] sm:$0xff]
          %v2681 = vld [vmem:[#allocation3 + $0x48] sm:$0xff]
          %v2682 = vld [vmem:[#allocation3 + $0x50] sm:$0xff]
          %v2683 = vld [vmem:[#allocation3 + $0x58] sm:$0xff]
          %v2684 = vld [vmem:[#allocation3 + $0x60] sm:$0xff]
          %v2685 = vld [vmem:[#allocation3 + $0x68] sm:$0xff]
          %v2686 = vld [vmem:[#allocation3 + $0x70] sm:$0xff]
          %v2687 = vld [vmem:[#allocation3 + $0x78] sm:$0xff]
          %v2688 = vld [vmem:[#allocation3 + $0x80] sm:$0xff]
          %v2689 = vld [vmem:[#allocation3 + $0x88] sm:$0xff]
          %v2690 = vld [vmem:[#allocation3 + $0x90] sm:$0xff]
          %v2691 = vld [vmem:[#allocation3 + $0x98] sm:$0xff]
          %v2692 = vld [vmem:[#allocation3 + $0xa0] sm:$0xff]
          %v2693 = vld [vmem:[#allocation3 + $0xa8] sm:$0xff]
          %v2694 = vld [vmem:[#allocation3 + $0xb0] sm:$0xff]
          %v2695 = vld [vmem:[#allocation3 + $0xb8] sm:$0xff]
          %v2696 = vld [vmem:[#allocation3 + $0xc0] sm:$0xff]
          %v2697 = vld [vmem:[#allocation3 + $0xc8] sm:$0xff]
          %v2698 = vld [vmem:[#allocation3 + $0xd0] sm:$0xff]
          %v2699 = vld [vmem:[#allocation3 + $0xd8] sm:$0xff]
          %v2700 = vld [vmem:[#allocation3 + $0xe0] sm:$0xff]
          %v2701 = vld [vmem:[#allocation3 + $0xe8] sm:$0xff]
          %v2702 = vld [vmem:[#allocation3 + $0xf0] sm:$0xff]
          %v2703 = vld [vmem:[#allocation3 + $0xf8] sm:$0xff]
          %v2704 = vrcp.pop %v2672
          %v2705 = vrcp.pop %v2673
          %v2706 = vrcp.pop %v2674
          %v2707 = vrcp.pop %v2675
          %v2708 = vrcp.pop %v2676
          %v2709 = vrcp.pop %v2677
          %v2710 = vrcp.pop %v2678
          %v2711 = vrcp.pop %v2679
          %v2712 = vrcp.pop %v2680
          %v2713 = vrcp.pop %v2681
          %v2714 = vrcp.pop %v2682
          %v2715 = vrcp.pop %v2683
          %v2716 = vrcp.pop %v2684
          %v2717 = vrcp.pop %v2685
          %v2718 = vrcp.pop %v2686
          %v2719 = vrcp.pop %v2687
          %v2720 = vrcp.pop %v2688
          %v2721 = vrcp.pop %v2689
          %v2722 = vrcp.pop %v2690
          %v2723 = vrcp.pop %v2691
          %v2724 = vrcp.pop %v2692
          %v2725 = vrcp.pop %v2693
          %v2726 = vrcp.pop %v2694
          %v2727 = vrcp.pop %v2695
          %v2728 = vrcp.pop %v2696
          %v2729 = vrcp.pop %v2697
          %v2730 = vrcp.pop %v2698
          %v2731 = vrcp.pop %v2699
          %v2732 = vrcp.pop %v2700
          %v2733 = vrcp.pop %v2701
          %v2734 = vrcp.pop %v2702
          %v2735 = vrcp.pop %v2703
          %vm2736 = vcmp.gt.f32.partialorder %v2672, 0.0
          %vm2737 = vcmp.gt.f32.partialorder %v2673, 0.0
          %vm2738 = vcmp.gt.f32.partialorder %v2674, 0.0
          %vm2739 = vcmp.gt.f32.partialorder %v2675, 0.0
          %vm2740 = vcmp.gt.f32.partialorder %v2676, 0.0
          %vm2741 = vcmp.gt.f32.partialorder %v2677, 0.0
          %vm2742 = vcmp.gt.f32.partialorder %v2678, 0.0
          %vm2743 = vcmp.gt.f32.partialorder %v2679, 0.0
          %vm2744 = vcmp.gt.f32.partialorder %v2680, 0.0
          %vm2745 = vcmp.gt.f32.partialorder %v2681, 0.0
          %vm2746 = vcmp.gt.f32.partialorder %v2682, 0.0
          %vm2747 = vcmp.gt.f32.partialorder %v2683, 0.0
          %vm2748 = vcmp.gt.f32.partialorder %v2684, 0.0
          %vm2749 = vcmp.gt.f32.partialorder %v2685, 0.0
          %vm2750 = vcmp.gt.f32.partialorder %v2686, 0.0
          %vm2751 = vcmp.gt.f32.partialorder %v2687, 0.0
          %vm2752 = vcmp.gt.f32.partialorder %v2688, 0.0
          %vm2753 = vcmp.gt.f32.partialorder %v2689, 0.0
          %vm2754 = vcmp.gt.f32.partialorder %v2690, 0.0
          %vm2755 = vcmp.gt.f32.partialorder %v2691, 0.0
          %vm2756 = vcmp.gt.f32.partialorder %v2692, 0.0
          %vm2757 = vcmp.gt.f32.partialorder %v2693, 0.0
          %vm2758 = vcmp.gt.f32.partialorder %v2694, 0.0
          %vm2759 = vcmp.gt.f32.partialorder %v2695, 0.0
          %vm2760 = vcmp.gt.f32.partialorder %v2696, 0.0
          %vm2761 = vcmp.gt.f32.partialorder %v2697, 0.0
          %vm2762 = vcmp.gt.f32.partialorder %v2698, 0.0
          %vm2763 = vcmp.gt.f32.partialorder %v2699, 0.0
          %vm2764 = vcmp.gt.f32.partialorder %v2700, 0.0
          %vm2765 = vcmp.gt.f32.partialorder %v2701, 0.0
          %vm2766 = vcmp.gt.f32.partialorder %v2702, 0.0
          %vm2767 = vcmp.gt.f32.partialorder %v2703, 0.0
          %v2768 = vld [vmem:[#allocation4] sm:$0xff]
          %v2769 = vld [vmem:[#allocation4 + $0x8] sm:$0xff]
          %v2770 = vld [vmem:[#allocation4 + $0x10] sm:$0xff]
          %v2771 = vld [vmem:[#allocation4 + $0x18] sm:$0xff]
          %v2772 = vld [vmem:[#allocation4 + $0x20] sm:$0xff]
          %v2773 = vld [vmem:[#allocation4 + $0x28] sm:$0xff]
          %v2774 = vld [vmem:[#allocation4 + $0x30] sm:$0xff]
          %v2775 = vld [vmem:[#allocation4 + $0x38] sm:$0xff]
          %v2776 = vld [vmem:[#allocation4 + $0x40] sm:$0xff]
          %v2777 = vld [vmem:[#allocation4 + $0x48] sm:$0xff]
          %v2778 = vld [vmem:[#allocation4 + $0x50] sm:$0xff]
          %v2779 = vld [vmem:[#allocation4 + $0x58] sm:$0xff]
          %v2780 = vld [vmem:[#allocation4 + $0x60] sm:$0xff]
          %v2781 = vld [vmem:[#allocation4 + $0x68] sm:$0xff]
          %v2782 = vld [vmem:[#allocation4 + $0x70] sm:$0xff]
          %v2783 = vld [vmem:[#allocation4 + $0x78] sm:$0xff]
          %v2784 = vld [vmem:[#allocation4 + $0x80] sm:$0xff]
          %v2785 = vld [vmem:[#allocation4 + $0x88] sm:$0xff]
          %v2786 = vld [vmem:[#allocation4 + $0x90] sm:$0xff]
          %v2787 = vld [vmem:[#allocation4 + $0x98] sm:$0xff]
          %v2788 = vld [vmem:[#allocation4 + $0xa0] sm:$0xff]
          %v2789 = vld [vmem:[#allocation4 + $0xa8] sm:$0xff]
          %v2790 = vld [vmem:[#allocation4 + $0xb0] sm:$0xff]
          %v2791 = vld [vmem:[#allocation4 + $0xb8] sm:$0xff]
          %v2792 = vld [vmem:[#allocation4 + $0xc0] sm:$0xff]
          %v2793 = vld [vmem:[#allocation4 + $0xc8] sm:$0xff]
          %v2794 = vld [vmem:[#allocation4 + $0xd0] sm:$0xff]
          %v2795 = vld [vmem:[#allocation4 + $0xd8] sm:$0xff]
          %v2796 = vld [vmem:[#allocation4 + $0xe0] sm:$0xff]
          %v2797 = vld [vmem:[#allocation4 + $0xe8] sm:$0xff]
          %v2798 = vld [vmem:[#allocation4 + $0xf0] sm:$0xff]
          %v2799 = vld [vmem:[#allocation4 + $0xf8] sm:$0xff]
          %2801 = vset.pattern.permute.xlu0 0
          %2802 = vperm.xlu0 %2801, %v2704
          %v2803 = vpop.permute.xlu0 %2802
          %2806 = vset.pattern.permute.xlu0 0
          %2807 = vperm.xlu0 %2806, %v2705
          %v2808 = vpop.permute.xlu0 %2807
          %2811 = vset.pattern.permute.xlu0 0
          %2812 = vperm.xlu0 %2811, %v2706
          %v2813 = vpop.permute.xlu0 %2812
          %2816 = vset.pattern.permute.xlu0 0
          %2817 = vperm.xlu0 %2816, %v2707
          %v2818 = vpop.permute.xlu0 %2817
          %2821 = vset.pattern.permute.xlu0 0
          %2822 = vperm.xlu0 %2821, %v2708
          %v2823 = vpop.permute.xlu0 %2822
          %2826 = vset.pattern.permute.xlu0 0
          %2827 = vperm.xlu0 %2826, %v2709
          %v2828 = vpop.permute.xlu0 %2827
          %2831 = vset.pattern.permute.xlu0 0
          %2832 = vperm.xlu0 %2831, %v2710
          %v2833 = vpop.permute.xlu0 %2832
          %2836 = vset.pattern.permute.xlu0 0
          %2837 = vperm.xlu0 %2836, %v2711
          %v2838 = vpop.permute.xlu0 %2837
          %2841 = vset.pattern.permute.xlu0 0
          %2842 = vperm.xlu0 %2841, %v2712
          %v2843 = vpop.permute.xlu0 %2842
          %2846 = vset.pattern.permute.xlu0 0
          %2847 = vperm.xlu0 %2846, %v2713
          %v2848 = vpop.permute.xlu0 %2847
          %2851 = vset.pattern.permute.xlu0 0
          %2852 = vperm.xlu0 %2851, %v2714
          %v2853 = vpop.permute.xlu0 %2852
          %2856 = vset.pattern.permute.xlu0 0
          %2857 = vperm.xlu0 %2856, %v2715
          %v2858 = vpop.permute.xlu0 %2857
          %2861 = vset.pattern.permute.xlu0 0
          %2862 = vperm.xlu0 %2861, %v2716
          %v2863 = vpop.permute.xlu0 %2862
          %2866 = vset.pattern.permute.xlu0 0
          %2867 = vperm.xlu0 %2866, %v2717
          %v2868 = vpop.permute.xlu0 %2867
          %2871 = vset.pattern.permute.xlu0 0
          %2872 = vperm.xlu0 %2871, %v2718
          %v2873 = vpop.permute.xlu0 %2872
          %2876 = vset.pattern.permute.xlu0 0
          %2877 = vperm.xlu0 %2876, %v2719
          %v2878 = vpop.permute.xlu0 %2877
          %2881 = vset.pattern.permute.xlu0 0
          %2882 = vperm.xlu0 %2881, %v2720
          %v2883 = vpop.permute.xlu0 %2882
          %2886 = vset.pattern.permute.xlu0 0
          %2887 = vperm.xlu0 %2886, %v2721
          %v2888 = vpop.permute.xlu0 %2887
          %2891 = vset.pattern.permute.xlu0 0
          %2892 = vperm.xlu0 %2891, %v2722
          %v2893 = vpop.permute.xlu0 %2892
          %2896 = vset.pattern.permute.xlu0 0
          %2897 = vperm.xlu0 %2896, %v2723
          %v2898 = vpop.permute.xlu0 %2897
          %2901 = vset.pattern.permute.xlu0 0
          %2902 = vperm.xlu0 %2901, %v2724
          %v2903 = vpop.permute.xlu0 %2902
          %2906 = vset.pattern.permute.xlu0 0
          %2907 = vperm.xlu0 %2906, %v2725
          %v2908 = vpop.permute.xlu0 %2907
          %2911 = vset.pattern.permute.xlu0 0
          %2912 = vperm.xlu0 %2911, %v2726
          %v2913 = vpop.permute.xlu0 %2912
          %2916 = vset.pattern.permute.xlu0 0
          %2917 = vperm.xlu0 %2916, %v2727
          %v2918 = vpop.permute.xlu0 %2917
          %2921 = vset.pattern.permute.xlu0 0
          %2922 = vperm.xlu0 %2921, %v2728
          %v2923 = vpop.permute.xlu0 %2922
          %2926 = vset.pattern.permute.xlu0 0
          %2927 = vperm.xlu0 %2926, %v2729
          %v2928 = vpop.permute.xlu0 %2927
          %2931 = vset.pattern.permute.xlu0 0
          %2932 = vperm.xlu0 %2931, %v2730
          %v2933 = vpop.permute.xlu0 %2932
          %2936 = vset.pattern.permute.xlu0 0
          %2937 = vperm.xlu0 %2936, %v2731
          %v2938 = vpop.permute.xlu0 %2937
          %2941 = vset.pattern.permute.xlu0 0
          %2942 = vperm.xlu0 %2941, %v2732
          %v2943 = vpop.permute.xlu0 %2942
          %2946 = vset.pattern.permute.xlu0 0
          %2947 = vperm.xlu0 %2946, %v2733
          %v2948 = vpop.permute.xlu0 %2947
          %2951 = vset.pattern.permute.xlu0 0
          %2952 = vperm.xlu0 %2951, %v2734
          %v2953 = vpop.permute.xlu0 %2952
          %2956 = vset.pattern.permute.xlu0 0
          %2957 = vperm.xlu0 %2956, %v2735
          %v2958 = vpop.permute.xlu0 %2957
          %v2960 = vmul.f32 %v2768, %v2803
          %v2961 = vmul.f32 %v2769, %v2808
          %v2962 = vmul.f32 %v2770, %v2813
          %v2963 = vmul.f32 %v2771, %v2818
          %v2964 = vmul.f32 %v2772, %v2823
          %v2965 = vmul.f32 %v2773, %v2828
          %v2966 = vmul.f32 %v2774, %v2833
          %v2967 = vmul.f32 %v2775, %v2838
          %v2968 = vmul.f32 %v2776, %v2843
          %v2969 = vmul.f32 %v2777, %v2848
          %v2970 = vmul.f32 %v2778, %v2853
          %v2971 = vmul.f32 %v2779, %v2858
          %v2972 = vmul.f32 %v2780, %v2863
          %v2973 = vmul.f32 %v2781, %v2868
          %v2974 = vmul.f32 %v2782, %v2873
          %v2975 = vmul.f32 %v2783, %v2878
          %v2976 = vmul.f32 %v2784, %v2883
          %v2977 = vmul.f32 %v2785, %v2888
          %v2978 = vmul.f32 %v2786, %v2893
          %v2979 = vmul.f32 %v2787, %v2898
          %v2980 = vmul.f32 %v2788, %v2903
          %v2981 = vmul.f32 %v2789, %v2908
          %v2982 = vmul.f32 %v2790, %v2913
          %v2983 = vmul.f32 %v2791, %v2918
          %v2984 = vmul.f32 %v2792, %v2923
          %v2985 = vmul.f32 %v2793, %v2928
          %v2986 = vmul.f32 %v2794, %v2933
          %v2987 = vmul.f32 %v2795, %v2938
          %v2988 = vmul.f32 %v2796, %v2943
          %v2989 = vmul.f32 %v2797, %v2948
          %v2990 = vmul.f32 %v2798, %v2953
          %v2991 = vmul.f32 %v2799, %v2958
          %v2992 = vsel %vm2736, 1, 0
          %v2993 = vsel %vm2737, 1, 0
          %v2994 = vsel %vm2738, 1, 0
          %v2995 = vsel %vm2739, 1, 0
          %v2996 = vsel %vm2740, 1, 0
          %v2997 = vsel %vm2741, 1, 0
          %v2998 = vsel %vm2742, 1, 0
          %v2999 = vsel %vm2743, 1, 0
          %v3000 = vsel %vm2744, 1, 0
          %v3001 = vsel %vm2745, 1, 0
          %v3002 = vsel %vm2746, 1, 0
          %v3003 = vsel %vm2747, 1, 0
          %v3004 = vsel %vm2748, 1, 0
          %v3005 = vsel %vm2749, 1, 0
          %v3006 = vsel %vm2750, 1, 0
          %v3007 = vsel %vm2751, 1, 0
          %v3008 = vsel %vm2752, 1, 0
          %v3009 = vsel %vm2753, 1, 0
          %v3010 = vsel %vm2754, 1, 0
          %v3011 = vsel %vm2755, 1, 0
          %v3012 = vsel %vm2756, 1, 0
          %v3013 = vsel %vm2757, 1, 0
          %v3014 = vsel %vm2758, 1, 0
          %v3015 = vsel %vm2759, 1, 0
          %v3016 = vsel %vm2760, 1, 0
          %v3017 = vsel %vm2761, 1, 0
          %v3018 = vsel %vm2762, 1, 0
          %v3019 = vsel %vm2763, 1, 0
          %v3020 = vsel %vm2764, 1, 0
          %v3021 = vsel %vm2765, 1, 0
          %v3022 = vsel %vm2766, 1, 0
          %v3023 = vsel %vm2767, 1, 0
          %3024 = vset.pattern.permute.xlu0 0
          %3025 = vperm.xlu0 %3024, %v2992
          %v3026 = vpop.permute.xlu0 %3025
          %3027 = vset.pattern.permute.xlu0 0
          %3028 = vperm.xlu0 %3027, %v2993
          %v3029 = vpop.permute.xlu0 %3028
          %3030 = vset.pattern.permute.xlu0 0
          %3031 = vperm.xlu0 %3030, %v2994
          %v3032 = vpop.permute.xlu0 %3031
          %3033 = vset.pattern.permute.xlu0 0
          %3034 = vperm.xlu0 %3033, %v2995
          %v3035 = vpop.permute.xlu0 %3034
          %3036 = vset.pattern.permute.xlu0 0
          %3037 = vperm.xlu0 %3036, %v2996
          %v3038 = vpop.permute.xlu0 %3037
          %3039 = vset.pattern.permute.xlu0 0
          %3040 = vperm.xlu0 %3039, %v2997
          %v3041 = vpop.permute.xlu0 %3040
          %3042 = vset.pattern.permute.xlu0 0
          %3043 = vperm.xlu0 %3042, %v2998
          %v3044 = vpop.permute.xlu0 %3043
          %3045 = vset.pattern.permute.xlu0 0
          %3046 = vperm.xlu0 %3045, %v2999
          %v3047 = vpop.permute.xlu0 %3046
          %3048 = vset.pattern.permute.xlu0 0
          %3049 = vperm.xlu0 %3048, %v3000
          %v3050 = vpop.permute.xlu0 %3049
          %3051 = vset.pattern.permute.xlu0 0
          %3052 = vperm.xlu0 %3051, %v3001
          %v3053 = vpop.permute.xlu0 %3052
          %3054 = vset.pattern.permute.xlu0 0
          %3055 = vperm.xlu0 %3054, %v3002
          %v3056 = vpop.permute.xlu0 %3055
          %3057 = vset.pattern.permute.xlu0 0
          %3058 = vperm.xlu0 %3057, %v3003
          %v3059 = vpop.permute.xlu0 %3058
          %3060 = vset.pattern.permute.xlu0 0
          %3061 = vperm.xlu0 %3060, %v3004
          %v3062 = vpop.permute.xlu0 %3061
          %3063 = vset.pattern.permute.xlu0 0
          %3064 = vperm.xlu0 %3063, %v3005
          %v3065 = vpop.permute.xlu0 %3064
          %3066 = vset.pattern.permute.xlu0 0
          %3067 = vperm.xlu0 %3066, %v3006
          %v3068 = vpop.permute.xlu0 %3067
          %3069 = vset.pattern.permute.xlu0 0
          %3070 = vperm.xlu0 %3069, %v3007
          %v3071 = vpop.permute.xlu0 %3070
          %3072 = vset.pattern.permute.xlu0 0
          %3073 = vperm.xlu0 %3072, %v3008
          %v3074 = vpop.permute.xlu0 %3073
          %3075 = vset.pattern.permute.xlu0 0
          %3076 = vperm.xlu0 %3075, %v3009
          %v3077 = vpop.permute.xlu0 %3076
          %3078 = vset.pattern.permute.xlu0 0
          %3079 = vperm.xlu0 %3078, %v3010
          %v3080 = vpop.permute.xlu0 %3079
          %3081 = vset.pattern.permute.xlu0 0
          %3082 = vperm.xlu0 %3081, %v3011
          %v3083 = vpop.permute.xlu0 %3082
          %3084 = vset.pattern.permute.xlu0 0
          %3085 = vperm.xlu0 %3084, %v3012
          %v3086 = vpop.permute.xlu0 %3085
          %3087 = vset.pattern.permute.xlu0 0
          %3088 = vperm.xlu0 %3087, %v3013
          %v3089 = vpop.permute.xlu0 %3088
          %3090 = vset.pattern.permute.xlu0 0
          %3091 = vperm.xlu0 %3090, %v3014
          %v3092 = vpop.permute.xlu0 %3091
          %3093 = vset.pattern.permute.xlu0 0
          %3094 = vperm.xlu0 %3093, %v3015
          %v3095 = vpop.permute.xlu0 %3094
          %3096 = vset.pattern.permute.xlu0 0
          %3097 = vperm.xlu0 %3096, %v3016
          %v3098 = vpop.permute.xlu0 %3097
          %3099 = vset.pattern.permute.xlu0 0
          %3100 = vperm.xlu0 %3099, %v3017
          %v3101 = vpop.permute.xlu0 %3100
          %3102 = vset.pattern.permute.xlu0 0
          %3103 = vperm.xlu0 %3102, %v3018
          %v3104 = vpop.permute.xlu0 %3103
          %3105 = vset.pattern.permute.xlu0 0
          %3106 = vperm.xlu0 %3105, %v3019
          %v3107 = vpop.permute.xlu0 %3106
          %3108 = vset.pattern.permute.xlu0 0
          %3109 = vperm.xlu0 %3108, %v3020
          %v3110 = vpop.permute.xlu0 %3109
          %3111 = vset.pattern.permute.xlu0 0
          %3112 = vperm.xlu0 %3111, %v3021
          %v3113 = vpop.permute.xlu0 %3112
          %3114 = vset.pattern.permute.xlu0 0
          %3115 = vperm.xlu0 %3114, %v3022
          %v3116 = vpop.permute.xlu0 %3115
          %3117 = vset.pattern.permute.xlu0 0
          %3118 = vperm.xlu0 %3117, %v3023
          %v3119 = vpop.permute.xlu0 %3118
          %vm3120 = vcmp.eq.s32.totalorder %v3026, 1
          %vm3121 = vcmp.eq.s32.totalorder %v3029, 1
          %vm3122 = vcmp.eq.s32.totalorder %v3032, 1
          %vm3123 = vcmp.eq.s32.totalorder %v3035, 1
          %vm3124 = vcmp.eq.s32.totalorder %v3038, 1
          %vm3125 = vcmp.eq.s32.totalorder %v3041, 1
          %vm3126 = vcmp.eq.s32.totalorder %v3044, 1
          %vm3127 = vcmp.eq.s32.totalorder %v3047, 1
          %vm3128 = vcmp.eq.s32.totalorder %v3050, 1
          %vm3129 = vcmp.eq.s32.totalorder %v3053, 1
          %vm3130 = vcmp.eq.s32.totalorder %v3056, 1
          %vm3131 = vcmp.eq.s32.totalorder %v3059, 1
          %vm3132 = vcmp.eq.s32.totalorder %v3062, 1
          %vm3133 = vcmp.eq.s32.totalorder %v3065, 1
          %vm3134 = vcmp.eq.s32.totalorder %v3068, 1
          %vm3135 = vcmp.eq.s32.totalorder %v3071, 1
          %vm3136 = vcmp.eq.s32.totalorder %v3074, 1
          %vm3137 = vcmp.eq.s32.totalorder %v3077, 1
          %vm3138 = vcmp.eq.s32.totalorder %v3080, 1
          %vm3139 = vcmp.eq.s32.totalorder %v3083, 1
          %vm3140 = vcmp.eq.s32.totalorder %v3086, 1
          %vm3141 = vcmp.eq.s32.totalorder %v3089, 1
          %vm3142 = vcmp.eq.s32.totalorder %v3092, 1
          %vm3143 = vcmp.eq.s32.totalorder %v3095, 1
          %vm3144 = vcmp.eq.s32.totalorder %v3098, 1
          %vm3145 = vcmp.eq.s32.totalorder %v3101, 1
          %vm3146 = vcmp.eq.s32.totalorder %v3104, 1
          %vm3147 = vcmp.eq.s32.totalorder %v3107, 1
          %vm3148 = vcmp.eq.s32.totalorder %v3110, 1
          %vm3149 = vcmp.eq.s32.totalorder %v3113, 1
          %vm3150 = vcmp.eq.s32.totalorder %v3116, 1
          %vm3151 = vcmp.eq.s32.totalorder %v3119, 1
          %v3152 = vsel %vm3120, %v2960, 0.0
          %v3153 = vsel %vm3121, %v2961, 0.0
          %v3154 = vsel %vm3122, %v2962, 0.0
          %v3155 = vsel %vm3123, %v2963, 0.0
          %v3156 = vsel %vm3124, %v2964, 0.0
          %v3157 = vsel %vm3125, %v2965, 0.0
          %v3158 = vsel %vm3126, %v2966, 0.0
          %v3159 = vsel %vm3127, %v2967, 0.0
          %v3160 = vsel %vm3128, %v2968, 0.0
          %v3161 = vsel %vm3129, %v2969, 0.0
          %v3162 = vsel %vm3130, %v2970, 0.0
          %v3163 = vsel %vm3131, %v2971, 0.0
          %v3164 = vsel %vm3132, %v2972, 0.0
          %v3165 = vsel %vm3133, %v2973, 0.0
          %v3166 = vsel %vm3134, %v2974, 0.0
          %v3167 = vsel %vm3135, %v2975, 0.0
          %v3168 = vsel %vm3136, %v2976, 0.0
          %v3169 = vsel %vm3137, %v2977, 0.0
          %v3170 = vsel %vm3138, %v2978, 0.0
          %v3171 = vsel %vm3139, %v2979, 0.0
          %v3172 = vsel %vm3140, %v2980, 0.0
          %v3173 = vsel %vm3141, %v2981, 0.0
          %v3174 = vsel %vm3142, %v2982, 0.0
          %v3175 = vsel %vm3143, %v2983, 0.0
          %v3176 = vsel %vm3144, %v2984, 0.0
          %v3177 = vsel %vm3145, %v2985, 0.0
          %v3178 = vsel %vm3146, %v2986, 0.0
          %v3179 = vsel %vm3147, %v2987, 0.0
          %v3180 = vsel %vm3148, %v2988, 0.0
          %v3181 = vsel %vm3149, %v2989, 0.0
          %v3182 = vsel %vm3150, %v2990, 0.0
          %v3183 = vsel %vm3151, %v2991, 0.0
          %v3184 = vld [vmem:[%s5] sm:$0x1]
          %v3186 = vlaneseq
          %v3187 = vshrl.u32 %v3186, 7
          %v3188 = vsub.s32 0, %v3187
          %v3189 = vrot.slane %v3184, %v3188
          %v3191 = vadd.f32 %v3152, %v3189
          %v3192 = vadd.f32 %v3153, %v3189
          %v3193 = vadd.f32 %v3154, %v3189
          %v3194 = vadd.f32 %v3155, %v3189
          %v3195 = vadd.f32 %v3156, %v3189
          %v3196 = vadd.f32 %v3157, %v3189
          %v3197 = vadd.f32 %v3158, %v3189
          %v3198 = vadd.f32 %v3159, %v3189
          %v3199 = vadd.f32 %v3160, %v3189
          %v3200 = vadd.f32 %v3161, %v3189
          %v3201 = vadd.f32 %v3162, %v3189
          %v3202 = vadd.f32 %v3163, %v3189
          %v3203 = vadd.f32 %v3164, %v3189
          %v3204 = vadd.f32 %v3165, %v3189
          %v3205 = vadd.f32 %v3166, %v3189
          %v3206 = vadd.f32 %v3167, %v3189
          %v3207 = vadd.f32 %v3168, %v3189
          %v3208 = vadd.f32 %v3169, %v3189
          %v3209 = vadd.f32 %v3170, %v3189
          %v3210 = vadd.f32 %v3171, %v3189
          %v3211 = vadd.f32 %v3172, %v3189
          %v3212 = vadd.f32 %v3173, %v3189
          %v3213 = vadd.f32 %v3174, %v3189
          %v3214 = vadd.f32 %v3175, %v3189
          %v3215 = vadd.f32 %v3176, %v3189
          %v3216 = vadd.f32 %v3177, %v3189
          %v3217 = vadd.f32 %v3178, %v3189
          %v3218 = vadd.f32 %v3179, %v3189
          %v3219 = vadd.f32 %v3180, %v3189
          %v3220 = vadd.f32 %v3181, %v3189
          %v3221 = vadd.f32 %v3182, %v3189
          %v3222 = vadd.f32 %v3183, %v3189
          %v3223 = vmax.f32 %v3191, 0.0
          %v3224 = vmax.f32 %v3192, 0.0
          %v3225 = vmax.f32 %v3193, 0.0
          %v3226 = vmax.f32 %v3194, 0.0
          %v3227 = vmax.f32 %v3195, 0.0
          %v3228 = vmax.f32 %v3196, 0.0
          %v3229 = vmax.f32 %v3197, 0.0
          %v3230 = vmax.f32 %v3198, 0.0
          %v3231 = vmax.f32 %v3199, 0.0
          %v3232 = vmax.f32 %v3200, 0.0
          %v3233 = vmax.f32 %v3201, 0.0
          %v3234 = vmax.f32 %v3202, 0.0
          %v3235 = vmax.f32 %v3203, 0.0
          %v3236 = vmax.f32 %v3204, 0.0
          %v3237 = vmax.f32 %v3205, 0.0
          %v3238 = vmax.f32 %v3206, 0.0
          %v3239 = vmax.f32 %v3207, 0.0
          %v3240 = vmax.f32 %v3208, 0.0
          %v3241 = vmax.f32 %v3209, 0.0
          %v3242 = vmax.f32 %v3210, 0.0
          %v3243 = vmax.f32 %v3211, 0.0
          %v3244 = vmax.f32 %v3212, 0.0
          %v3245 = vmax.f32 %v3213, 0.0
          %v3246 = vmax.f32 %v3214, 0.0
          %v3247 = vmax.f32 %v3215, 0.0
          %v3248 = vmax.f32 %v3216, 0.0
          %v3249 = vmax.f32 %v3217, 0.0
          %v3250 = vmax.f32 %v3218, 0.0
          %v3251 = vmax.f32 %v3219, 0.0
          %v3252 = vmax.f32 %v3220, 0.0
          %v3253 = vmax.f32 %v3221, 0.0
          %v3254 = vmax.f32 %v3222, 0.0
          %3255 = vst [vmem:[%s341] sm:$0xff] %v3223
          %3256 = vst [vmem:[%s341 + $0x8] sm:$0xff] %v3224
          %3257 = vst [vmem:[%s341 + $0x10] sm:$0xff] %v3225
          %3258 = vst [vmem:[%s341 + $0x18] sm:$0xff] %v3226
          %3259 = vst [vmem:[%s341 + $0x20] sm:$0xff] %v3227
          %3260 = vst [vmem:[%s341 + $0x28] sm:$0xff] %v3228
          %3261 = vst [vmem:[%s341 + $0x30] sm:$0xff] %v3229
          %3262 = vst [vmem:[%s341 + $0x38] sm:$0xff] %v3230
          %3263 = vst [vmem:[%s341 + $0x40] sm:$0xff] %v3231
          %3264 = vst [vmem:[%s341 + $0x48] sm:$0xff] %v3232
          %3265 = vst [vmem:[%s341 + $0x50] sm:$0xff] %v3233
          %3266 = vst [vmem:[%s341 + $0x58] sm:$0xff] %v3234
          %3267 = vst [vmem:[%s341 + $0x60] sm:$0xff] %v3235
          %3268 = vst [vmem:[%s341 + $0x68] sm:$0xff] %v3236
          %3269 = vst [vmem:[%s341 + $0x70] sm:$0xff] %v3237
          %3270 = vst [vmem:[%s341 + $0x78] sm:$0xff] %v3238
          %3271 = vst [vmem:[%s341 + $0x80] sm:$0xff] %v3239
          %3272 = vst [vmem:[%s341 + $0x88] sm:$0xff] %v3240
          %3273 = vst [vmem:[%s341 + $0x90] sm:$0xff] %v3241
          %3274 = vst [vmem:[%s341 + $0x98] sm:$0xff] %v3242
          %3275 = vst [vmem:[%s341 + $0xa0] sm:$0xff] %v3243
          %3276 = vst [vmem:[%s341 + $0xa8] sm:$0xff] %v3244
          %3277 = vst [vmem:[%s341 + $0xb0] sm:$0xff] %v3245
          %3278 = vst [vmem:[%s341 + $0xb8] sm:$0xff] %v3246
          %3279 = vst [vmem:[%s341 + $0xc0] sm:$0xff] %v3247
          %3280 = vst [vmem:[%s341 + $0xc8] sm:$0xff] %v3248
          %3281 = vst [vmem:[%s341 + $0xd0] sm:$0xff] %v3249
          %3282 = vst [vmem:[%s341 + $0xd8] sm:$0xff] %v3250
          %3283 = vst [vmem:[%s341 + $0xe0] sm:$0xff] %v3251
          %3284 = vst [vmem:[%s341 + $0xe8] sm:$0xff] %v3252
          %3285 = vst [vmem:[%s341 + $0xf0] sm:$0xff] %v3253
          %3286 = vst [vmem:[%s341 + $0xf8] sm:$0xff] %v3254
        $region75: #{gat2layer_forward.6} parent=58 // pred_fallthru
          _
        %s3287 = smul.u32 32, %s27
        %p3288 = scmp.lt.s32.totalorder %s3287, 63
        %s3289 = scalar_select %p3288, %s3287, 63
        %s3290 = smul.addr %s3289, 8
        %s3291 = scalar_lea.vmem %s6, %s3290
        // Predicated region
        $region76: #{gat2layer_forward.6} parent=58 // pred_check
          %p3292 = pneg %p175
        $region77: #{gat2layer_forward.6} parent=58 // pred_check_branch
          %3294 = sbr.rel (%p3292) target = $region79
        $region78: #{gat2layer_forward.6} parent=58 // pred_region
          %s3295 = smul.u32 32, %s27
        $region79: #{gat2layer_forward.6} parent=58 // pred_fallthru
          _
      $region59: #{gat2layer_forward.6} parent=5 // pred_fallthru
        _
      %p3296 = scmp.le.s32.totalorder 2, %s18
      // Predicated region
      $region80: #{gat2layer_forward.6} parent=5 // pred_check
        %p3297 = pneg %p3296
      $region81: #{gat2layer_forward.6} parent=5 // pred_check_branch
        %3299 = sbr.rel (%p3297) target = $region83
      $region82: #{gat2layer_forward.6} parent=5 // pred_region
        %s3300 = ssub.s32 %s18, 2
        // Predicated region
        $region84: #{gat2layer_forward.6} parent=82 // pred_check
          %p3301 = pneg %p181
        $region85: #{gat2layer_forward.6} parent=82 // pred_check_branch
          %3303 = sbr.rel (%p3301) target = $region87
        $region86: #{gat2layer_forward.6} parent=82 // pred_region
          %s3304 = smul.u32 32, %s29
          %p3305 = scmp.lt.s32.totalorder %s3304, 63
          %s3306 = scalar_select %p3305, %s3304, 63
          %s3307 = smul.addr %s3306, 8
          %s3308 = scalar_lea.vmem %s6, %s3307
        $region87: #{gat2layer_forward.6} parent=82 // pred_fallthru
          _
      $region83: #{gat2layer_forward.6} parent=5 // pred_fallthru
        _
    $region6: #{gat2layer_forward.6} parent=1 // loop_footer
      %s22 = sadd.s32 1, %s18
    $region7: #{gat2layer_forward.6} parent=1 // loop_footer_branch
      %17 = sbr.rel target = $region3
    $region8: #{gat2layer_forward.6} parent=1 // loop_exit
      _

// kernel: gat2layer_forward.9
$region0: #{gat2layer_forward.9}
  #allocation0 [shape = 'u32[]', space=smem, size = 0x4, offset = 0x4, fixed_abs, tag = 'smem constant byte address 0x4 - core index']
  #allocation1 [shape = 'u32[144,128]{1,0:T(1,128)}', space=vmem, size = 0x12000, scoped, tag = 'internal scratch']
  %s0 = inlined_call_operand.vmem [shape: f32[512,128], index: 0, kind: input, shape index: {}]
  %s1 = inlined_call_operand.vmem [shape: f32[128,128], index: 1, kind: input, shape index: {}]
  %s2 = inlined_call_operand.vmem [shape: f32[1,128], index: 2, kind: input, shape index: {}]
  %s3 = inlined_call_operand.vmem [shape: f32[512,128], index: 3, kind: output, shape index: {}]
  %s4 = sld [smem:[#allocation0]]
  $region45: #{gat2layer_forward.9} parent=0
    _
  %s6 = ssub.s32 1, %s4
  %s7 = scalar_select 0, %s6, %s4
  loop: start=0, step=1, limit=4
  $region2: #{gat2layer_forward.9} parent=0 // loop_pre_header
    _
  $region3: #{gat2layer_forward.9} parent=0 // loop_header
    %s9 = sphi 0, %s13
    %p10 = scmp.ge.s32.totalorder %s9, 4
    %s19 = sphi 0, %s21
    %s22 = sphi 0, %s19
    %s23 = sphi 0, %s22
    %s39 = sphi 0, %s23
    %s43 = sphi 0, %s43
    %s45 = sphi 0, %s43
    %s46 = sphi 0, %s45
    %s60 = sphi 0, %s46
    %s64 = sphi 0, %s64
    %s66 = sphi 0, %s64
    %s67 = sphi 0, %s66
    %s81 = sphi 0, %s67
    %s87 = sphi 0, %s89
    %s90 = sphi 0, %s87
    %s91 = sphi 0, %s90
    %s107 = sphi 0, %s91
  $region4: #{gat2layer_forward.9} parent=0 // loop_header_branch
    %12 = sbr.rel (%p10) target = $region8
  $region5: #{gat2layer_forward.9} parent=0 // loop_body
    %s14 = ssub.s32 %s9, 1
    %s15 = ssub.s32 %s9, 2
    %s16 = sadd.s32 %s9, 1
    %s17 = ssub.s32 %s9, %s16
    %p18 = scmp.eq.s32.totalorder %s17, 0
    %s20 = sadd.s32 %s19, 1
    %s21 = scalar_select %p18, %s19, %s20
    %p24 = pneg %p18
    %p25 = scmp.eq.s32.totalorder %s9, 1
    %p26 = por %p24, %p25
    %p27 = scmp.ne.s32.totalorder %s19, %s22
    %p28 = scmp.eq.s32.totalorder %s9, 0
    %p29 = por %p27, %p28
    %p30 = scmp.ne.s32.totalorder %s19, %s22
    %p31 = scmp.eq.s32.totalorder %s14, 1
    %p32 = por %p30, %p31
    %p33 = scmp.ne.s32.totalorder %s22, %s23
    %p34 = scmp.eq.s32.totalorder %s14, 0
    %p35 = por %p33, %p34
    %p36 = scmp.ne.s32.totalorder %s22, %s23
    %p37 = scmp.eq.s32.totalorder %s15, 1
    %p38 = por %p36, %p37
    %p40 = scmp.ne.s32.totalorder %s23, %s39
    %p41 = scmp.eq.s32.totalorder %s15, 0
    %p42 = por %p40, %p41
    %s44 = sadd.s32 %s43, 1
    %p47 = scmp.eq.s32.totalorder %s9, 1
    %p48 = scmp.ne.s32.totalorder %s43, %s45
    %p49 = scmp.eq.s32.totalorder %s9, 0
    %p50 = por %p48, %p49
    %p51 = scmp.ne.s32.totalorder %s43, %s45
    %p52 = scmp.eq.s32.totalorder %s14, 1
    %p53 = por %p51, %p52
    %p54 = scmp.ne.s32.totalorder %s45, %s46
    %p55 = scmp.eq.s32.totalorder %s14, 0
    %p56 = por %p54, %p55
    %p57 = scmp.ne.s32.totalorder %s45, %s46
    %p58 = scmp.eq.s32.totalorder %s15, 1
    %p59 = por %p57, %p58
    %p61 = scmp.ne.s32.totalorder %s46, %s60
    %p62 = scmp.eq.s32.totalorder %s15, 0
    %p63 = por %p61, %p62
    %s65 = sadd.s32 %s64, 1
    %p68 = scmp.eq.s32.totalorder %s9, 1
    %p69 = scmp.ne.s32.totalorder %s64, %s66
    %p70 = scmp.eq.s32.totalorder %s9, 0
    %p71 = por %p69, %p70
    %p72 = scmp.ne.s32.totalorder %s64, %s66
    %p73 = scmp.eq.s32.totalorder %s14, 1
    %p74 = por %p72, %p73
    %p75 = scmp.ne.s32.totalorder %s66, %s67
    %p76 = scmp.eq.s32.totalorder %s14, 0
    %p77 = por %p75, %p76
    %p78 = scmp.ne.s32.totalorder %s66, %s67
    %p79 = scmp.eq.s32.totalorder %s15, 1
    %p80 = por %p78, %p79
    %p82 = scmp.ne.s32.totalorder %s67, %s81
    %p83 = scmp.eq.s32.totalorder %s15, 0
    %p84 = por %p82, %p83
    %s85 = ssub.s32 %s9, %s16
    %p86 = scmp.eq.s32.totalorder %s85, 0
    %s88 = sadd.s32 %s87, 1
    %s89 = scalar_select %p86, %s87, %s88
    %p92 = pneg %p86
    %p93 = scmp.eq.s32.totalorder %s9, 1
    %p94 = por %p92, %p93
    %p95 = scmp.ne.s32.totalorder %s87, %s90
    %p96 = scmp.eq.s32.totalorder %s9, 0
    %p97 = por %p95, %p96
    %p98 = scmp.ne.s32.totalorder %s87, %s90
    %p99 = scmp.eq.s32.totalorder %s14, 1
    %p100 = por %p98, %p99
    %p101 = scmp.ne.s32.totalorder %s90, %s91
    %p102 = scmp.eq.s32.totalorder %s14, 0
    %p103 = por %p101, %p102
    %p104 = scmp.ne.s32.totalorder %s90, %s91
    %p105 = scmp.eq.s32.totalorder %s15, 1
    %p106 = por %p104, %p105
    %p108 = scmp.ne.s32.totalorder %s91, %s107
    %p109 = scmp.eq.s32.totalorder %s15, 0
    %p110 = por %p108, %p109
    %p111 = scmp.le.s32.totalorder 1, %s9
    %p112 = scmp.lt.s32.totalorder %s9, 3
    %p113 = pnand %p111, %p112
    %p114 = pneg %p113
    // Predicated region
    $region9: #{gat2layer_forward.9} parent=5 // pred_check
      _
    $region10: #{gat2layer_forward.9} parent=5 // pred_check_branch
      %116 = sbr.rel (%p113) target = $region12
    $region11: #{gat2layer_forward.9} parent=5 // pred_region
      %s117 = ssub.s32 %s9, 1
      // Predicated region
      $region13: #{gat2layer_forward.9} parent=11 // pred_check
        %p118 = pneg %p56
      $region14: #{gat2layer_forward.9} parent=11 // pred_check_branch
        %120 = sbr.rel (%p118) target = $region16
      $region15: #{gat2layer_forward.9} parent=11 // pred_region
        _
      $region16: #{gat2layer_forward.9} parent=11 // pred_fallthru
        _
      // Predicated region
      $region17: #{gat2layer_forward.9} parent=11 // pred_check
        %p121 = pneg %p77
      $region18: #{gat2layer_forward.9} parent=11 // pred_check_branch
        %123 = sbr.rel (%p121) target = $region20
      $region19: #{gat2layer_forward.9} parent=11 // pred_region
        _
      $region20: #{gat2layer_forward.9} parent=11 // pred_fallthru
        _
    $region12: #{gat2layer_forward.9} parent=5 // pred_fallthru
      _
    %p124 = scmp.lt.s32.totalorder %s9, 2
    // Predicated region
    $region21: #{gat2layer_forward.9} parent=5 // pred_check
      %p125 = pneg %p124
    $region22: #{gat2layer_forward.9} parent=5 // pred_check_branch
      %127 = sbr.rel (%p125) target = $region24
    $region23: #{gat2layer_forward.9} parent=5 // pred_region
      // Predicated region
      $region25: #{gat2layer_forward.9} parent=23 // pred_check
        %p128 = pneg %p29
      $region26: #{gat2layer_forward.9} parent=23 // pred_check_branch
        %130 = sbr.rel (%p128) target = $region28
      $region27: #{gat2layer_forward.9} parent=23 // pred_region
        %s131 = smul.u32 32, %s9
        %p132 = scmp.lt.s32.totalorder %s131, 63
        %s133 = scalar_select %p132, %s131, 63
        %s134 = smul.addr %s133, 8
        %s135 = scalar_lea.vmem %s0, %s134
        %s136 = smul.u32 32, %s9
      $region28: #{gat2layer_forward.9} parent=23 // pred_fallthru
        _
    $region24: #{gat2layer_forward.9} parent=5 // pred_fallthru
      _
    %p137 = scmp.le.s32.totalorder 1, %s9
    %p138 = scmp.lt.s32.totalorder %s9, 3
    %p139 = pnand %p137, %p138
    %p140 = pneg %p139
    // Predicated region
    $region29: #{gat2layer_forward.9} parent=5 // pred_check
      _
    $region30: #{gat2layer_forward.9} parent=5 // pred_check_branch
      %142 = sbr.rel (%p139) target = $region32
    $region31: #{gat2layer_forward.9} parent=5 // pred_region
      %s143 = ssub.s32 %s9, 1
      %s144 = smul.u32 32, %s14
      %p145 = scmp.lt.s32.totalorder %s144, 63
      %s146 = scalar_select %p145, %s144, 63
      %s147 = smul.addr %s146, 8
      %s148 = scalar_lea.vmem %s0, %s147
      %p149 = pneg %p35
      %p150 = pneg %p32
      %p151 = pneg %p56
      %p152 = pneg %p53
      %p153 = pneg %p77
      %p154 = pneg %p74
      %p155 = pneg %p103
      %p156 = pneg %p100
      %s157 = smul.u32 32, %s14
      %p158 = scmp.lt.s32.totalorder %s157, 63
      %s159 = scalar_select %p158, %s157, 63
      %s160 = smul.addr %s159, 8
      %s161 = scalar_lea.vmem %s3, %s160
      %s162 = smul.u32 32, %s14
      %p163 = scmp.lt.s32.totalorder %s162, 63
      %s164 = scalar_select %p163, %s162, 63
      %s165 = smul.addr %s164, 8
      %s166 = scalar_lea.vmem %s0, %s165
      %s167 = smul.u32 32, %s14
      %s168 = smul.u32 32, %s14
      %p169 = scmp.lt.s32.totalorder %s168, 63
      %s170 = scalar_select %p169, %s168, 63
      %s171 = smul.addr %s170, 8
      %s172 = scalar_lea.vmem %s3, %s171
      %s173 = smul.u32 32, %s14
      %v174 = vld [vmem:[%s166] sm:$0xff]
      %v175 = vld [vmem:[%s166 + $0x8] sm:$0xff]
      %v176 = vld [vmem:[%s166 + $0x10] sm:$0xff]
      %v177 = vld [vmem:[%s166 + $0x18] sm:$0xff]
      %v178 = vld [vmem:[%s166 + $0x20] sm:$0xff]
      %v179 = vld [vmem:[%s166 + $0x28] sm:$0xff]
      %v180 = vld [vmem:[%s166 + $0x30] sm:$0xff]
      %v181 = vld [vmem:[%s166 + $0x38] sm:$0xff]
      %v182 = vld [vmem:[%s166 + $0x40] sm:$0xff]
      %v183 = vld [vmem:[%s166 + $0x48] sm:$0xff]
      %v184 = vld [vmem:[%s166 + $0x50] sm:$0xff]
      %v185 = vld [vmem:[%s166 + $0x58] sm:$0xff]
      %v186 = vld [vmem:[%s166 + $0x60] sm:$0xff]
      %v187 = vld [vmem:[%s166 + $0x68] sm:$0xff]
      %v188 = vld [vmem:[%s166 + $0x70] sm:$0xff]
      %v189 = vld [vmem:[%s166 + $0x78] sm:$0xff]
      %v190 = vld [vmem:[%s166 + $0x80] sm:$0xff]
      %v191 = vld [vmem:[%s166 + $0x88] sm:$0xff]
      %v192 = vld [vmem:[%s166 + $0x90] sm:$0xff]
      %v193 = vld [vmem:[%s166 + $0x98] sm:$0xff]
      %v194 = vld [vmem:[%s166 + $0xa0] sm:$0xff]
      %v195 = vld [vmem:[%s166 + $0xa8] sm:$0xff]
      %v196 = vld [vmem:[%s166 + $0xb0] sm:$0xff]
      %v197 = vld [vmem:[%s166 + $0xb8] sm:$0xff]
      %v198 = vld [vmem:[%s166 + $0xc0] sm:$0xff]
      %v199 = vld [vmem:[%s166 + $0xc8] sm:$0xff]
      %v200 = vld [vmem:[%s166 + $0xd0] sm:$0xff]
      %v201 = vld [vmem:[%s166 + $0xd8] sm:$0xff]
      %v202 = vld [vmem:[%s166 + $0xe0] sm:$0xff]
      %v203 = vld [vmem:[%s166 + $0xe8] sm:$0xff]
      %v204 = vld [vmem:[%s166 + $0xf0] sm:$0xff]
      %v205 = vld [vmem:[%s166 + $0xf8] sm:$0xff]
      %v206 = vld [vmem:[%s1] sm:$0xff]
      %v207 = vld [vmem:[%s1 + $0x8] sm:$0xff]
      %v208 = vld [vmem:[%s1 + $0x10] sm:$0xff]
      %v209 = vld [vmem:[%s1 + $0x18] sm:$0xff]
      %v210 = vld [vmem:[%s1 + $0x20] sm:$0xff]
      %v211 = vld [vmem:[%s1 + $0x28] sm:$0xff]
      %v212 = vld [vmem:[%s1 + $0x30] sm:$0xff]
      %v213 = vld [vmem:[%s1 + $0x38] sm:$0xff]
      %v214 = vld [vmem:[%s1 + $0x40] sm:$0xff]
      %v215 = vld [vmem:[%s1 + $0x48] sm:$0xff]
      %v216 = vld [vmem:[%s1 + $0x50] sm:$0xff]
      %v217 = vld [vmem:[%s1 + $0x58] sm:$0xff]
      %v218 = vld [vmem:[%s1 + $0x60] sm:$0xff]
      %v219 = vld [vmem:[%s1 + $0x68] sm:$0xff]
      %v220 = vld [vmem:[%s1 + $0x70] sm:$0xff]
      %v221 = vld [vmem:[%s1 + $0x78] sm:$0xff]
      %v222 = vld [vmem:[%s2] sm:$0x1]
      %v224 = vlaneseq
      %v225 = vshrl.u32 %v224, 7
      %v226 = vsub.s32 0, %v225
      %v227 = vrot.slane %v222, %v226
      %229 = vmatprep.subr.mxu0 0.0
      %230 = vmatpush1.msra.mxu0 %v206
      %231 = vmatprep.subr.mxu0 0.0
      %232 = vmatpush1.msra.mxu0 %v207
      %233 = vmatprep.subr.mxu0 0.0
      %234 = vmatpush1.msra.mxu0 %v208
      %235 = vmatprep.subr.mxu0 0.0
      %236 = vmatpush1.msra.mxu0 %v209
      %237 = vmatprep.subr.mxu0 0.0
      %238 = vmatpush1.msra.mxu0 %v210
      %239 = vmatprep.subr.mxu0 0.0
      %240 = vmatpush1.msra.mxu0 %v211
      %241 = vmatprep.subr.mxu0 0.0
      %242 = vmatpush1.msra.mxu0 %v212
      %243 = vmatprep.subr.mxu0 0.0
      %244 = vmatpush1.msra.mxu0 %v213
      %245 = vmatprep.subr.mxu0 0.0
      %246 = vmatpush1.msra.mxu0 %v214
      %247 = vmatprep.subr.mxu0 0.0
      %248 = vmatpush1.msra.mxu0 %v215
      %249 = vmatprep.subr.mxu0 0.0
      %250 = vmatpush1.msra.mxu0 %v216
      %251 = vmatprep.subr.mxu0 0.0
      %252 = vmatpush1.msra.mxu0 %v217
      %253 = vmatprep.subr.mxu0 0.0
      %254 = vmatpush1.msra.mxu0 %v218
      %255 = vmatprep.subr.mxu0 0.0
      %256 = vmatpush1.msra.mxu0 %v219
      %257 = vmatprep.subr.mxu0 0.0
      %258 = vmatpush1.msra.mxu0 %v220
      %259 = vmatprep.subr.mxu0 0.0
      %260 = vmatpush1.msra.mxu0 %v221
      %261 = vmatprep.subr.mxu0 0.0
      %262 = vmatpush1.msra.mxu0 0.0
      %263 = vmatprep.subr.mxu0 0.0
      %264 = vmatpush1.msra.mxu0 0.0
      %265 = vmatprep.subr.mxu0 0.0
      %266 = vmatpush1.msra.mxu0 0.0
      %267 = vmatprep.subr.mxu0 0.0
      %268 = vmatpush1.msra.mxu0 0.0
      %269 = vmatprep.subr.mxu0 0.0
      %270 = vmatpush1.msra.mxu0 0.0
      %271 = vmatprep.subr.mxu0 0.0
      %272 = vmatpush1.msra.mxu0 0.0
      %273 = vmatprep.subr.mxu0 0.0
      %274 = vmatpush1.msra.mxu0 0.0
      %275 = vmatprep.subr.mxu0 0.0
      %276 = vmatpush1.msra.mxu0 0.0
      %277 = vmatprep.subr.mxu0 0.0
      %278 = vmatpush1.msra.mxu0 0.0
      %279 = vmatprep.subr.mxu0 0.0
      %280 = vmatpush1.msra.mxu0 0.0
      %281 = vmatprep.subr.mxu0 0.0
      %282 = vmatpush1.msra.mxu0 0.0
      %283 = vmatprep.subr.mxu0 0.0
      %284 = vmatpush1.msra.mxu0 0.0
      %285 = vmatprep.subr.mxu0 0.0
      %286 = vmatpush1.msra.mxu0 0.0
      %287 = vmatprep.subr.mxu0 0.0
      %288 = vmatpush1.msra.mxu0 0.0
      %289 = vmatprep.subr.mxu0 0.0
      %290 = vmatpush1.msra.mxu0 0.0
      %291 = vmatprep.subr.mxu0 0.0
      %292 = vmatpush1.msra.mxu0 0.0
      %293 = vmatprep.mubr.f32.mxu0 0.0
      %294 = vmatmul.mubr.f32.gmra.mrb[0].mxu0 %v174
      %v295 = vpop.f32.mrb[0].mxu0
      %v296 = vadd.f32 %v227, %v295
      %v297 = vpop.f32.mrb[0].mxu0
      %298 = vmatprep.mubr.f32.mxu0 0.0
      %299 = vmatmul.mubr.f32.gmra.mrb[0].mxu0 %v175
      %v300 = vpop.f32.mrb[0].mxu0
      %v301 = vadd.f32 %v227, %v300
      %v302 = vpop.f32.mrb[0].mxu0
      %303 = vmatprep.mubr.f32.mxu0 0.0
      %304 = vmatmul.mubr.f32.gmra.mrb[0].mxu0 %v176
      %v305 = vpop.f32.mrb[0].mxu0
      %v306 = vadd.f32 %v227, %v305
      %v307 = vpop.f32.mrb[0].mxu0
      %308 = vmatprep.mubr.f32.mxu0 0.0
      %309 = vmatmul.mubr.f32.gmra.mrb[0].mxu0 %v177
      %v310 = vpop.f32.mrb[0].mxu0
      %v311 = vadd.f32 %v227, %v310
      %v312 = vpop.f32.mrb[0].mxu0
      %313 = vmatprep.mubr.f32.mxu0 0.0
      %314 = vmatmul.mubr.f32.gmra.mrb[0].mxu0 %v178
      %v315 = vpop.f32.mrb[0].mxu0
      %v316 = vadd.f32 %v227, %v315
      %v317 = vpop.f32.mrb[0].mxu0
      %318 = vmatprep.mubr.f32.mxu0 0.0
      %319 = vmatmul.mubr.f32.gmra.mrb[0].mxu0 %v179
      %v320 = vpop.f32.mrb[0].mxu0
      %v321 = vadd.f32 %v227, %v320
      %v322 = vpop.f32.mrb[0].mxu0
      %323 = vmatprep.mubr.f32.mxu0 0.0
      %324 = vmatmul.mubr.f32.gmra.mrb[0].mxu0 %v180
      %v325 = vpop.f32.mrb[0].mxu0
      %v326 = vadd.f32 %v227, %v325
      %v327 = vpop.f32.mrb[0].mxu0
      %328 = vmatprep.mubr.f32.mxu0 0.0
      %329 = vmatmul.mubr.f32.gmra.mrb[0].mxu0 %v181
      %v330 = vpop.f32.mrb[0].mxu0
      %v331 = vadd.f32 %v227, %v330
      %v332 = vpop.f32.mrb[0].mxu0
      %333 = vmatprep.mubr.f32.mxu0 0.0
      %334 = vmatmul.mubr.f32.gmra.mrb[0].mxu0 %v182
      %v335 = vpop.f32.mrb[0].mxu0
      %v336 = vadd.f32 %v227, %v335
      %v337 = vpop.f32.mrb[0].mxu0
      %338 = vmatprep.mubr.f32.mxu0 0.0
      %339 = vmatmul.mubr.f32.gmra.mrb[0].mxu0 %v183
      %v340 = vpop.f32.mrb[0].mxu0
      %v341 = vadd.f32 %v227, %v340
      %v342 = vpop.f32.mrb[0].mxu0
      %343 = vmatprep.mubr.f32.mxu0 0.0
      %344 = vmatmul.mubr.f32.gmra.mrb[0].mxu0 %v184
      %v345 = vpop.f32.mrb[0].mxu0
      %v346 = vadd.f32 %v227, %v345
      %v347 = vpop.f32.mrb[0].mxu0
      %348 = vmatprep.mubr.f32.mxu0 0.0
      %349 = vmatmul.mubr.f32.gmra.mrb[0].mxu0 %v185
      %v350 = vpop.f32.mrb[0].mxu0
      %v351 = vadd.f32 %v227, %v350
      %v352 = vpop.f32.mrb[0].mxu0
      %353 = vmatprep.mubr.f32.mxu0 0.0
      %354 = vmatmul.mubr.f32.gmra.mrb[0].mxu0 %v186
      %v355 = vpop.f32.mrb[0].mxu0
      %v356 = vadd.f32 %v227, %v355
      %v357 = vpop.f32.mrb[0].mxu0
      %358 = vmatprep.mubr.f32.mxu0 0.0
      %359 = vmatmul.mubr.f32.gmra.mrb[0].mxu0 %v187
      %v360 = vpop.f32.mrb[0].mxu0
      %v361 = vadd.f32 %v227, %v360
      %v362 = vpop.f32.mrb[0].mxu0
      %363 = vmatprep.mubr.f32.mxu0 0.0
      %364 = vmatmul.mubr.f32.gmra.mrb[0].mxu0 %v188
      %v365 = vpop.f32.mrb[0].mxu0
      %v366 = vadd.f32 %v227, %v365
      %v367 = vpop.f32.mrb[0].mxu0
      %368 = vmatprep.mubr.f32.mxu0 0.0
      %369 = vmatmul.mubr.f32.gmra.mrb[0].mxu0 %v189
      %v370 = vpop.f32.mrb[0].mxu0
      %v371 = vadd.f32 %v227, %v370
      %v372 = vpop.f32.mrb[0].mxu0
      %373 = vmatprep.mubr.f32.mxu0 0.0
      %374 = vmatmul.mubr.f32.gmra.mrb[0].mxu0 %v190
      %v375 = vpop.f32.mrb[0].mxu0
      %v376 = vadd.f32 %v227, %v375
      %v377 = vpop.f32.mrb[0].mxu0
      %378 = vmatprep.mubr.f32.mxu0 0.0
      %379 = vmatmul.mubr.f32.gmra.mrb[0].mxu0 %v191
      %v380 = vpop.f32.mrb[0].mxu0
      %v381 = vadd.f32 %v227, %v380
      %v382 = vpop.f32.mrb[0].mxu0
      %383 = vmatprep.mubr.f32.mxu0 0.0
      %384 = vmatmul.mubr.f32.gmra.mrb[0].mxu0 %v192
      %v385 = vpop.f32.mrb[0].mxu0
      %v386 = vadd.f32 %v227, %v385
      %v387 = vpop.f32.mrb[0].mxu0
      %388 = vmatprep.mubr.f32.mxu0 0.0
      %389 = vmatmul.mubr.f32.gmra.mrb[0].mxu0 %v193
      %v390 = vpop.f32.mrb[0].mxu0
      %v391 = vadd.f32 %v227, %v390
      %v392 = vpop.f32.mrb[0].mxu0
      %393 = vmatprep.mubr.f32.mxu0 0.0
      %394 = vmatmul.mubr.f32.gmra.mrb[0].mxu0 %v194
      %v395 = vpop.f32.mrb[0].mxu0
      %v396 = vadd.f32 %v227, %v395
      %v397 = vpop.f32.mrb[0].mxu0
      %398 = vmatprep.mubr.f32.mxu0 0.0
      %399 = vmatmul.mubr.f32.gmra.mrb[0].mxu0 %v195
      %v400 = vpop.f32.mrb[0].mxu0
      %v401 = vadd.f32 %v227, %v400
      %v402 = vpop.f32.mrb[0].mxu0
      %403 = vmatprep.mubr.f32.mxu0 0.0
      %404 = vmatmul.mubr.f32.gmra.mrb[0].mxu0 %v196
      %v405 = vpop.f32.mrb[0].mxu0
      %v406 = vadd.f32 %v227, %v405
      %v407 = vpop.f32.mrb[0].mxu0
      %408 = vmatprep.mubr.f32.mxu0 0.0
      %409 = vmatmul.mubr.f32.gmra.mrb[0].mxu0 %v197
      %v410 = vpop.f32.mrb[0].mxu0
      %v411 = vadd.f32 %v227, %v410
      %v412 = vpop.f32.mrb[0].mxu0
      %413 = vmatprep.mubr.f32.mxu0 0.0
      %414 = vmatmul.mubr.f32.gmra.mrb[0].mxu0 %v198
      %v415 = vpop.f32.mrb[0].mxu0
      %v416 = vadd.f32 %v227, %v415
      %v417 = vpop.f32.mrb[0].mxu0
      %418 = vmatprep.mubr.f32.mxu0 0.0
      %419 = vmatmul.mubr.f32.gmra.mrb[0].mxu0 %v199
      %v420 = vpop.f32.mrb[0].mxu0
      %v421 = vadd.f32 %v227, %v420
      %v422 = vpop.f32.mrb[0].mxu0
      %423 = vmatprep.mubr.f32.mxu0 0.0
      %424 = vmatmul.mubr.f32.gmra.mrb[0].mxu0 %v200
      %v425 = vpop.f32.mrb[0].mxu0
      %v426 = vadd.f32 %v227, %v425
      %v427 = vpop.f32.mrb[0].mxu0
      %428 = vmatprep.mubr.f32.mxu0 0.0
      %429 = vmatmul.mubr.f32.gmra.mrb[0].mxu0 %v201
      %v430 = vpop.f32.mrb[0].mxu0
      %v431 = vadd.f32 %v227, %v430
      %v432 = vpop.f32.mrb[0].mxu0
      %433 = vmatprep.mubr.f32.mxu0 0.0
      %434 = vmatmul.mubr.f32.gmra.mrb[0].mxu0 %v202
      %v435 = vpop.f32.mrb[0].mxu0
      %v436 = vadd.f32 %v227, %v435
      %v437 = vpop.f32.mrb[0].mxu0
      %438 = vmatprep.mubr.f32.mxu0 0.0
      %439 = vmatmul.mubr.f32.gmra.mrb[0].mxu0 %v203
      %v440 = vpop.f32.mrb[0].mxu0
      %v441 = vadd.f32 %v227, %v440
      %v442 = vpop.f32.mrb[0].mxu0
      %443 = vmatprep.mubr.f32.mxu0 0.0
      %444 = vmatmul.mubr.f32.gmra.mrb[0].mxu0 %v204
      %v445 = vpop.f32.mrb[0].mxu0
      %v446 = vadd.f32 %v227, %v445
      %v447 = vpop.f32.mrb[0].mxu0
      %448 = vmatprep.mubr.f32.mxu0 0.0
      %449 = vmatmul.mubr.f32.gmra.mrb[0].mxu0 %v205
      %v450 = vpop.f32.mrb[0].mxu0
      %v451 = vadd.f32 %v227, %v450
      %v452 = vpop.f32.mrb[0].mxu0
      %453 = vdwg.mxu0
      %454 = vmax.xlane.f32.xlu0 %v296
      %v455 = vpop.xlane.xlu0 %454
      %456 = vmax.xlane.f32.xlu0 %v301
      %v457 = vpop.xlane.xlu0 %456
      %458 = vmax.xlane.f32.xlu0 %v306
      %v459 = vpop.xlane.xlu0 %458
      %460 = vmax.xlane.f32.xlu0 %v311
      %v461 = vpop.xlane.xlu0 %460
      %462 = vmax.xlane.f32.xlu0 %v316
      %v463 = vpop.xlane.xlu0 %462
      %464 = vmax.xlane.f32.xlu0 %v321
      %v465 = vpop.xlane.xlu0 %464
      %466 = vmax.xlane.f32.xlu0 %v326
      %v467 = vpop.xlane.xlu0 %466
      %468 = vmax.xlane.f32.xlu0 %v331
      %v469 = vpop.xlane.xlu0 %468
      %470 = vmax.xlane.f32.xlu0 %v336
      %v471 = vpop.xlane.xlu0 %470
      %472 = vmax.xlane.f32.xlu0 %v341
      %v473 = vpop.xlane.xlu0 %472
      %474 = vmax.xlane.f32.xlu0 %v346
      %v475 = vpop.xlane.xlu0 %474
      %476 = vmax.xlane.f32.xlu0 %v351
      %v477 = vpop.xlane.xlu0 %476
      %478 = vmax.xlane.f32.xlu0 %v356
      %v479 = vpop.xlane.xlu0 %478
      %480 = vmax.xlane.f32.xlu0 %v361
      %v481 = vpop.xlane.xlu0 %480
      %482 = vmax.xlane.f32.xlu0 %v366
      %v483 = vpop.xlane.xlu0 %482
      %484 = vmax.xlane.f32.xlu0 %v371
      %v485 = vpop.xlane.xlu0 %484
      %486 = vmax.xlane.f32.xlu0 %v376
      %v487 = vpop.xlane.xlu0 %486
      %488 = vmax.xlane.f32.xlu0 %v381
      %v489 = vpop.xlane.xlu0 %488
      %490 = vmax.xlane.f32.xlu0 %v386
      %v491 = vpop.xlane.xlu0 %490
      %492 = vmax.xlane.f32.xlu0 %v391
      %v493 = vpop.xlane.xlu0 %492
      %494 = vmax.xlane.f32.xlu0 %v396
      %v495 = vpop.xlane.xlu0 %494
      %496 = vmax.xlane.f32.xlu0 %v401
      %v497 = vpop.xlane.xlu0 %496
      %498 = vmax.xlane.f32.xlu0 %v406
      %v499 = vpop.xlane.xlu0 %498
      %500 = vmax.xlane.f32.xlu0 %v411
      %v501 = vpop.xlane.xlu0 %500
      %502 = vmax.xlane.f32.xlu0 %v416
      %v503 = vpop.xlane.xlu0 %502
      %504 = vmax.xlane.f32.xlu0 %v421
      %v505 = vpop.xlane.xlu0 %504
      %506 = vmax.xlane.f32.xlu0 %v426
      %v507 = vpop.xlane.xlu0 %506
      %508 = vmax.xlane.f32.xlu0 %v431
      %v509 = vpop.xlane.xlu0 %508
      %510 = vmax.xlane.f32.xlu0 %v436
      %v511 = vpop.xlane.xlu0 %510
      %512 = vmax.xlane.f32.xlu0 %v441
      %v513 = vpop.xlane.xlu0 %512
      %514 = vmax.xlane.f32.xlu0 %v446
      %v515 = vpop.xlane.xlu0 %514
      %516 = vmax.xlane.f32.xlu0 %v451
      %v517 = vpop.xlane.xlu0 %516
      %v518 = vsub.f32 %v296, %v455
      %v519 = vsub.f32 %v301, %v457
      %v520 = vsub.f32 %v306, %v459
      %v521 = vsub.f32 %v311, %v461
      %v522 = vsub.f32 %v316, %v463
      %v523 = vsub.f32 %v321, %v465
      %v524 = vsub.f32 %v326, %v467
      %v525 = vsub.f32 %v331, %v469
      %v526 = vsub.f32 %v336, %v471
      %v527 = vsub.f32 %v341, %v473
      %v528 = vsub.f32 %v346, %v475
      %v529 = vsub.f32 %v351, %v477
      %v530 = vsub.f32 %v356, %v479
      %v531 = vsub.f32 %v361, %v481
      %v532 = vsub.f32 %v366, %v483
      %v533 = vsub.f32 %v371, %v485
      %v534 = vsub.f32 %v376, %v487
      %v535 = vsub.f32 %v381, %v489
      %v536 = vsub.f32 %v386, %v491
      %v537 = vsub.f32 %v391, %v493
      %v538 = vsub.f32 %v396, %v495
      %v539 = vsub.f32 %v401, %v497
      %v540 = vsub.f32 %v406, %v499
      %v541 = vsub.f32 %v411, %v501
      %v542 = vsub.f32 %v416, %v503
      %v543 = vsub.f32 %v421, %v505
      %v544 = vsub.f32 %v426, %v507
      %v545 = vsub.f32 %v431, %v509
      %v546 = vsub.f32 %v436, %v511
      %v547 = vsub.f32 %v441, %v513
      %v548 = vsub.f32 %v446, %v515
      %v549 = vsub.f32 %v451, %v517
      %v550 = vmul.f32 %v518, 1.442695
      %v551 = vpow.pop %v550
      %v552 = vmul.f32 %v519, 1.442695
      %v553 = vpow.pop %v552
      %v554 = vmul.f32 %v520, 1.442695
      %v555 = vpow.pop %v554
      %v556 = vmul.f32 %v521, 1.442695
      %v557 = vpow.pop %v556
      %v558 = vmul.f32 %v522, 1.442695
      %v559 = vpow.pop %v558
      %v560 = vmul.f32 %v523, 1.442695
      %v561 = vpow.pop %v560
      %v562 = vmul.f32 %v524, 1.442695
      %v563 = vpow.pop %v562
      %v564 = vmul.f32 %v525, 1.442695
      %v565 = vpow.pop %v564
      %v566 = vmul.f32 %v526, 1.442695
      %v567 = vpow.pop %v566
      %v568 = vmul.f32 %v527, 1.442695
      %v569 = vpow.pop %v568
      %v570 = vmul.f32 %v528, 1.442695
      %v571 = vpow.pop %v570
      %v572 = vmul.f32 %v529, 1.442695
      %v573 = vpow.pop %v572
      %v574 = vmul.f32 %v530, 1.442695
      %v575 = vpow.pop %v574
      %v576 = vmul.f32 %v531, 1.442695
      %v577 = vpow.pop %v576
      %v578 = vmul.f32 %v532, 1.442695
      %v579 = vpow.pop %v578
      %v580 = vmul.f32 %v533, 1.442695
      %v581 = vpow.pop %v580
      %v582 = vmul.f32 %v534, 1.442695
      %v583 = vpow.pop %v582
      %v584 = vmul.f32 %v535, 1.442695
      %v585 = vpow.pop %v584
      %v586 = vmul.f32 %v536, 1.442695
      %v587 = vpow.pop %v586
      %v588 = vmul.f32 %v537, 1.442695
      %v589 = vpow.pop %v588
      %v590 = vmul.f32 %v538, 1.442695
      %v591 = vpow.pop %v590
      %v592 = vmul.f32 %v539, 1.442695
      %v593 = vpow.pop %v592
      %v594 = vmul.f32 %v540, 1.442695
      %v595 = vpow.pop %v594
      %v596 = vmul.f32 %v541, 1.442695
      %v597 = vpow.pop %v596
      %v598 = vmul.f32 %v542, 1.442695
      %v599 = vpow.pop %v598
      %v600 = vmul.f32 %v543, 1.442695
      %v601 = vpow.pop %v600
      %v602 = vmul.f32 %v544, 1.442695
      %v603 = vpow.pop %v602
      %v604 = vmul.f32 %v545, 1.442695
      %v605 = vpow.pop %v604
      %v606 = vmul.f32 %v546, 1.442695
      %v607 = vpow.pop %v606
      %v608 = vmul.f32 %v547, 1.442695
      %v609 = vpow.pop %v608
      %v610 = vmul.f32 %v548, 1.442695
      %v611 = vpow.pop %v610
      %v612 = vmul.f32 %v549, 1.442695
      %v613 = vpow.pop %v612
      %614 = vadd.xlane.f32.xlu0 %v551
      %v615 = vpop.xlane.xlu0 %614
      %616 = vadd.xlane.f32.xlu0 %v553
      %v617 = vpop.xlane.xlu0 %616
      %618 = vadd.xlane.f32.xlu0 %v555
      %v619 = vpop.xlane.xlu0 %618
      %620 = vadd.xlane.f32.xlu0 %v557
      %v621 = vpop.xlane.xlu0 %620
      %622 = vadd.xlane.f32.xlu0 %v559
      %v623 = vpop.xlane.xlu0 %622
      %624 = vadd.xlane.f32.xlu0 %v561
      %v625 = vpop.xlane.xlu0 %624
      %626 = vadd.xlane.f32.xlu0 %v563
      %v627 = vpop.xlane.xlu0 %626
      %628 = vadd.xlane.f32.xlu0 %v565
      %v629 = vpop.xlane.xlu0 %628
      %630 = vadd.xlane.f32.xlu0 %v567
      %v631 = vpop.xlane.xlu0 %630
      %632 = vadd.xlane.f32.xlu0 %v569
      %v633 = vpop.xlane.xlu0 %632
      %634 = vadd.xlane.f32.xlu0 %v571
      %v635 = vpop.xlane.xlu0 %634
      %636 = vadd.xlane.f32.xlu0 %v573
      %v637 = vpop.xlane.xlu0 %636
      %638 = vadd.xlane.f32.xlu0 %v575
      %v639 = vpop.xlane.xlu0 %638
      %640 = vadd.xlane.f32.xlu0 %v577
      %v641 = vpop.xlane.xlu0 %640
      %642 = vadd.xlane.f32.xlu0 %v579
      %v643 = vpop.xlane.xlu0 %642
      %644 = vadd.xlane.f32.xlu0 %v581
      %v645 = vpop.xlane.xlu0 %644
      %646 = vadd.xlane.f32.xlu0 %v583
      %v647 = vpop.xlane.xlu0 %646
      %648 = vadd.xlane.f32.xlu0 %v585
      %v649 = vpop.xlane.xlu0 %648
      %650 = vadd.xlane.f32.xlu0 %v587
      %v651 = vpop.xlane.xlu0 %650
      %652 = vadd.xlane.f32.xlu0 %v589
      %v653 = vpop.xlane.xlu0 %652
      %654 = vadd.xlane.f32.xlu0 %v591
      %v655 = vpop.xlane.xlu0 %654
      %656 = vadd.xlane.f32.xlu0 %v593
      %v657 = vpop.xlane.xlu0 %656
      %658 = vadd.xlane.f32.xlu0 %v595
      %v659 = vpop.xlane.xlu0 %658
      %660 = vadd.xlane.f32.xlu0 %v597
      %v661 = vpop.xlane.xlu0 %660
      %662 = vadd.xlane.f32.xlu0 %v599
      %v663 = vpop.xlane.xlu0 %662
      %664 = vadd.xlane.f32.xlu0 %v601
      %v665 = vpop.xlane.xlu0 %664
      %666 = vadd.xlane.f32.xlu0 %v603
      %v667 = vpop.xlane.xlu0 %666
      %668 = vadd.xlane.f32.xlu0 %v605
      %v669 = vpop.xlane.xlu0 %668
      %670 = vadd.xlane.f32.xlu0 %v607
      %v671 = vpop.xlane.xlu0 %670
      %672 = vadd.xlane.f32.xlu0 %v609
      %v673 = vpop.xlane.xlu0 %672
      %674 = vadd.xlane.f32.xlu0 %v611
      %v675 = vpop.xlane.xlu0 %674
      %676 = vadd.xlane.f32.xlu0 %v613
      %v677 = vpop.xlane.xlu0 %676
      %v678 = vlog2.pop %v615
      %v679 = vmul.f32 %v678, 0.6931472
      %v680 = vlog2.pop %v617
      %v681 = vmul.f32 %v680, 0.6931472
      %v682 = vlog2.pop %v619
      %v683 = vmul.f32 %v682, 0.6931472
      %v684 = vlog2.pop %v621
      %v685 = vmul.f32 %v684, 0.6931472
      %v686 = vlog2.pop %v623
      %v687 = vmul.f32 %v686, 0.6931472
      %v688 = vlog2.pop %v625
      %v689 = vmul.f32 %v688, 0.6931472
      %v690 = vlog2.pop %v627
      %v691 = vmul.f32 %v690, 0.6931472
      %v692 = vlog2.pop %v629
      %v693 = vmul.f32 %v692, 0.6931472
      %v694 = vlog2.pop %v631
      %v695 = vmul.f32 %v694, 0.6931472
      %v696 = vlog2.pop %v633
      %v697 = vmul.f32 %v696, 0.6931472
      %v698 = vlog2.pop %v635
      %v699 = vmul.f32 %v698, 0.6931472
      %v700 = vlog2.pop %v637
      %v701 = vmul.f32 %v700, 0.6931472
      %v702 = vlog2.pop %v639
      %v703 = vmul.f32 %v702, 0.6931472
      %v704 = vlog2.pop %v641
      %v705 = vmul.f32 %v704, 0.6931472
      %v706 = vlog2.pop %v643
      %v707 = vmul.f32 %v706, 0.6931472
      %v708 = vlog2.pop %v645
      %v709 = vmul.f32 %v708, 0.6931472
      %v710 = vlog2.pop %v647
      %v711 = vmul.f32 %v710, 0.6931472
      %v712 = vlog2.pop %v649
      %v713 = vmul.f32 %v712, 0.6931472
      %v714 = vlog2.pop %v651
      %v715 = vmul.f32 %v714, 0.6931472
      %v716 = vlog2.pop %v653
      %v717 = vmul.f32 %v716, 0.6931472
      %v718 = vlog2.pop %v655
      %v719 = vmul.f32 %v718, 0.6931472
      %v720 = vlog2.pop %v657
      %v721 = vmul.f32 %v720, 0.6931472
      %v722 = vlog2.pop %v659
      %v723 = vmul.f32 %v722, 0.6931472
      %v724 = vlog2.pop %v661
      %v725 = vmul.f32 %v724, 0.6931472
      %v726 = vlog2.pop %v663
      %v727 = vmul.f32 %v726, 0.6931472
      %v728 = vlog2.pop %v665
      %v729 = vmul.f32 %v728, 0.6931472
      %v730 = vlog2.pop %v667
      %v731 = vmul.f32 %v730, 0.6931472
      %v732 = vlog2.pop %v669
      %v733 = vmul.f32 %v732, 0.6931472
      %v734 = vlog2.pop %v671
      %v735 = vmul.f32 %v734, 0.6931472
      %v736 = vlog2.pop %v673
      %v737 = vmul.f32 %v736, 0.6931472
      %v738 = vlog2.pop %v675
      %v739 = vmul.f32 %v738, 0.6931472
      %v740 = vlog2.pop %v677
      %v741 = vmul.f32 %v740, 0.6931472
      %v742 = vsub.f32 %v518, %v679
      %v743 = vsub.f32 %v519, %v681
      %v744 = vsub.f32 %v520, %v683
      %v745 = vsub.f32 %v521, %v685
      %v746 = vsub.f32 %v522, %v687
      %v747 = vsub.f32 %v523, %v689
      %v748 = vsub.f32 %v524, %v691
      %v749 = vsub.f32 %v525, %v693
      %v750 = vsub.f32 %v526, %v695
      %v751 = vsub.f32 %v527, %v697
      %v752 = vsub.f32 %v528, %v699
      %v753 = vsub.f32 %v529, %v701
      %v754 = vsub.f32 %v530, %v703
      %v755 = vsub.f32 %v531, %v705
      %v756 = vsub.f32 %v532, %v707
      %v757 = vsub.f32 %v533, %v709
      %v758 = vsub.f32 %v534, %v711
      %v759 = vsub.f32 %v535, %v713
      %v760 = vsub.f32 %v536, %v715
      %v761 = vsub.f32 %v537, %v717
      %v762 = vsub.f32 %v538, %v719
      %v763 = vsub.f32 %v539, %v721
      %v764 = vsub.f32 %v540, %v723
      %v765 = vsub.f32 %v541, %v725
      %v766 = vsub.f32 %v542, %v727
      %v767 = vsub.f32 %v543, %v729
      %v768 = vsub.f32 %v544, %v731
      %v769 = vsub.f32 %v545, %v733
      %v770 = vsub.f32 %v546, %v735
      %v771 = vsub.f32 %v547, %v737
      %v772 = vsub.f32 %v548, %v739
      %v773 = vsub.f32 %v549, %v741
      %774 = vst [vmem:[%s172] sm:$0xff] %v742
      %775 = vst [vmem:[%s172 + $0x8] sm:$0xff] %v743
      %776 = vst [vmem:[%s172 + $0x10] sm:$0xff] %v744
      %777 = vst [vmem:[%s172 + $0x18] sm:$0xff] %v745
      %778 = vst [vmem:[%s172 + $0x20] sm:$0xff] %v746
      %779 = vst [vmem:[%s172 + $0x28] sm:$0xff] %v747
      %780 = vst [vmem:[%s172 + $0x30] sm:$0xff] %v748
      %781 = vst [vmem:[%s172 + $0x38] sm:$0xff] %v749
      %782 = vst [vmem:[%s172 + $0x40] sm:$0xff] %v750
      %783 = vst [vmem:[%s172 + $0x48] sm:$0xff] %v751
      %784 = vst [vmem:[%s172 + $0x50] sm:$0xff] %v752
      %785 = vst [vmem:[%s172 + $0x58] sm:$0xff] %v753
      %786 = vst [vmem:[%s172 + $0x60] sm:$0xff] %v754
      %787 = vst [vmem:[%s172 + $0x68] sm:$0xff] %v755
      %788 = vst [vmem:[%s172 + $0x70] sm:$0xff] %v756
      %789 = vst [vmem:[%s172 + $0x78] sm:$0xff] %v757
      %790 = vst [vmem:[%s172 + $0x80] sm:$0xff] %v758
      %791 = vst [vmem:[%s172 + $0x88] sm:$0xff] %v759
      %792 = vst [vmem:[%s172 + $0x90] sm:$0xff] %v760
      %793 = vst [vmem:[%s172 + $0x98] sm:$0xff] %v761
      %794 = vst [vmem:[%s172 + $0xa0] sm:$0xff] %v762
      %795 = vst [vmem:[%s172 + $0xa8] sm:$0xff] %v763
      %796 = vst [vmem:[%s172 + $0xb0] sm:$0xff] %v764
      %797 = vst [vmem:[%s172 + $0xb8] sm:$0xff] %v765
      %798 = vst [vmem:[%s172 + $0xc0] sm:$0xff] %v766
      %799 = vst [vmem:[%s172 + $0xc8] sm:$0xff] %v767
      %800 = vst [vmem:[%s172 + $0xd0] sm:$0xff] %v768
      %801 = vst [vmem:[%s172 + $0xd8] sm:$0xff] %v769
      %802 = vst [vmem:[%s172 + $0xe0] sm:$0xff] %v770
      %803 = vst [vmem:[%s172 + $0xe8] sm:$0xff] %v771
      %804 = vst [vmem:[%s172 + $0xf0] sm:$0xff] %v772
      %805 = vst [vmem:[%s172 + $0xf8] sm:$0xff] %v773
      %s806 = smul.u32 32, %s14
      %p807 = scmp.lt.s32.totalorder %s806, 63
      %s808 = scalar_select %p807, %s806, 63
      %s809 = smul.addr %s808, 8
      %s810 = scalar_lea.vmem %s3, %s809
      // Predicated region
      $region33: #{gat2layer_forward.9} parent=31 // pred_check
        %p811 = pneg %p100
      $region34: #{gat2layer_forward.9} parent=31 // pred_check_branch
        %813 = sbr.rel (%p811) target = $region36
      $region35: #{gat2layer_forward.9} parent=31 // pred_region
        %s814 = smul.u32 32, %s14
      $region36: #{gat2layer_forward.9} parent=31 // pred_fallthru
        _
    $region32: #{gat2layer_forward.9} parent=5 // pred_fallthru
      _
    %p815 = scmp.le.s32.totalorder 2, %s9
    // Predicated region
    $region37: #{gat2layer_forward.9} parent=5 // pred_check
      %p816 = pneg %p815
    $region38: #{gat2layer_forward.9} parent=5 // pred_check_branch
      %818 = sbr.rel (%p816) target = $region40
    $region39: #{gat2layer_forward.9} parent=5 // pred_region
      %s819 = ssub.s32 %s9, 2
      // Predicated region
      $region41: #{gat2layer_forward.9} parent=39 // pred_check
        %p820 = pneg %p106
      $region42: #{gat2layer_forward.9} parent=39 // pred_check_branch
        %822 = sbr.rel (%p820) target = $region44
      $region43: #{gat2layer_forward.9} parent=39 // pred_region
        %s823 = smul.u32 32, %s15
        %p824 = scmp.lt.s32.totalorder %s823, 63
        %s825 = scalar_select %p824, %s823, 63
        %s826 = smul.addr %s825, 8
        %s827 = scalar_lea.vmem %s3, %s826
      $region44: #{gat2layer_forward.9} parent=39 // pred_fallthru
        _
    $region40: #{gat2layer_forward.9} parent=5 // pred_fallthru
      _
  $region6: #{gat2layer_forward.9} parent=0 // loop_footer
    %s13 = sadd.s32 1, %s9
  $region7: #{gat2layer_forward.9} parent=0 // loop_footer_branch
    %8 = sbr.rel target = $region3
  $region8: #{gat2layer_forward.9} parent=0 // loop_exit
    _

</llo_original>
